<compile_context>
chip_gen: v5e
topology: v5e:2x2
jax: 0.10.0
libtpu: 0.0.40
codegen_flags: <defaults>
</compile_context>

<pallas_src>
import jax
import jax.numpy as jnp
from jax.experimental import pallas as pl
from jax.experimental.pallas import tpu as pltpu

# ----------------------------- model hyper-params (small, consistent with module) ---
BATCH = 2
SEQ_LEN = 8          # sequence_length (small-shape version of 28)
INPUT_SIZE = 28      # input_size
HIDDEN = 128         # hidden_size (small-shape version of 256, lane-aligned)
NUM_LAYERS = 2       # num_layers
NUM_CLASSES = 10     # num_classes
BATCH_PAD = 8        # batch padded to one sublane tile for aligned per-step slices

_VMEM = pl.BlockSpec(memory_space=pltpu.MemorySpace.VMEM)


# ----------------------------- fused Pallas kernel -----------------------------------
def fused_gru_fc_kernel(
    x_ref,      # (S*BP, D)  time-major flattened padded inputs (row = t*BP + b)
    wih0_ref,   # (D, 3H)    layer-0 input->hidden weights, gate order [r|z|n]
    whh0_ref,   # (H, 3H)    layer-0 hidden->hidden weights
    b0_ref,     # (1, 3H)    layer-0 fused bias: [b_ir+b_hr | b_iz+b_hz | b_in]
    bhn0_ref,   # (1, H)     layer-0 b_hn (kept inside r*(...) per PyTorch GRU)
    wih1_ref,   # (H, 3H)    layer-1 input->hidden weights
    whh1_ref,   # (H, 3H)    layer-1 hidden->hidden weights
    b1_ref,     # (1, 3H)    layer-1 fused bias
    bhn1_ref,   # (1, H)     layer-1 b_hn
    wfc_ref,    # (S*H, C)   FC weights (already transposed)
    bfc_ref,    # (1, C)     FC bias
    out_ref,    # (BP, C)    logits (padded batch; wrapper slices [:B])
):
    BP, _ = out_ref.shape
    H = whh0_ref.shape[0]
    S = x_ref.shape[0] // BP

    # ---- hoisted layer-0 input projection: one MXU matmul for all timesteps --------
    gi0_all = (
        jnp.dot(x_ref[...], wih0_ref[...], preferred_element_type=jnp.float32)
        + b0_ref[...]
    )                                                            # (S*BP, 3H)

    # Load weights/biases once; reused every unrolled step.
    whh0 = whh0_ref[...]
    wih1 = wih1_ref[...]
    whh1 = whh1_ref[...]
    b1 = b1_ref[...]
    bhn0 = bhn0_ref[...]
    bhn1 = bhn1_ref[...]

    def gru_cell(gi, h_prev, whh, bhn):
        # gi already contains (b_i + b_h) for r/z gates and b_in for the n gate.
        gh = jnp.dot(h_prev, whh, preferred_element_type=jnp.float32)
        r = jax.nn.sigmoid(gi[:, 0 * H:1 * H] + gh[:, 0 * H:1 * H])
        z = jax.nn.sigmoid(gi[:, 1 * H:2 * H] + gh[:, 1 * H:2 * H])
        n = jnp.tanh(gi[:, 2 * H:3 * H] + r * (gh[:, 2 * H:3 * H] + bhn))
        return (1.0 - z) * n + z * h_prev

    h0 = jnp.zeros((BP, H), jnp.float32)
    h1 = jnp.zeros((BP, H), jnp.float32)
    h1_steps = []

    # Static unroll over the short, fixed sequence (hidden state carried in vregs).
    for t in range(S):
        gi0 = gi0_all[t * BP:(t + 1) * BP, :]        # sublane-aligned static slice
        h0 = gru_cell(gi0, h0, whh0, bhn0)
        gi1 = jnp.dot(h0, wih1, preferred_element_type=jnp.float32) + b1
        h1 = gru_cell(gi1, h1, whh1, bhn1)
        h1_steps.append(h1)

    # Lane-dense (BP, S*H) slab == out.reshape(B, -1) in the PyTorch module.
    feats = jnp.concatenate(h1_steps, axis=-1)       # (BP, S*H)
    out_ref[...] = (
        jnp.dot(feats, wfc_ref[...], preferred_element_type=jnp.float32) + bfc_ref[...]
    )


# ----------------------------- param preparation (done once) -------------------------
def prepare_params(params):
    """Convert PyTorch-layout params to kernel layout once, outside the forward."""
    H = HIDDEN
    kp = {}
    for layer in range(NUM_LAYERS):
        w_ih, w_hh, b_ih, b_hh = params[f"gru_l{layer}"]
        b_fused = jnp.concatenate(
            [b_ih[: 2 * H] + b_hh[: 2 * H],   # r, z gates: b_i + b_h pre-summed
             b_ih[2 * H:]]                    # n gate: b_in only
        )
        kp[f"l{layer}"] = (
            jnp.asarray(w_ih.T),              # (D, 3H)
            jnp.asarray(w_hh.T),              # (H, 3H)
            b_fused.reshape(1, -1),           # (1, 3H)
            b_hh[2 * H:].reshape(1, -1),      # (1, H)  = b_hn
        )
    w_fc, b_fc = params["fc"]
    kp["fc"] = (jnp.asarray(w_fc.T), b_fc.reshape(1, -1))   # (S*H, C), (1, C)
    return kp


# ----------------------------- forward -----------------------------------------------
@jax.jit
def rnn_forward(x, kparams):
    """x: (B, S, D) — same convention as the PyTorch module (batch_first=True)."""
    B, S, D = x.shape
    # Tiny time-major flatten + sublane padding of the input; done inside the jit.
    x_tm = jnp.transpose(x, (1, 0, 2)).astype(jnp.float32)          # (S, B, D)
    x_tm = jnp.pad(x_tm, ((0, 0), (0, BATCH_PAD - B), (0, 0)))      # (S, BP, D)
    x_tm = x_tm.reshape(S * BATCH_PAD, D)                           # (S*BP, D)

    wih0, whh0, b0, bhn0 = kparams["l0"]
    wih1, whh1, b1, bhn1 = kparams["l1"]
    wfc, bfc = kparams["fc"]

    out_pad = pl.pallas_call(
        fused_gru_fc_kernel,
        out_shape=jax.ShapeDtypeStruct((BATCH_PAD, NUM_CLASSES), jnp.float32),
        in_specs=[_VMEM] * 11,
        out_specs=_VMEM,
    )(x_tm, wih0, whh0, b0, bhn0, wih1, whh1, b1, bhn1, wfc, bfc)
    return out_pad[:B]


# ----------------------------- pure-JAX reference (PyTorch-layout params) ------------
def rnn_reference(x, params):
    h = jnp.transpose(x, (1, 0, 2)).astype(jnp.float32)       # (S, B, D)
    H = HIDDEN
    for layer in range(NUM_LAYERS):
        w_ih, w_hh, b_ih, b_hh = params[f"gru_l{layer}"]
        hs = []
        h_t = jnp.zeros((x.shape[0], H), jnp.float32)
        for t in range(h.shape[0]):
            gi = h[t] @ w_ih.T + b_ih
            gh = h_t @ w_hh.T + b_hh
            r = jax.nn.sigmoid(gi[:, :H] + gh[:, :H])
            z = jax.nn.sigmoid(gi[:, H:2 * H] + gh[:, H:2 * H])
            n = jnp.tanh(gi[:, 2 * H:] + r * gh[:, 2 * H:])
            h_t = (1.0 - z) * n + z * h_t
            hs.append(h_t)
        h = jnp.stack(hs, axis=0)
    out = jnp.transpose(h, (1, 0, 2)).reshape(x.shape[0], -1)
    w_fc, b_fc = params["fc"]
    return out @ w_fc.T + b_fc


# ----------------------------- deterministic params ----------------------------------
def init_params(key):
    params = {}
    k = 1.0 / jnp.sqrt(HIDDEN)
    for layer in range(NUM_LAYERS):
        d_in = INPUT_SIZE if layer == 0 else HIDDEN
        key, k1, k2, k3, k4 = jax.random.split(key, 5)
        params[f"gru_l{layer}"] = (
            jax.random.uniform(k1, (3 * HIDDEN, d_in), jnp.float32, -k, k),
            jax.random.uniform(k2, (3 * HIDDEN, HIDDEN), jnp.float32, -k, k),
            jax.random.uniform(k3, (3 * HIDDEN,), jnp.float32, -k, k),
            jax.random.uniform(k4, (3 * HIDDEN,), jnp.float32, -k, k),
        )
    key, k1, k2 = jax.random.split(key, 3)
    kf = 1.0 / jnp.sqrt(HIDDEN * SEQ_LEN)
    params["fc"] = (
        jax.random.uniform(k1, (NUM_CLASSES, HIDDEN * SEQ_LEN), jnp.float32, -kf, kf),
        jax.random.uniform(k2, (NUM_CLASSES,), jnp.float32, -kf, kf),
    )
    return params


# ----------------------------- main ---------------------------------------------------
if __name__ == "__main__":
    key = jax.random.PRNGKey(0)
    key, xk = jax.random.split(key)
    x = jax.random.normal(xk, (BATCH, SEQ_LEN, INPUT_SIZE), jnp.float32)

    params = init_params(key)
    kparams = prepare_params(params)      # one-time layout conversion (outside forward)

    out = jax.block_until_ready(rnn_forward(x, kparams))

    ref = rnn_reference(x, params)
    assert out.shape == (BATCH, NUM_CLASSES)
    assert float(jnp.max(jnp.abs(out - ref))) < 1e-3, "mismatch vs JAX reference"

    print("KERNEL_OK")
</pallas_src>

<mosaic_0001>
module attributes {stable_mosaic.version = 11 : i64} {
  func.func @fused_gru_fc_kernel(%arg0: memref<64x28xf32, #tpu.memory_space<vmem>>, %arg1: memref<28x384xf32, #tpu.memory_space<vmem>>, %arg2: memref<128x384xf32, #tpu.memory_space<vmem>>, %arg3: memref<1x384xf32, #tpu.memory_space<vmem>>, %arg4: memref<1x128xf32, #tpu.memory_space<vmem>>, %arg5: memref<128x384xf32, #tpu.memory_space<vmem>>, %arg6: memref<128x384xf32, #tpu.memory_space<vmem>>, %arg7: memref<1x384xf32, #tpu.memory_space<vmem>>, %arg8: memref<1x128xf32, #tpu.memory_space<vmem>>, %arg9: memref<1024x10xf32, #tpu.memory_space<vmem>>, %arg10: memref<1x10xf32, #tpu.memory_space<vmem>>, %arg11: memref<8x10xf32, #tpu.memory_space<vmem>>) attributes {dimension_semantics = [], scalar_prefetch = 0 : i64, scratch_operands = 0 : i64, tpu.core_type = #tpu.core_type<tc>} {
    %c0 = arith.constant 0 : index
    %c0_0 = arith.constant 0 : index
    %0 = vector.load %arg0[%c0, %c0_0] : memref<64x28xf32, #tpu.memory_space<vmem>>, vector<64x28xf32>
    %c0_1 = arith.constant 0 : index
    %c0_2 = arith.constant 0 : index
    %1 = vector.load %arg1[%c0_1, %c0_2] : memref<28x384xf32, #tpu.memory_space<vmem>>, vector<28x384xf32>
    %cst = arith.constant dense<0.000000e+00> : vector<64x384xf32>
    %2 = tpu.matmul %0, %1, %cst {dimension_numbers = #tpu.dot_dimension_numbers<[1], [0], [0], [1], [0, 0, 1, 1], [], []>} : vector<64x28xf32>, vector<28x384xf32>, vector<64x384xf32> -> vector<64x384xf32>
    %c0_3 = arith.constant 0 : index
    %c0_4 = arith.constant 0 : index
    %3 = vector.load %arg3[%c0_3, %c0_4] : memref<1x384xf32, #tpu.memory_space<vmem>>, vector<1x384xf32>
    %4 = vector.broadcast %3 : vector<1x384xf32> to vector<64x384xf32>
    %5 = arith.addf %2, %4 : vector<64x384xf32>
    %c0_5 = arith.constant 0 : index
    %c0_6 = arith.constant 0 : index
    %6 = vector.load %arg2[%c0_5, %c0_6] : memref<128x384xf32, #tpu.memory_space<vmem>>, vector<128x384xf32>
    %c0_7 = arith.constant 0 : index
    %c0_8 = arith.constant 0 : index
    %7 = vector.load %arg5[%c0_7, %c0_8] : memref<128x384xf32, #tpu.memory_space<vmem>>, vector<128x384xf32>
    %c0_9 = arith.constant 0 : index
    %c0_10 = arith.constant 0 : index
    %8 = vector.load %arg6[%c0_9, %c0_10] : memref<128x384xf32, #tpu.memory_space<vmem>>, vector<128x384xf32>
    %c0_11 = arith.constant 0 : index
    %c0_12 = arith.constant 0 : index
    %9 = vector.load %arg7[%c0_11, %c0_12] : memref<1x384xf32, #tpu.memory_space<vmem>>, vector<1x384xf32>
    %c0_13 = arith.constant 0 : index
    %c0_14 = arith.constant 0 : index
    %10 = vector.load %arg4[%c0_13, %c0_14] : memref<1x128xf32, #tpu.memory_space<vmem>>, vector<1x128xf32>
    %c0_15 = arith.constant 0 : index
    %c0_16 = arith.constant 0 : index
    %11 = vector.load %arg8[%c0_15, %c0_16] : memref<1x128xf32, #tpu.memory_space<vmem>>, vector<1x128xf32>
    %cst_17 = arith.constant 0.000000e+00 : f32
    %12 = vector.broadcast %cst_17 : f32 to vector<8x128xf32>
    %cst_18 = arith.constant 0.000000e+00 : f32
    %13 = vector.broadcast %cst_18 : f32 to vector<8x128xf32>
    %14 = vector.extract_strided_slice %5 {offsets = [0, 0], sizes = [8, 384], strides = [1, 1]} : vector<64x384xf32> to vector<8x384xf32>
    %cst_19 = arith.constant dense<0.000000e+00> : vector<8x384xf32>
    %15 = tpu.matmul %12, %6, %cst_19 {dimension_numbers = #tpu.dot_dimension_numbers<[1], [0], [0], [1], [0, 0, 1, 1], [], []>} : vector<8x128xf32>, vector<128x384xf32>, vector<8x384xf32> -> vector<8x384xf32>
    %16 = vector.extract_strided_slice %14 {offsets = [0, 0], sizes = [8, 128], strides = [1, 1]} : vector<8x384xf32> to vector<8x128xf32>
    %17 = vector.extract_strided_slice %15 {offsets = [0, 0], sizes = [8, 128], strides = [1, 1]} : vector<8x384xf32> to vector<8x128xf32>
    %18 = arith.addf %16, %17 : vector<8x128xf32>
    %19 = arith.negf %18 : vector<8x128xf32>
    %20 = math.exp %19 : vector<8x128xf32>
    %cst_20 = arith.constant 1.000000e+00 : f32
    %21 = vector.broadcast %cst_20 : f32 to vector<8x128xf32>
    %22 = arith.addf %21, %20 : vector<8x128xf32>
    %23 = arith.divf %21, %22 : vector<8x128xf32>
    %24 = vector.extract_strided_slice %14 {offsets = [0, 128], sizes = [8, 128], strides = [1, 1]} : vector<8x384xf32> to vector<8x128xf32>
    %25 = vector.extract_strided_slice %15 {offsets = [0, 128], sizes = [8, 128], strides = [1, 1]} : vector<8x384xf32> to vector<8x128xf32>
    %26 = arith.addf %24, %25 : vector<8x128xf32>
    %27 = arith.negf %26 : vector<8x128xf32>
    %28 = math.exp %27 : vector<8x128xf32>
    %cst_21 = arith.constant 1.000000e+00 : f32
    %29 = vector.broadcast %cst_21 : f32 to vector<8x128xf32>
    %30 = arith.addf %29, %28 : vector<8x128xf32>
    %31 = arith.divf %29, %30 : vector<8x128xf32>
    %32 = vector.extract_strided_slice %14 {offsets = [0, 256], sizes = [8, 128], strides = [1, 1]} : vector<8x384xf32> to vector<8x128xf32>
    %33 = vector.extract_strided_slice %15 {offsets = [0, 256], sizes = [8, 128], strides = [1, 1]} : vector<8x384xf32> to vector<8x128xf32>
    %34 = vector.broadcast %10 : vector<1x128xf32> to vector<8x128xf32>
    %35 = arith.addf %33, %34 : vector<8x128xf32>
    %36 = arith.mulf %23, %35 : vector<8x128xf32>
    %37 = arith.addf %32, %36 : vector<8x128xf32>
    %38 = math.tanh %37 : vector<8x128xf32>
    %cst_22 = arith.constant 1.000000e+00 : f32
    %39 = vector.broadcast %cst_22 : f32 to vector<8x128xf32>
    %40 = arith.subf %39, %31 : vector<8x128xf32>
    %41 = arith.mulf %40, %38 : vector<8x128xf32>
    %42 = arith.mulf %31, %12 : vector<8x128xf32>
    %43 = arith.addf %41, %42 : vector<8x128xf32>
    %cst_23 = arith.constant dense<0.000000e+00> : vector<8x384xf32>
    %44 = tpu.matmul %43, %7, %cst_23 {dimension_numbers = #tpu.dot_dimension_numbers<[1], [0], [0], [1], [0, 0, 1, 1], [], []>} : vector<8x128xf32>, vector<128x384xf32>, vector<8x384xf32> -> vector<8x384xf32>
    %45 = vector.broadcast %9 : vector<1x384xf32> to vector<8x384xf32>
    %46 = arith.addf %44, %45 : vector<8x384xf32>
    %cst_24 = arith.constant dense<0.000000e+00> : vector<8x384xf32>
    %47 = tpu.matmul %13, %8, %cst_24 {dimension_numbers = #tpu.dot_dimension_numbers<[1], [0], [0], [1], [0, 0, 1, 1], [], []>} : vector<8x128xf32>, vector<128x384xf32>, vector<8x384xf32> -> vector<8x384xf32>
    %48 = vector.extract_strided_slice %46 {offsets = [0, 0], sizes = [8, 128], strides = [1, 1]} : vector<8x384xf32> to vector<8x128xf32>
    %49 = vector.extract_strided_slice %47 {offsets = [0, 0], sizes = [8, 128], strides = [1, 1]} : vector<8x384xf32> to vector<8x128xf32>
    %50 = arith.addf %48, %49 : vector<8x128xf32>
    %51 = arith.negf %50 : vector<8x128xf32>
    %52 = math.exp %51 : vector<8x128xf32>
    %cst_25 = arith.constant 1.000000e+00 : f32
    %53 = vector.broadcast %cst_25 : f32 to vector<8x128xf32>
    %54 = arith.addf %53, %52 : vector<8x128xf32>
    %55 = arith.divf %53, %54 : vector<8x128xf32>
    %56 = vector.extract_strided_slice %46 {offsets = [0, 128], sizes = [8, 128], strides = [1, 1]} : vector<8x384xf32> to vector<8x128xf32>
    %57 = vector.extract_strided_slice %47 {offsets = [0, 128], sizes = [8, 128], strides = [1, 1]} : vector<8x384xf32> to vector<8x128xf32>
    %58 = arith.addf %56, %57 : vector<8x128xf32>
    %59 = arith.negf %58 : vector<8x128xf32>
    %60 = math.exp %59 : vector<8x128xf32>
    %cst_26 = arith.constant 1.000000e+00 : f32
    %61 = vector.broadcast %cst_26 : f32 to vector<8x128xf32>
    %62 = arith.addf %61, %60 : vector<8x128xf32>
    %63 = arith.divf %61, %62 : vector<8x128xf32>
    %64 = vector.extract_strided_slice %46 {offsets = [0, 256], sizes = [8, 128], strides = [1, 1]} : vector<8x384xf32> to vector<8x128xf32>
    %65 = vector.extract_strided_slice %47 {offsets = [0, 256], sizes = [8, 128], strides = [1, 1]} : vector<8x384xf32> to vector<8x128xf32>
    %66 = vector.broadcast %11 : vector<1x128xf32> to vector<8x128xf32>
    %67 = arith.addf %65, %66 : vector<8x128xf32>
    %68 = arith.mulf %55, %67 : vector<8x128xf32>
    %69 = arith.addf %64, %68 : vector<8x128xf32>
    %70 = math.tanh %69 : vector<8x128xf32>
    %cst_27 = arith.constant 1.000000e+00 : f32
    %71 = vector.broadcast %cst_27 : f32 to vector<8x128xf32>
    %72 = arith.subf %71, %63 : vector<8x128xf32>
    %73 = arith.mulf %72, %70 : vector<8x128xf32>
    %74 = arith.mulf %63, %13 : vector<8x128xf32>
    %75 = arith.addf %73, %74 : vector<8x128xf32>
    %76 = vector.extract_strided_slice %5 {offsets = [8, 0], sizes = [8, 384], strides = [1, 1]} : vector<64x384xf32> to vector<8x384xf32>
    %cst_28 = arith.constant dense<0.000000e+00> : vector<8x384xf32>
    %77 = tpu.matmul %43, %6, %cst_28 {dimension_numbers = #tpu.dot_dimension_numbers<[1], [0], [0], [1], [0, 0, 1, 1], [], []>} : vector<8x128xf32>, vector<128x384xf32>, vector<8x384xf32> -> vector<8x384xf32>
    %78 = vector.extract_strided_slice %76 {offsets = [0, 0], sizes = [8, 128], strides = [1, 1]} : vector<8x384xf32> to vector<8x128xf32>
    %79 = vector.extract_strided_slice %77 {offsets = [0, 0], sizes = [8, 128], strides = [1, 1]} : vector<8x384xf32> to vector<8x128xf32>
    %80 = arith.addf %78, %79 : vector<8x128xf32>
    %81 = arith.negf %80 : vector<8x128xf32>
    %82 = math.exp %81 : vector<8x128xf32>
    %cst_29 = arith.constant 1.000000e+00 : f32
    %83 = vector.broadcast %cst_29 : f32 to vector<8x128xf32>
    %84 = arith.addf %83, %82 : vector<8x128xf32>
    %85 = arith.divf %83, %84 : vector<8x128xf32>
    %86 = vector.extract_strided_slice %76 {offsets = [0, 128], sizes = [8, 128], strides = [1, 1]} : vector<8x384xf32> to vector<8x128xf32>
    %87 = vector.extract_strided_slice %77 {offsets = [0, 128], sizes = [8, 128], strides = [1, 1]} : vector<8x384xf32> to vector<8x128xf32>
    %88 = arith.addf %86, %87 : vector<8x128xf32>
    %89 = arith.negf %88 : vector<8x128xf32>
    %90 = math.exp %89 : vector<8x128xf32>
    %cst_30 = arith.constant 1.000000e+00 : f32
    %91 = vector.broadcast %cst_30 : f32 to vector<8x128xf32>
    %92 = arith.addf %91, %90 : vector<8x128xf32>
    %93 = arith.divf %91, %92 : vector<8x128xf32>
    %94 = vector.extract_strided_slice %76 {offsets = [0, 256], sizes = [8, 128], strides = [1, 1]} : vector<8x384xf32> to vector<8x128xf32>
    %95 = vector.extract_strided_slice %77 {offsets = [0, 256], sizes = [8, 128], strides = [1, 1]} : vector<8x384xf32> to vector<8x128xf32>
    %96 = vector.broadcast %10 : vector<1x128xf32> to vector<8x128xf32>
    %97 = arith.addf %95, %96 : vector<8x128xf32>
    %98 = arith.mulf %85, %97 : vector<8x128xf32>
    %99 = arith.addf %94, %98 : vector<8x128xf32>
    %100 = math.tanh %99 : vector<8x128xf32>
    %cst_31 = arith.constant 1.000000e+00 : f32
    %101 = vector.broadcast %cst_31 : f32 to vector<8x128xf32>
    %102 = arith.subf %101, %93 : vector<8x128xf32>
    %103 = arith.mulf %102, %100 : vector<8x128xf32>
    %104 = arith.mulf %93, %43 : vector<8x128xf32>
    %105 = arith.addf %103, %104 : vector<8x128xf32>
    %cst_32 = arith.constant dense<0.000000e+00> : vector<8x384xf32>
    %106 = tpu.matmul %105, %7, %cst_32 {dimension_numbers = #tpu.dot_dimension_numbers<[1], [0], [0], [1], [0, 0, 1, 1], [], []>} : vector<8x128xf32>, vector<128x384xf32>, vector<8x384xf32> -> vector<8x384xf32>
    %107 = vector.broadcast %9 : vector<1x384xf32> to vector<8x384xf32>
    %108 = arith.addf %106, %107 : vector<8x384xf32>
    %cst_33 = arith.constant dense<0.000000e+00> : vector<8x384xf32>
    %109 = tpu.matmul %75, %8, %cst_33 {dimension_numbers = #tpu.dot_dimension_numbers<[1], [0], [0], [1], [0, 0, 1, 1], [], []>} : vector<8x128xf32>, vector<128x384xf32>, vector<8x384xf32> -> vector<8x384xf32>
    %110 = vector.extract_strided_slice %108 {offsets = [0, 0], sizes = [8, 128], strides = [1, 1]} : vector<8x384xf32> to vector<8x128xf32>
    %111 = vector.extract_strided_slice %109 {offsets = [0, 0], sizes = [8, 128], strides = [1, 1]} : vector<8x384xf32> to vector<8x128xf32>
    %112 = arith.addf %110, %111 : vector<8x128xf32>
    %113 = arith.negf %112 : vector<8x128xf32>
    %114 = math.exp %113 : vector<8x128xf32>
    %cst_34 = arith.constant 1.000000e+00 : f32
    %115 = vector.broadcast %cst_34 : f32 to vector<8x128xf32>
    %116 = arith.addf %115, %114 : vector<8x128xf32>
    %117 = arith.divf %115, %116 : vector<8x128xf32>
    %118 = vector.extract_strided_slice %108 {offsets = [0, 128], sizes = [8, 128], strides = [1, 1]} : vector<8x384xf32> to vector<8x128xf32>
    %119 = vector.extract_strided_slice %109 {offsets = [0, 128], sizes = [8, 128], strides = [1, 1]} : vector<8x384xf32> to vector<8x128xf32>
    %120 = arith.addf %118, %119 : vector<8x128xf32>
    %121 = arith.negf %120 : vector<8x128xf32>
    %122 = math.exp %121 : vector<8x128xf32>
    %cst_35 = arith.constant 1.000000e+00 : f32
    %123 = vector.broadcast %cst_35 : f32 to vector<8x128xf32>
    %124 = arith.addf %123, %122 : vector<8x128xf32>
    %125 = arith.divf %123, %124 : vector<8x128xf32>
    %126 = vector.extract_strided_slice %108 {offsets = [0, 256], sizes = [8, 128], strides = [1, 1]} : vector<8x384xf32> to vector<8x128xf32>
    %127 = vector.extract_strided_slice %109 {offsets = [0, 256], sizes = [8, 128], strides = [1, 1]} : vector<8x384xf32> to vector<8x128xf32>
    %128 = vector.broadcast %11 : vector<1x128xf32> to vector<8x128xf32>
    %129 = arith.addf %127, %128 : vector<8x128xf32>
    %130 = arith.mulf %117, %129 : vector<8x128xf32>
    %131 = arith.addf %126, %130 : vector<8x128xf32>
    %132 = math.tanh %131 : vector<8x128xf32>
    %cst_36 = arith.constant 1.000000e+00 : f32
    %133 = vector.broadcast %cst_36 : f32 to vector<8x128xf32>
    %134 = arith.subf %133, %125 : vector<8x128xf32>
    %135 = arith.mulf %134, %132 : vector<8x128xf32>
    %136 = arith.mulf %125, %75 : vector<8x128xf32>
    %137 = arith.addf %135, %136 : vector<8x128xf32>
    %138 = vector.extract_strided_slice %5 {offsets = [16, 0], sizes = [8, 384], strides = [1, 1]} : vector<64x384xf32> to vector<8x384xf32>
    %cst_37 = arith.constant dense<0.000000e+00> : vector<8x384xf32>
    %139 = tpu.matmul %105, %6, %cst_37 {dimension_numbers = #tpu.dot_dimension_numbers<[1], [0], [0], [1], [0, 0, 1, 1], [], []>} : vector<8x128xf32>, vector<128x384xf32>, vector<8x384xf32> -> vector<8x384xf32>
    %140 = vector.extract_strided_slice %138 {offsets = [0, 0], sizes = [8, 128], strides = [1, 1]} : vector<8x384xf32> to vector<8x128xf32>
    %141 = vector.extract_strided_slice %139 {offsets = [0, 0], sizes = [8, 128], strides = [1, 1]} : vector<8x384xf32> to vector<8x128xf32>
    %142 = arith.addf %140, %141 : vector<8x128xf32>
    %143 = arith.negf %142 : vector<8x128xf32>
    %144 = math.exp %143 : vector<8x128xf32>
    %cst_38 = arith.constant 1.000000e+00 : f32
    %145 = vector.broadcast %cst_38 : f32 to vector<8x128xf32>
    %146 = arith.addf %145, %144 : vector<8x128xf32>
    %147 = arith.divf %145, %146 : vector<8x128xf32>
    %148 = vector.extract_strided_slice %138 {offsets = [0, 128], sizes = [8, 128], strides = [1, 1]} : vector<8x384xf32> to vector<8x128xf32>
    %149 = vector.extract_strided_slice %139 {offsets = [0, 128], sizes = [8, 128], strides = [1, 1]} : vector<8x384xf32> to vector<8x128xf32>
    %150 = arith.addf %148, %149 : vector<8x128xf32>
    %151 = arith.negf %150 : vector<8x128xf32>
    %152 = math.exp %151 : vector<8x128xf32>
    %cst_39 = arith.constant 1.000000e+00 : f32
    %153 = vector.broadcast %cst_39 : f32 to vector<8x128xf32>
    %154 = arith.addf %153, %152 : vector<8x128xf32>
    %155 = arith.divf %153, %154 : vector<8x128xf32>
    %156 = vector.extract_strided_slice %138 {offsets = [0, 256], sizes = [8, 128], strides = [1, 1]} : vector<8x384xf32> to vector<8x128xf32>
    %157 = vector.extract_strided_slice %139 {offsets = [0, 256], sizes = [8, 128], strides = [1, 1]} : vector<8x384xf32> to vector<8x128xf32>
    %158 = vector.broadcast %10 : vector<1x128xf32> to vector<8x128xf32>
    %159 = arith.addf %157, %158 : vector<8x128xf32>
    %160 = arith.mulf %147, %159 : vector<8x128xf32>
    %161 = arith.addf %156, %160 : vector<8x128xf32>
    %162 = math.tanh %161 : vector<8x128xf32>
    %cst_40 = arith.constant 1.000000e+00 : f32
    %163 = vector.broadcast %cst_40 : f32 to vector<8x128xf32>
    %164 = arith.subf %163, %155 : vector<8x128xf32>
    %165 = arith.mulf %164, %162 : vector<8x128xf32>
    %166 = arith.mulf %155, %105 : vector<8x128xf32>
    %167 = arith.addf %165, %166 : vector<8x128xf32>
    %cst_41 = arith.constant dense<0.000000e+00> : vector<8x384xf32>
    %168 = tpu.matmul %167, %7, %cst_41 {dimension_numbers = #tpu.dot_dimension_numbers<[1], [0], [0], [1], [0, 0, 1, 1], [], []>} : vector<8x128xf32>, vector<128x384xf32>, vector<8x384xf32> -> vector<8x384xf32>
    %169 = vector.broadcast %9 : vector<1x384xf32> to vector<8x384xf32>
    %170 = arith.addf %168, %169 : vector<8x384xf32>
    %cst_42 = arith.constant dense<0.000000e+00> : vector<8x384xf32>
    %171 = tpu.matmul %137, %8, %cst_42 {dimension_numbers = #tpu.dot_dimension_numbers<[1], [0], [0], [1], [0, 0, 1, 1], [], []>} : vector<8x128xf32>, vector<128x384xf32>, vector<8x384xf32> -> vector<8x384xf32>
    %172 = vector.extract_strided_slice %170 {offsets = [0, 0], sizes = [8, 128], strides = [1, 1]} : vector<8x384xf32> to vector<8x128xf32>
    %173 = vector.extract_strided_slice %171 {offsets = [0, 0], sizes = [8, 128], strides = [1, 1]} : vector<8x384xf32> to vector<8x128xf32>
    %174 = arith.addf %172, %173 : vector<8x128xf32>
    %175 = arith.negf %174 : vector<8x128xf32>
    %176 = math.exp %175 : vector<8x128xf32>
    %cst_43 = arith.constant 1.000000e+00 : f32
    %177 = vector.broadcast %cst_43 : f32 to vector<8x128xf32>
    %178 = arith.addf %177, %176 : vector<8x128xf32>
    %179 = arith.divf %177, %178 : vector<8x128xf32>
    %180 = vector.extract_strided_slice %170 {offsets = [0, 128], sizes = [8, 128], strides = [1, 1]} : vector<8x384xf32> to vector<8x128xf32>
    %181 = vector.extract_strided_slice %171 {offsets = [0, 128], sizes = [8, 128], strides = [1, 1]} : vector<8x384xf32> to vector<8x128xf32>
    %182 = arith.addf %180, %181 : vector<8x128xf32>
    %183 = arith.negf %182 : vector<8x128xf32>
    %184 = math.exp %183 : vector<8x128xf32>
    %cst_44 = arith.constant 1.000000e+00 : f32
    %185 = vector.broadcast %cst_44 : f32 to vector<8x128xf32>
    %186 = arith.addf %185, %184 : vector<8x128xf32>
    %187 = arith.divf %185, %186 : vector<8x128xf32>
    %188 = vector.extract_strided_slice %170 {offsets = [0, 256], sizes = [8, 128], strides = [1, 1]} : vector<8x384xf32> to vector<8x128xf32>
    %189 = vector.extract_strided_slice %171 {offsets = [0, 256], sizes = [8, 128], strides = [1, 1]} : vector<8x384xf32> to vector<8x128xf32>
    %190 = vector.broadcast %11 : vector<1x128xf32> to vector<8x128xf32>
    %191 = arith.addf %189, %190 : vector<8x128xf32>
    %192 = arith.mulf %179, %191 : vector<8x128xf32>
    %193 = arith.addf %188, %192 : vector<8x128xf32>
    %194 = math.tanh %193 : vector<8x128xf32>
    %cst_45 = arith.constant 1.000000e+00 : f32
    %195 = vector.broadcast %cst_45 : f32 to vector<8x128xf32>
    %196 = arith.subf %195, %187 : vector<8x128xf32>
    %197 = arith.mulf %196, %194 : vector<8x128xf32>
    %198 = arith.mulf %187, %137 : vector<8x128xf32>
    %199 = arith.addf %197, %198 : vector<8x128xf32>
    %200 = vector.extract_strided_slice %5 {offsets = [24, 0], sizes = [8, 384], strides = [1, 1]} : vector<64x384xf32> to vector<8x384xf32>
    %cst_46 = arith.constant dense<0.000000e+00> : vector<8x384xf32>
    %201 = tpu.matmul %167, %6, %cst_46 {dimension_numbers = #tpu.dot_dimension_numbers<[1], [0], [0], [1], [0, 0, 1, 1], [], []>} : vector<8x128xf32>, vector<128x384xf32>, vector<8x384xf32> -> vector<8x384xf32>
    %202 = vector.extract_strided_slice %200 {offsets = [0, 0], sizes = [8, 128], strides = [1, 1]} : vector<8x384xf32> to vector<8x128xf32>
    %203 = vector.extract_strided_slice %201 {offsets = [0, 0], sizes = [8, 128], strides = [1, 1]} : vector<8x384xf32> to vector<8x128xf32>
    %204 = arith.addf %202, %203 : vector<8x128xf32>
    %205 = arith.negf %204 : vector<8x128xf32>
    %206 = math.exp %205 : vector<8x128xf32>
    %cst_47 = arith.constant 1.000000e+00 : f32
    %207 = vector.broadcast %cst_47 : f32 to vector<8x128xf32>
    %208 = arith.addf %207, %206 : vector<8x128xf32>
    %209 = arith.divf %207, %208 : vector<8x128xf32>
    %210 = vector.extract_strided_slice %200 {offsets = [0, 128], sizes = [8, 128], strides = [1, 1]} : vector<8x384xf32> to vector<8x128xf32>
    %211 = vector.extract_strided_slice %201 {offsets = [0, 128], sizes = [8, 128], strides = [1, 1]} : vector<8x384xf32> to vector<8x128xf32>
    %212 = arith.addf %210, %211 : vector<8x128xf32>
    %213 = arith.negf %212 : vector<8x128xf32>
    %214 = math.exp %213 : vector<8x128xf32>
    %cst_48 = arith.constant 1.000000e+00 : f32
    %215 = vector.broadcast %cst_48 : f32 to vector<8x128xf32>
    %216 = arith.addf %215, %214 : vector<8x128xf32>
    %217 = arith.divf %215, %216 : vector<8x128xf32>
    %218 = vector.extract_strided_slice %200 {offsets = [0, 256], sizes = [8, 128], strides = [1, 1]} : vector<8x384xf32> to vector<8x128xf32>
    %219 = vector.extract_strided_slice %201 {offsets = [0, 256], sizes = [8, 128], strides = [1, 1]} : vector<8x384xf32> to vector<8x128xf32>
    %220 = vector.broadcast %10 : vector<1x128xf32> to vector<8x128xf32>
    %221 = arith.addf %219, %220 : vector<8x128xf32>
    %222 = arith.mulf %209, %221 : vector<8x128xf32>
    %223 = arith.addf %218, %222 : vector<8x128xf32>
    %224 = math.tanh %223 : vector<8x128xf32>
    %cst_49 = arith.constant 1.000000e+00 : f32
    %225 = vector.broadcast %cst_49 : f32 to vector<8x128xf32>
    %226 = arith.subf %225, %217 : vector<8x128xf32>
    %227 = arith.mulf %226, %224 : vector<8x128xf32>
    %228 = arith.mulf %217, %167 : vector<8x128xf32>
    %229 = arith.addf %227, %228 : vector<8x128xf32>
    %cst_50 = arith.constant dense<0.000000e+00> : vector<8x384xf32>
    %230 = tpu.matmul %229, %7, %cst_50 {dimension_numbers = #tpu.dot_dimension_numbers<[1], [0], [0], [1], [0, 0, 1, 1], [], []>} : vector<8x128xf32>, vector<128x384xf32>, vector<8x384xf32> -> vector<8x384xf32>
    %231 = vector.broadcast %9 : vector<1x384xf32> to vector<8x384xf32>
    %232 = arith.addf %230, %231 : vector<8x384xf32>
    %cst_51 = arith.constant dense<0.000000e+00> : vector<8x384xf32>
    %233 = tpu.matmul %199, %8, %cst_51 {dimension_numbers = #tpu.dot_dimension_numbers<[1], [0], [0], [1], [0, 0, 1, 1], [], []>} : vector<8x128xf32>, vector<128x384xf32>, vector<8x384xf32> -> vector<8x384xf32>
    %234 = vector.extract_strided_slice %232 {offsets = [0, 0], sizes = [8, 128], strides = [1, 1]} : vector<8x384xf32> to vector<8x128xf32>
    %235 = vector.extract_strided_slice %233 {offsets = [0, 0], sizes = [8, 128], strides = [1, 1]} : vector<8x384xf32> to vector<8x128xf32>
    %236 = arith.addf %234, %235 : vector<8x128xf32>
    %237 = arith.negf %236 : vector<8x128xf32>
    %238 = math.exp %237 : vector<8x128xf32>
    %cst_52 = arith.constant 1.000000e+00 : f32
    %239 = vector.broadcast %cst_52 : f32 to vector<8x128xf32>
    %240 = arith.addf %239, %238 : vector<8x128xf32>
    %241 = arith.divf %239, %240 : vector<8x128xf32>
    %242 = vector.extract_strided_slice %232 {offsets = [0, 128], sizes = [8, 128], strides = [1, 1]} : vector<8x384xf32> to vector<8x128xf32>
    %243 = vector.extract_strided_slice %233 {offsets = [0, 128], sizes = [8, 128], strides = [1, 1]} : vector<8x384xf32> to vector<8x128xf32>
    %244 = arith.addf %242, %243 : vector<8x128xf32>
    %245 = arith.negf %244 : vector<8x128xf32>
    %246 = math.exp %245 : vector<8x128xf32>
    %cst_53 = arith.constant 1.000000e+00 : f32
    %247 = vector.broadcast %cst_53 : f32 to vector<8x128xf32>
    %248 = arith.addf %247, %246 : vector<8x128xf32>
    %249 = arith.divf %247, %248 : vector<8x128xf32>
    %250 = vector.extract_strided_slice %232 {offsets = [0, 256], sizes = [8, 128], strides = [1, 1]} : vector<8x384xf32> to vector<8x128xf32>
    %251 = vector.extract_strided_slice %233 {offsets = [0, 256], sizes = [8, 128], strides = [1, 1]} : vector<8x384xf32> to vector<8x128xf32>
    %252 = vector.broadcast %11 : vector<1x128xf32> to vector<8x128xf32>
    %253 = arith.addf %251, %252 : vector<8x128xf32>
    %254 = arith.mulf %241, %253 : vector<8x128xf32>
    %255 = arith.addf %250, %254 : vector<8x128xf32>
    %256 = math.tanh %255 : vector<8x128xf32>
    %cst_54 = arith.constant 1.000000e+00 : f32
    %257 = vector.broadcast %cst_54 : f32 to vector<8x128xf32>
    %258 = arith.subf %257, %249 : vector<8x128xf32>
    %259 = arith.mulf %258, %256 : vector<8x128xf32>
    %260 = arith.mulf %249, %199 : vector<8x128xf32>
    %261 = arith.addf %259, %260 : vector<8x128xf32>
    %262 = vector.extract_strided_slice %5 {offsets = [32, 0], sizes = [8, 384], strides = [1, 1]} : vector<64x384xf32> to vector<8x384xf32>
    %cst_55 = arith.constant dense<0.000000e+00> : vector<8x384xf32>
    %263 = tpu.matmul %229, %6, %cst_55 {dimension_numbers = #tpu.dot_dimension_numbers<[1], [0], [0], [1], [0, 0, 1, 1], [], []>} : vector<8x128xf32>, vector<128x384xf32>, vector<8x384xf32> -> vector<8x384xf32>
    %264 = vector.extract_strided_slice %262 {offsets = [0, 0], sizes = [8, 128], strides = [1, 1]} : vector<8x384xf32> to vector<8x128xf32>
    %265 = vector.extract_strided_slice %263 {offsets = [0, 0], sizes = [8, 128], strides = [1, 1]} : vector<8x384xf32> to vector<8x128xf32>
    %266 = arith.addf %264, %265 : vector<8x128xf32>
    %267 = arith.negf %266 : vector<8x128xf32>
    %268 = math.exp %267 : vector<8x128xf32>
    %cst_56 = arith.constant 1.000000e+00 : f32
    %269 = vector.broadcast %cst_56 : f32 to vector<8x128xf32>
    %270 = arith.addf %269, %268 : vector<8x128xf32>
    %271 = arith.divf %269, %270 : vector<8x128xf32>
    %272 = vector.extract_strided_slice %262 {offsets = [0, 128], sizes = [8, 128], strides = [1, 1]} : vector<8x384xf32> to vector<8x128xf32>
    %273 = vector.extract_strided_slice %263 {offsets = [0, 128], sizes = [8, 128], strides = [1, 1]} : vector<8x384xf32> to vector<8x128xf32>
    %274 = arith.addf %272, %273 : vector<8x128xf32>
    %275 = arith.negf %274 : vector<8x128xf32>
    %276 = math.exp %275 : vector<8x128xf32>
    %cst_57 = arith.constant 1.000000e+00 : f32
    %277 = vector.broadcast %cst_57 : f32 to vector<8x128xf32>
    %278 = arith.addf %277, %276 : vector<8x128xf32>
    %279 = arith.divf %277, %278 : vector<8x128xf32>
    %280 = vector.extract_strided_slice %262 {offsets = [0, 256], sizes = [8, 128], strides = [1, 1]} : vector<8x384xf32> to vector<8x128xf32>
    %281 = vector.extract_strided_slice %263 {offsets = [0, 256], sizes = [8, 128], strides = [1, 1]} : vector<8x384xf32> to vector<8x128xf32>
    %282 = vector.broadcast %10 : vector<1x128xf32> to vector<8x128xf32>
    %283 = arith.addf %281, %282 : vector<8x128xf32>
    %284 = arith.mulf %271, %283 : vector<8x128xf32>
    %285 = arith.addf %280, %284 : vector<8x128xf32>
    %286 = math.tanh %285 : vector<8x128xf32>
    %cst_58 = arith.constant 1.000000e+00 : f32
    %287 = vector.broadcast %cst_58 : f32 to vector<8x128xf32>
    %288 = arith.subf %287, %279 : vector<8x128xf32>
    %289 = arith.mulf %288, %286 : vector<8x128xf32>
    %290 = arith.mulf %279, %229 : vector<8x128xf32>
    %291 = arith.addf %289, %290 : vector<8x128xf32>
    %cst_59 = arith.constant dense<0.000000e+00> : vector<8x384xf32>
    %292 = tpu.matmul %291, %7, %cst_59 {dimension_numbers = #tpu.dot_dimension_numbers<[1], [0], [0], [1], [0, 0, 1, 1], [], []>} : vector<8x128xf32>, vector<128x384xf32>, vector<8x384xf32> -> vector<8x384xf32>
    %293 = vector.broadcast %9 : vector<1x384xf32> to vector<8x384xf32>
    %294 = arith.addf %292, %293 : vector<8x384xf32>
    %cst_60 = arith.constant dense<0.000000e+00> : vector<8x384xf32>
    %295 = tpu.matmul %261, %8, %cst_60 {dimension_numbers = #tpu.dot_dimension_numbers<[1], [0], [0], [1], [0, 0, 1, 1], [], []>} : vector<8x128xf32>, vector<128x384xf32>, vector<8x384xf32> -> vector<8x384xf32>
    %296 = vector.extract_strided_slice %294 {offsets = [0, 0], sizes = [8, 128], strides = [1, 1]} : vector<8x384xf32> to vector<8x128xf32>
    %297 = vector.extract_strided_slice %295 {offsets = [0, 0], sizes = [8, 128], strides = [1, 1]} : vector<8x384xf32> to vector<8x128xf32>
    %298 = arith.addf %296, %297 : vector<8x128xf32>
    %299 = arith.negf %298 : vector<8x128xf32>
    %300 = math.exp %299 : vector<8x128xf32>
    %cst_61 = arith.constant 1.000000e+00 : f32
    %301 = vector.broadcast %cst_61 : f32 to vector<8x128xf32>
    %302 = arith.addf %301, %300 : vector<8x128xf32>
    %303 = arith.divf %301, %302 : vector<8x128xf32>
    %304 = vector.extract_strided_slice %294 {offsets = [0, 128], sizes = [8, 128], strides = [1, 1]} : vector<8x384xf32> to vector<8x128xf32>
    %305 = vector.extract_strided_slice %295 {offsets = [0, 128], sizes = [8, 128], strides = [1, 1]} : vector<8x384xf32> to vector<8x128xf32>
    %306 = arith.addf %304, %305 : vector<8x128xf32>
    %307 = arith.negf %306 : vector<8x128xf32>
    %308 = math.exp %307 : vector<8x128xf32>
    %cst_62 = arith.constant 1.000000e+00 : f32
    %309 = vector.broadcast %cst_62 : f32 to vector<8x128xf32>
    %310 = arith.addf %309, %308 : vector<8x128xf32>
    %311 = arith.divf %309, %310 : vector<8x128xf32>
    %312 = vector.extract_strided_slice %294 {offsets = [0, 256], sizes = [8, 128], strides = [1, 1]} : vector<8x384xf32> to vector<8x128xf32>
    %313 = vector.extract_strided_slice %295 {offsets = [0, 256], sizes = [8, 128], strides = [1, 1]} : vector<8x384xf32> to vector<8x128xf32>
    %314 = vector.broadcast %11 : vector<1x128xf32> to vector<8x128xf32>
    %315 = arith.addf %313, %314 : vector<8x128xf32>
    %316 = arith.mulf %303, %315 : vector<8x128xf32>
    %317 = arith.addf %312, %316 : vector<8x128xf32>
    %318 = math.tanh %317 : vector<8x128xf32>
    %cst_63 = arith.constant 1.000000e+00 : f32
    %319 = vector.broadcast %cst_63 : f32 to vector<8x128xf32>
    %320 = arith.subf %319, %311 : vector<8x128xf32>
    %321 = arith.mulf %320, %318 : vector<8x128xf32>
    %322 = arith.mulf %311, %261 : vector<8x128xf32>
    %323 = arith.addf %321, %322 : vector<8x128xf32>
    %324 = vector.extract_strided_slice %5 {offsets = [40, 0], sizes = [8, 384], strides = [1, 1]} : vector<64x384xf32> to vector<8x384xf32>
    %cst_64 = arith.constant dense<0.000000e+00> : vector<8x384xf32>
    %325 = tpu.matmul %291, %6, %cst_64 {dimension_numbers = #tpu.dot_dimension_numbers<[1], [0], [0], [1], [0, 0, 1, 1], [], []>} : vector<8x128xf32>, vector<128x384xf32>, vector<8x384xf32> -> vector<8x384xf32>
    %326 = vector.extract_strided_slice %324 {offsets = [0, 0], sizes = [8, 128], strides = [1, 1]} : vector<8x384xf32> to vector<8x128xf32>
    %327 = vector.extract_strided_slice %325 {offsets = [0, 0], sizes = [8, 128], strides = [1, 1]} : vector<8x384xf32> to vector<8x128xf32>
    %328 = arith.addf %326, %327 : vector<8x128xf32>
    %329 = arith.negf %328 : vector<8x128xf32>
    %330 = math.exp %329 : vector<8x128xf32>
    %cst_65 = arith.constant 1.000000e+00 : f32
    %331 = vector.broadcast %cst_65 : f32 to vector<8x128xf32>
    %332 = arith.addf %331, %330 : vector<8x128xf32>
    %333 = arith.divf %331, %332 : vector<8x128xf32>
    %334 = vector.extract_strided_slice %324 {offsets = [0, 128], sizes = [8, 128], strides = [1, 1]} : vector<8x384xf32> to vector<8x128xf32>
    %335 = vector.extract_strided_slice %325 {offsets = [0, 128], sizes = [8, 128], strides = [1, 1]} : vector<8x384xf32> to vector<8x128xf32>
    %336 = arith.addf %334, %335 : vector<8x128xf32>
    %337 = arith.negf %336 : vector<8x128xf32>
    %338 = math.exp %337 : vector<8x128xf32>
    %cst_66 = arith.constant 1.000000e+00 : f32
    %339 = vector.broadcast %cst_66 : f32 to vector<8x128xf32>
    %340 = arith.addf %339, %338 : vector<8x128xf32>
    %341 = arith.divf %339, %340 : vector<8x128xf32>
    %342 = vector.extract_strided_slice %324 {offsets = [0, 256], sizes = [8, 128], strides = [1, 1]} : vector<8x384xf32> to vector<8x128xf32>
    %343 = vector.extract_strided_slice %325 {offsets = [0, 256], sizes = [8, 128], strides = [1, 1]} : vector<8x384xf32> to vector<8x128xf32>
    %344 = vector.broadcast %10 : vector<1x128xf32> to vector<8x128xf32>
    %345 = arith.addf %343, %344 : vector<8x128xf32>
    %346 = arith.mulf %333, %345 : vector<8x128xf32>
    %347 = arith.addf %342, %346 : vector<8x128xf32>
    %348 = math.tanh %347 : vector<8x128xf32>
    %cst_67 = arith.constant 1.000000e+00 : f32
    %349 = vector.broadcast %cst_67 : f32 to vector<8x128xf32>
    %350 = arith.subf %349, %341 : vector<8x128xf32>
    %351 = arith.mulf %350, %348 : vector<8x128xf32>
    %352 = arith.mulf %341, %291 : vector<8x128xf32>
    %353 = arith.addf %351, %352 : vector<8x128xf32>
    %cst_68 = arith.constant dense<0.000000e+00> : vector<8x384xf32>
    %354 = tpu.matmul %353, %7, %cst_68 {dimension_numbers = #tpu.dot_dimension_numbers<[1], [0], [0], [1], [0, 0, 1, 1], [], []>} : vector<8x128xf32>, vector<128x384xf32>, vector<8x384xf32> -> vector<8x384xf32>
    %355 = vector.broadcast %9 : vector<1x384xf32> to vector<8x384xf32>
    %356 = arith.addf %354, %355 : vector<8x384xf32>
    %cst_69 = arith.constant dense<0.000000e+00> : vector<8x384xf32>
    %357 = tpu.matmul %323, %8, %cst_69 {dimension_numbers = #tpu.dot_dimension_numbers<[1], [0], [0], [1], [0, 0, 1, 1], [], []>} : vector<8x128xf32>, vector<128x384xf32>, vector<8x384xf32> -> vector<8x384xf32>
    %358 = vector.extract_strided_slice %356 {offsets = [0, 0], sizes = [8, 128], strides = [1, 1]} : vector<8x384xf32> to vector<8x128xf32>
    %359 = vector.extract_strided_slice %357 {offsets = [0, 0], sizes = [8, 128], strides = [1, 1]} : vector<8x384xf32> to vector<8x128xf32>
    %360 = arith.addf %358, %359 : vector<8x128xf32>
    %361 = arith.negf %360 : vector<8x128xf32>
    %362 = math.exp %361 : vector<8x128xf32>
    %cst_70 = arith.constant 1.000000e+00 : f32
    %363 = vector.broadcast %cst_70 : f32 to vector<8x128xf32>
    %364 = arith.addf %363, %362 : vector<8x128xf32>
    %365 = arith.divf %363, %364 : vector<8x128xf32>
    %366 = vector.extract_strided_slice %356 {offsets = [0, 128], sizes = [8, 128], strides = [1, 1]} : vector<8x384xf32> to vector<8x128xf32>
    %367 = vector.extract_strided_slice %357 {offsets = [0, 128], sizes = [8, 128], strides = [1, 1]} : vector<8x384xf32> to vector<8x128xf32>
    %368 = arith.addf %366, %367 : vector<8x128xf32>
    %369 = arith.negf %368 : vector<8x128xf32>
    %370 = math.exp %369 : vector<8x128xf32>
    %cst_71 = arith.constant 1.000000e+00 : f32
    %371 = vector.broadcast %cst_71 : f32 to vector<8x128xf32>
    %372 = arith.addf %371, %370 : vector<8x128xf32>
    %373 = arith.divf %371, %372 : vector<8x128xf32>
    %374 = vector.extract_strided_slice %356 {offsets = [0, 256], sizes = [8, 128], strides = [1, 1]} : vector<8x384xf32> to vector<8x128xf32>
    %375 = vector.extract_strided_slice %357 {offsets = [0, 256], sizes = [8, 128], strides = [1, 1]} : vector<8x384xf32> to vector<8x128xf32>
    %376 = vector.broadcast %11 : vector<1x128xf32> to vector<8x128xf32>
    %377 = arith.addf %375, %376 : vector<8x128xf32>
    %378 = arith.mulf %365, %377 : vector<8x128xf32>
    %379 = arith.addf %374, %378 : vector<8x128xf32>
    %380 = math.tanh %379 : vector<8x128xf32>
    %cst_72 = arith.constant 1.000000e+00 : f32
    %381 = vector.broadcast %cst_72 : f32 to vector<8x128xf32>
    %382 = arith.subf %381, %373 : vector<8x128xf32>
    %383 = arith.mulf %382, %380 : vector<8x128xf32>
    %384 = arith.mulf %373, %323 : vector<8x128xf32>
    %385 = arith.addf %383, %384 : vector<8x128xf32>
    %386 = vector.extract_strided_slice %5 {offsets = [48, 0], sizes = [8, 384], strides = [1, 1]} : vector<64x384xf32> to vector<8x384xf32>
    %cst_73 = arith.constant dense<0.000000e+00> : vector<8x384xf32>
    %387 = tpu.matmul %353, %6, %cst_73 {dimension_numbers = #tpu.dot_dimension_numbers<[1], [0], [0], [1], [0, 0, 1, 1], [], []>} : vector<8x128xf32>, vector<128x384xf32>, vector<8x384xf32> -> vector<8x384xf32>
    %388 = vector.extract_strided_slice %386 {offsets = [0, 0], sizes = [8, 128], strides = [1, 1]} : vector<8x384xf32> to vector<8x128xf32>
    %389 = vector.extract_strided_slice %387 {offsets = [0, 0], sizes = [8, 128], strides = [1, 1]} : vector<8x384xf32> to vector<8x128xf32>
    %390 = arith.addf %388, %389 : vector<8x128xf32>
    %391 = arith.negf %390 : vector<8x128xf32>
    %392 = math.exp %391 : vector<8x128xf32>
    %cst_74 = arith.constant 1.000000e+00 : f32
    %393 = vector.broadcast %cst_74 : f32 to vector<8x128xf32>
    %394 = arith.addf %393, %392 : vector<8x128xf32>
    %395 = arith.divf %393, %394 : vector<8x128xf32>
    %396 = vector.extract_strided_slice %386 {offsets = [0, 128], sizes = [8, 128], strides = [1, 1]} : vector<8x384xf32> to vector<8x128xf32>
    %397 = vector.extract_strided_slice %387 {offsets = [0, 128], sizes = [8, 128], strides = [1, 1]} : vector<8x384xf32> to vector<8x128xf32>
    %398 = arith.addf %396, %397 : vector<8x128xf32>
    %399 = arith.negf %398 : vector<8x128xf32>
    %400 = math.exp %399 : vector<8x128xf32>
    %cst_75 = arith.constant 1.000000e+00 : f32
    %401 = vector.broadcast %cst_75 : f32 to vector<8x128xf32>
    %402 = arith.addf %401, %400 : vector<8x128xf32>
    %403 = arith.divf %401, %402 : vector<8x128xf32>
    %404 = vector.extract_strided_slice %386 {offsets = [0, 256], sizes = [8, 128], strides = [1, 1]} : vector<8x384xf32> to vector<8x128xf32>
    %405 = vector.extract_strided_slice %387 {offsets = [0, 256], sizes = [8, 128], strides = [1, 1]} : vector<8x384xf32> to vector<8x128xf32>
    %406 = vector.broadcast %10 : vector<1x128xf32> to vector<8x128xf32>
    %407 = arith.addf %405, %406 : vector<8x128xf32>
    %408 = arith.mulf %395, %407 : vector<8x128xf32>
    %409 = arith.addf %404, %408 : vector<8x128xf32>
    %410 = math.tanh %409 : vector<8x128xf32>
    %cst_76 = arith.constant 1.000000e+00 : f32
    %411 = vector.broadcast %cst_76 : f32 to vector<8x128xf32>
    %412 = arith.subf %411, %403 : vector<8x128xf32>
    %413 = arith.mulf %412, %410 : vector<8x128xf32>
    %414 = arith.mulf %403, %353 : vector<8x128xf32>
    %415 = arith.addf %413, %414 : vector<8x128xf32>
    %cst_77 = arith.constant dense<0.000000e+00> : vector<8x384xf32>
    %416 = tpu.matmul %415, %7, %cst_77 {dimension_numbers = #tpu.dot_dimension_numbers<[1], [0], [0], [1], [0, 0, 1, 1], [], []>} : vector<8x128xf32>, vector<128x384xf32>, vector<8x384xf32> -> vector<8x384xf32>
    %417 = vector.broadcast %9 : vector<1x384xf32> to vector<8x384xf32>
    %418 = arith.addf %416, %417 : vector<8x384xf32>
    %cst_78 = arith.constant dense<0.000000e+00> : vector<8x384xf32>
    %419 = tpu.matmul %385, %8, %cst_78 {dimension_numbers = #tpu.dot_dimension_numbers<[1], [0], [0], [1], [0, 0, 1, 1], [], []>} : vector<8x128xf32>, vector<128x384xf32>, vector<8x384xf32> -> vector<8x384xf32>
    %420 = vector.extract_strided_slice %418 {offsets = [0, 0], sizes = [8, 128], strides = [1, 1]} : vector<8x384xf32> to vector<8x128xf32>
    %421 = vector.extract_strided_slice %419 {offsets = [0, 0], sizes = [8, 128], strides = [1, 1]} : vector<8x384xf32> to vector<8x128xf32>
    %422 = arith.addf %420, %421 : vector<8x128xf32>
    %423 = arith.negf %422 : vector<8x128xf32>
    %424 = math.exp %423 : vector<8x128xf32>
    %cst_79 = arith.constant 1.000000e+00 : f32
    %425 = vector.broadcast %cst_79 : f32 to vector<8x128xf32>
    %426 = arith.addf %425, %424 : vector<8x128xf32>
    %427 = arith.divf %425, %426 : vector<8x128xf32>
    %428 = vector.extract_strided_slice %418 {offsets = [0, 128], sizes = [8, 128], strides = [1, 1]} : vector<8x384xf32> to vector<8x128xf32>
    %429 = vector.extract_strided_slice %419 {offsets = [0, 128], sizes = [8, 128], strides = [1, 1]} : vector<8x384xf32> to vector<8x128xf32>
    %430 = arith.addf %428, %429 : vector<8x128xf32>
    %431 = arith.negf %430 : vector<8x128xf32>
    %432 = math.exp %431 : vector<8x128xf32>
    %cst_80 = arith.constant 1.000000e+00 : f32
    %433 = vector.broadcast %cst_80 : f32 to vector<8x128xf32>
    %434 = arith.addf %433, %432 : vector<8x128xf32>
    %435 = arith.divf %433, %434 : vector<8x128xf32>
    %436 = vector.extract_strided_slice %418 {offsets = [0, 256], sizes = [8, 128], strides = [1, 1]} : vector<8x384xf32> to vector<8x128xf32>
    %437 = vector.extract_strided_slice %419 {offsets = [0, 256], sizes = [8, 128], strides = [1, 1]} : vector<8x384xf32> to vector<8x128xf32>
    %438 = vector.broadcast %11 : vector<1x128xf32> to vector<8x128xf32>
    %439 = arith.addf %437, %438 : vector<8x128xf32>
    %440 = arith.mulf %427, %439 : vector<8x128xf32>
    %441 = arith.addf %436, %440 : vector<8x128xf32>
    %442 = math.tanh %441 : vector<8x128xf32>
    %cst_81 = arith.constant 1.000000e+00 : f32
    %443 = vector.broadcast %cst_81 : f32 to vector<8x128xf32>
    %444 = arith.subf %443, %435 : vector<8x128xf32>
    %445 = arith.mulf %444, %442 : vector<8x128xf32>
    %446 = arith.mulf %435, %385 : vector<8x128xf32>
    %447 = arith.addf %445, %446 : vector<8x128xf32>
    %448 = vector.extract_strided_slice %5 {offsets = [56, 0], sizes = [8, 384], strides = [1, 1]} : vector<64x384xf32> to vector<8x384xf32>
    %cst_82 = arith.constant dense<0.000000e+00> : vector<8x384xf32>
    %449 = tpu.matmul %415, %6, %cst_82 {dimension_numbers = #tpu.dot_dimension_numbers<[1], [0], [0], [1], [0, 0, 1, 1], [], []>} : vector<8x128xf32>, vector<128x384xf32>, vector<8x384xf32> -> vector<8x384xf32>
    %450 = vector.extract_strided_slice %448 {offsets = [0, 0], sizes = [8, 128], strides = [1, 1]} : vector<8x384xf32> to vector<8x128xf32>
    %451 = vector.extract_strided_slice %449 {offsets = [0, 0], sizes = [8, 128], strides = [1, 1]} : vector<8x384xf32> to vector<8x128xf32>
    %452 = arith.addf %450, %451 : vector<8x128xf32>
    %453 = arith.negf %452 : vector<8x128xf32>
    %454 = math.exp %453 : vector<8x128xf32>
    %cst_83 = arith.constant 1.000000e+00 : f32
    %455 = vector.broadcast %cst_83 : f32 to vector<8x128xf32>
    %456 = arith.addf %455, %454 : vector<8x128xf32>
    %457 = arith.divf %455, %456 : vector<8x128xf32>
    %458 = vector.extract_strided_slice %448 {offsets = [0, 128], sizes = [8, 128], strides = [1, 1]} : vector<8x384xf32> to vector<8x128xf32>
    %459 = vector.extract_strided_slice %449 {offsets = [0, 128], sizes = [8, 128], strides = [1, 1]} : vector<8x384xf32> to vector<8x128xf32>
    %460 = arith.addf %458, %459 : vector<8x128xf32>
    %461 = arith.negf %460 : vector<8x128xf32>
    %462 = math.exp %461 : vector<8x128xf32>
    %cst_84 = arith.constant 1.000000e+00 : f32
    %463 = vector.broadcast %cst_84 : f32 to vector<8x128xf32>
    %464 = arith.addf %463, %462 : vector<8x128xf32>
    %465 = arith.divf %463, %464 : vector<8x128xf32>
    %466 = vector.extract_strided_slice %448 {offsets = [0, 256], sizes = [8, 128], strides = [1, 1]} : vector<8x384xf32> to vector<8x128xf32>
    %467 = vector.extract_strided_slice %449 {offsets = [0, 256], sizes = [8, 128], strides = [1, 1]} : vector<8x384xf32> to vector<8x128xf32>
    %468 = vector.broadcast %10 : vector<1x128xf32> to vector<8x128xf32>
    %469 = arith.addf %467, %468 : vector<8x128xf32>
    %470 = arith.mulf %457, %469 : vector<8x128xf32>
    %471 = arith.addf %466, %470 : vector<8x128xf32>
    %472 = math.tanh %471 : vector<8x128xf32>
    %cst_85 = arith.constant 1.000000e+00 : f32
    %473 = vector.broadcast %cst_85 : f32 to vector<8x128xf32>
    %474 = arith.subf %473, %465 : vector<8x128xf32>
    %475 = arith.mulf %474, %472 : vector<8x128xf32>
    %476 = arith.mulf %465, %415 : vector<8x128xf32>
    %477 = arith.addf %475, %476 : vector<8x128xf32>
    %cst_86 = arith.constant dense<0.000000e+00> : vector<8x384xf32>
    %478 = tpu.matmul %477, %7, %cst_86 {dimension_numbers = #tpu.dot_dimension_numbers<[1], [0], [0], [1], [0, 0, 1, 1], [], []>} : vector<8x128xf32>, vector<128x384xf32>, vector<8x384xf32> -> vector<8x384xf32>
    %479 = vector.broadcast %9 : vector<1x384xf32> to vector<8x384xf32>
    %480 = arith.addf %478, %479 : vector<8x384xf32>
    %cst_87 = arith.constant dense<0.000000e+00> : vector<8x384xf32>
    %481 = tpu.matmul %447, %8, %cst_87 {dimension_numbers = #tpu.dot_dimension_numbers<[1], [0], [0], [1], [0, 0, 1, 1], [], []>} : vector<8x128xf32>, vector<128x384xf32>, vector<8x384xf32> -> vector<8x384xf32>
    %482 = vector.extract_strided_slice %480 {offsets = [0, 0], sizes = [8, 128], strides = [1, 1]} : vector<8x384xf32> to vector<8x128xf32>
    %483 = vector.extract_strided_slice %481 {offsets = [0, 0], sizes = [8, 128], strides = [1, 1]} : vector<8x384xf32> to vector<8x128xf32>
    %484 = arith.addf %482, %483 : vector<8x128xf32>
    %485 = arith.negf %484 : vector<8x128xf32>
    %486 = math.exp %485 : vector<8x128xf32>
    %cst_88 = arith.constant 1.000000e+00 : f32
    %487 = vector.broadcast %cst_88 : f32 to vector<8x128xf32>
    %488 = arith.addf %487, %486 : vector<8x128xf32>
    %489 = arith.divf %487, %488 : vector<8x128xf32>
    %490 = vector.extract_strided_slice %480 {offsets = [0, 128], sizes = [8, 128], strides = [1, 1]} : vector<8x384xf32> to vector<8x128xf32>
    %491 = vector.extract_strided_slice %481 {offsets = [0, 128], sizes = [8, 128], strides = [1, 1]} : vector<8x384xf32> to vector<8x128xf32>
    %492 = arith.addf %490, %491 : vector<8x128xf32>
    %493 = arith.negf %492 : vector<8x128xf32>
    %494 = math.exp %493 : vector<8x128xf32>
    %cst_89 = arith.constant 1.000000e+00 : f32
    %495 = vector.broadcast %cst_89 : f32 to vector<8x128xf32>
    %496 = arith.addf %495, %494 : vector<8x128xf32>
    %497 = arith.divf %495, %496 : vector<8x128xf32>
    %498 = vector.extract_strided_slice %480 {offsets = [0, 256], sizes = [8, 128], strides = [1, 1]} : vector<8x384xf32> to vector<8x128xf32>
    %499 = vector.extract_strided_slice %481 {offsets = [0, 256], sizes = [8, 128], strides = [1, 1]} : vector<8x384xf32> to vector<8x128xf32>
    %500 = vector.broadcast %11 : vector<1x128xf32> to vector<8x128xf32>
    %501 = arith.addf %499, %500 : vector<8x128xf32>
    %502 = arith.mulf %489, %501 : vector<8x128xf32>
    %503 = arith.addf %498, %502 : vector<8x128xf32>
    %504 = math.tanh %503 : vector<8x128xf32>
    %cst_90 = arith.constant 1.000000e+00 : f32
    %505 = vector.broadcast %cst_90 : f32 to vector<8x128xf32>
    %506 = arith.subf %505, %497 : vector<8x128xf32>
    %507 = arith.mulf %506, %504 : vector<8x128xf32>
    %508 = arith.mulf %497, %447 : vector<8x128xf32>
    %509 = arith.addf %507, %508 : vector<8x128xf32>
    %510 = tpu.concatenate %75, %137, %199, %261, %323, %385, %447, %509 in 1 : vector<8x128xf32>, vector<8x128xf32>, vector<8x128xf32>, vector<8x128xf32>, vector<8x128xf32>, vector<8x128xf32>, vector<8x128xf32>, vector<8x128xf32> -> vector<8x1024xf32>
    %c0_91 = arith.constant 0 : index
    %c0_92 = arith.constant 0 : index
    %511 = vector.load %arg9[%c0_91, %c0_92] : memref<1024x10xf32, #tpu.memory_space<vmem>>, vector<1024x10xf32>
    %cst_93 = arith.constant dense<0.000000e+00> : vector<8x10xf32>
    %512 = tpu.matmul %510, %511, %cst_93 {dimension_numbers = #tpu.dot_dimension_numbers<[1], [0], [0], [1], [0, 0, 1, 1], [], []>} : vector<8x1024xf32>, vector<1024x10xf32>, vector<8x10xf32> -> vector<8x10xf32>
    %c0_94 = arith.constant 0 : index
    %c0_95 = arith.constant 0 : index
    %513 = vector.load %arg10[%c0_94, %c0_95] : memref<1x10xf32, #tpu.memory_space<vmem>>, vector<1x10xf32>
    %514 = vector.broadcast %513 : vector<1x10xf32> to vector<8x10xf32>
    %515 = arith.addf %512, %514 : vector<8x10xf32>
    %c0_96 = arith.constant 0 : index
    %c0_97 = arith.constant 0 : index
    %516 = vector.load %arg11[%c0_96, %c0_97] : memref<8x10xf32, #tpu.memory_space<vmem>>, vector<8x10xf32>
    tpu.vector_store %arg11[%c0_96, %c0_97], %515 {strides = array<i32>} : memref<8x10xf32, #tpu.memory_space<vmem>>, vector<8x10xf32>,
    return
  }
}

</mosaic_0001>

<llo_original>
// kernel: rnn_forward.1
$region0: #{rnn_forward.1}
  #allocation0 [shape = 'u32[]', space=smem, size = 0x4, offset = 0x4, fixed_abs, tag = 'smem constant byte address 0x4 - core index']
  #allocation1 [shape = 'u32[72,128]{1,0:T(1,128)}', space=vmem, size = 0x9000, scoped, tag = 'internal scratch']
  %s0 = inlined_call_operand.vmem [shape: f32[64,28], index: 0, kind: input, shape index: {}]
  %s1 = inlined_call_operand.vmem [shape: f32[28,384], index: 1, kind: input, shape index: {}]
  %s2 = inlined_call_operand.vmem [shape: f32[128,384], index: 2, kind: input, shape index: {}]
  %s3 = inlined_call_operand.vmem [shape: f32[1,384], index: 3, kind: input, shape index: {}]
  %s4 = inlined_call_operand.vmem [shape: f32[1,128], index: 4, kind: input, shape index: {}]
  %s5 = inlined_call_operand.vmem [shape: f32[128,384], index: 5, kind: input, shape index: {}]
  %s6 = inlined_call_operand.vmem [shape: f32[128,384], index: 6, kind: input, shape index: {}]
  %s7 = inlined_call_operand.vmem [shape: f32[1,384], index: 7, kind: input, shape index: {}]
  %s8 = inlined_call_operand.vmem [shape: f32[1,128], index: 8, kind: input, shape index: {}]
  %s9 = inlined_call_operand.vmem [shape: f32[1024,10], index: 9, kind: input, shape index: {}]
  %s10 = inlined_call_operand.vmem [shape: f32[1,10], index: 10, kind: input, shape index: {}]
  %s11 = inlined_call_operand.vmem [shape: f32[8,10], index: 11, kind: output, shape index: {}]
  %s12 = sld [smem:[#allocation0]]
  $region54: #{rnn_forward.1} parent=0
    _
  %s14 = ssub.s32 1, %s12
  %s15 = scalar_select 0, %s14, %s12
  // Predicated region
  $region2: #{rnn_forward.1} parent=0 // pred_check
    _
  $region3: #{rnn_forward.1} parent=0 // pred_check_branch
    %17 = sbr.rel (0) target = $region5
  $region4: #{rnn_forward.1} parent=0 // pred_region
    _
  $region5: #{rnn_forward.1} parent=0 // pred_fallthru
    _
  // Predicated region
  $region6: #{rnn_forward.1} parent=0 // pred_check
    _
  $region7: #{rnn_forward.1} parent=0 // pred_check_branch
    %19 = sbr.rel (0) target = $region9
  $region8: #{rnn_forward.1} parent=0 // pred_region
    _
  $region9: #{rnn_forward.1} parent=0 // pred_fallthru
    _
  // Predicated region
  $region10: #{rnn_forward.1} parent=0 // pred_check
    _
  $region11: #{rnn_forward.1} parent=0 // pred_check_branch
    %21 = sbr.rel (0) target = $region13
  $region12: #{rnn_forward.1} parent=0 // pred_region
    _
  $region13: #{rnn_forward.1} parent=0 // pred_fallthru
    _
  // Predicated region
  $region14: #{rnn_forward.1} parent=0 // pred_check
    _
  $region15: #{rnn_forward.1} parent=0 // pred_check_branch
    %23 = sbr.rel (0) target = $region17
  $region16: #{rnn_forward.1} parent=0 // pred_region
    _
  $region17: #{rnn_forward.1} parent=0 // pred_fallthru
    _
  // Predicated region
  $region18: #{rnn_forward.1} parent=0 // pred_check
    _
  $region19: #{rnn_forward.1} parent=0 // pred_check_branch
    %25 = sbr.rel (0) target = $region21
  $region20: #{rnn_forward.1} parent=0 // pred_region
    _
  $region21: #{rnn_forward.1} parent=0 // pred_fallthru
    _
  // Predicated region
  $region22: #{rnn_forward.1} parent=0 // pred_check
    _
  $region23: #{rnn_forward.1} parent=0 // pred_check_branch
    %27 = sbr.rel (0) target = $region25
  $region24: #{rnn_forward.1} parent=0 // pred_region
    _
  $region25: #{rnn_forward.1} parent=0 // pred_fallthru
    _
  // Predicated region
  $region26: #{rnn_forward.1} parent=0 // pred_check
    _
  $region27: #{rnn_forward.1} parent=0 // pred_check_branch
    %29 = sbr.rel (0) target = $region29
  $region28: #{rnn_forward.1} parent=0 // pred_region
    _
  $region29: #{rnn_forward.1} parent=0 // pred_fallthru
    _
  // Predicated region
  $region30: #{rnn_forward.1} parent=0 // pred_check
    _
  $region31: #{rnn_forward.1} parent=0 // pred_check_branch
    %31 = sbr.rel (0) target = $region33
  $region32: #{rnn_forward.1} parent=0 // pred_region
    _
  $region33: #{rnn_forward.1} parent=0 // pred_fallthru
    _
  // Predicated region
  $region34: #{rnn_forward.1} parent=0 // pred_check
    _
  $region35: #{rnn_forward.1} parent=0 // pred_check_branch
    %33 = sbr.rel (0) target = $region37
  $region36: #{rnn_forward.1} parent=0 // pred_region
    _
  $region37: #{rnn_forward.1} parent=0 // pred_fallthru
    _
  // Predicated region
  $region38: #{rnn_forward.1} parent=0 // pred_check
    _
  $region39: #{rnn_forward.1} parent=0 // pred_check_branch
    %35 = sbr.rel (0) target = $region41
  $region40: #{rnn_forward.1} parent=0 // pred_region
    _
  $region41: #{rnn_forward.1} parent=0 // pred_fallthru
    _
  // Predicated region
  $region42: #{rnn_forward.1} parent=0 // pred_check
    _
  $region43: #{rnn_forward.1} parent=0 // pred_check_branch
    %37 = sbr.rel (0) target = $region45
  $region44: #{rnn_forward.1} parent=0 // pred_region
    _
  $region45: #{rnn_forward.1} parent=0 // pred_fallthru
    _
  %v38 = vld [vmem:[%s0] sm:$0xff]
  %v39 = vld [vmem:[%s0 + $0x8] sm:$0xff]
  %v40 = vld [vmem:[%s0 + $0x10] sm:$0xff]
  %v41 = vld [vmem:[%s0 + $0x18] sm:$0xff]
  %v42 = vld [vmem:[%s0 + $0x20] sm:$0xff]
  %v43 = vld [vmem:[%s0 + $0x28] sm:$0xff]
  %v44 = vld [vmem:[%s0 + $0x30] sm:$0xff]
  %v45 = vld [vmem:[%s0 + $0x38] sm:$0xff]
  %v46 = vld [vmem:[%s1] sm:$0xff]
  %v47 = vld [vmem:[%s1 + $0x8] sm:$0xff]
  %v48 = vld [vmem:[%s1 + $0x10] sm:$0xff]
  %v49 = vld [vmem:[%s1 + $0x18] sm:$0xff]
  %v50 = vld [vmem:[%s1 + $0x20] sm:$0xff]
  %v51 = vld [vmem:[%s1 + $0x28] sm:$0xff]
  %v52 = vld [vmem:[%s1 + $0x30] sm:$0xff]
  %v53 = vld [vmem:[%s1 + $0x38] sm:$0xff]
  %v54 = vld [vmem:[%s1 + $0x40] sm:$0xff]
  %v55 = vld [vmem:[%s1 + $0x48] sm:$0xf]
  %v56 = vld [vmem:[%s1 + $0x50] sm:$0xf]
  %v57 = vld [vmem:[%s1 + $0x58] sm:$0xf]
  %v58 = vld [vmem:[%s3] sm:$0x7]
  %v60 = vperm.slane %v58, 0
  %v61 = vperm.slane %v58, 1
  %v62 = vperm.slane %v58, 2
  %vm66 = vcmask 228352
  %v68 = vsel %vm66, %v38, 0
  %v71 = vsel %vm66, %v39, 0
  %v74 = vsel %vm66, %v40, 0
  %v77 = vsel %vm66, %v41, 0
  %v80 = vsel %vm66, %v42, 0
  %v83 = vsel %vm66, %v43, 0
  %v86 = vsel %vm66, %v44, 0
  %v89 = vsel %vm66, %v45, 0
  %vm91 = vcmask 1043456
  %v93 = vsel %vm91, %v55, 0
  %v96 = vsel %vm91, %v56, 0
  %v99 = vsel %vm91, %v57, 0
  %101 = vmatpush.msra.mxu0 0.0
  %102 = vmatpush.msra.mxu0 0.0
  %103 = vmatpush.msra.mxu0 0.0
  %104 = vmatpush.msra.mxu0 0.0
  %105 = vmatpush.msra.mxu0 0.0
  %106 = vmatpush.msra.mxu0 0.0
  %107 = vmatpush.msra.mxu0 0.0
  %108 = vmatpush.msra.mxu0 0.0
  %109 = vmatpush.msra.mxu0 0.0
  %110 = vmatpush.msra.mxu0 0.0
  %111 = vmatpush.msra.mxu0 0.0
  %112 = vmatpush.msra.mxu0 0.0
  %113 = vmatpush.msra.mxu0 %v93
  %114 = vmatpush.msra.mxu0 %v52
  %115 = vmatpush.msra.mxu0 %v49
  %116 = vmatpush.msra.mxu0 %v46
  %117 = vmatmul.f32.gmra.mxu0 %v68
  %v118 = vpop.f32.mrf.mxu0
  %v119 = vadd.f32 %v60, %v118
  %120 = vmatmul.f32.gmra.mxu0 %v71
  %v121 = vpop.f32.mrf.mxu0
  %v122 = vadd.f32 %v60, %v121
  %123 = vmatmul.f32.gmra.mxu0 %v74
  %v124 = vpop.f32.mrf.mxu0
  %v125 = vadd.f32 %v60, %v124
  %126 = vmatmul.f32.gmra.mxu0 %v77
  %v127 = vpop.f32.mrf.mxu0
  %v128 = vadd.f32 %v60, %v127
  %129 = vmatmul.f32.gmra.mxu0 %v80
  %v130 = vpop.f32.mrf.mxu0
  %v131 = vadd.f32 %v60, %v130
  %132 = vmatmul.f32.gmra.mxu0 %v83
  %v133 = vpop.f32.mrf.mxu0
  %v134 = vadd.f32 %v60, %v133
  %135 = vmatmul.f32.gmra.mxu0 %v86
  %v136 = vpop.f32.mrf.mxu0
  %v137 = vadd.f32 %v60, %v136
  %138 = vmatmul.f32.gmra.mxu0 %v89
  %v139 = vpop.f32.mrf.mxu0
  %v140 = vadd.f32 %v60, %v139
  %141 = vdwg.mxu0
  %142 = vmatpush.msra.mxu0 0.0
  %143 = vmatpush.msra.mxu0 0.0
  %144 = vmatpush.msra.mxu0 0.0
  %145 = vmatpush.msra.mxu0 0.0
  %146 = vmatpush.msra.mxu0 0.0
  %147 = vmatpush.msra.mxu0 0.0
  %148 = vmatpush.msra.mxu0 0.0
  %149 = vmatpush.msra.mxu0 0.0
  %150 = vmatpush.msra.mxu0 0.0
  %151 = vmatpush.msra.mxu0 0.0
  %152 = vmatpush.msra.mxu0 0.0
  %153 = vmatpush.msra.mxu0 0.0
  %154 = vmatpush.msra.mxu0 %v96
  %155 = vmatpush.msra.mxu0 %v53
  %156 = vmatpush.msra.mxu0 %v50
  %157 = vmatpush.msra.mxu0 %v47
  %158 = vmatmul.f32.gmra.mxu0 %v68
  %v159 = vpop.f32.mrf.mxu0
  %v160 = vadd.f32 %v61, %v159
  %161 = vmatmul.f32.gmra.mxu0 %v71
  %v162 = vpop.f32.mrf.mxu0
  %v163 = vadd.f32 %v61, %v162
  %164 = vmatmul.f32.gmra.mxu0 %v74
  %v165 = vpop.f32.mrf.mxu0
  %v166 = vadd.f32 %v61, %v165
  %167 = vmatmul.f32.gmra.mxu0 %v77
  %v168 = vpop.f32.mrf.mxu0
  %v169 = vadd.f32 %v61, %v168
  %170 = vmatmul.f32.gmra.mxu0 %v80
  %v171 = vpop.f32.mrf.mxu0
  %v172 = vadd.f32 %v61, %v171
  %173 = vmatmul.f32.gmra.mxu0 %v83
  %v174 = vpop.f32.mrf.mxu0
  %v175 = vadd.f32 %v61, %v174
  %176 = vmatmul.f32.gmra.mxu0 %v86
  %v177 = vpop.f32.mrf.mxu0
  %v178 = vadd.f32 %v61, %v177
  %179 = vmatmul.f32.gmra.mxu0 %v89
  %v180 = vpop.f32.mrf.mxu0
  %v181 = vadd.f32 %v61, %v180
  %182 = vdwg.mxu0
  %183 = vmatpush.msra.mxu0 0.0
  %184 = vmatpush.msra.mxu0 0.0
  %185 = vmatpush.msra.mxu0 0.0
  %186 = vmatpush.msra.mxu0 0.0
  %187 = vmatpush.msra.mxu0 0.0
  %188 = vmatpush.msra.mxu0 0.0
  %189 = vmatpush.msra.mxu0 0.0
  %190 = vmatpush.msra.mxu0 0.0
  %191 = vmatpush.msra.mxu0 0.0
  %192 = vmatpush.msra.mxu0 0.0
  %193 = vmatpush.msra.mxu0 0.0
  %194 = vmatpush.msra.mxu0 0.0
  %195 = vmatpush.msra.mxu0 %v99
  %196 = vmatpush.msra.mxu0 %v54
  %197 = vmatpush.msra.mxu0 %v51
  %198 = vmatpush.msra.mxu0 %v48
  %199 = vmatmul.f32.gmra.mxu0 %v68
  %v200 = vpop.f32.mrf.mxu0
  %v201 = vadd.f32 %v62, %v200
  %202 = vmatmul.f32.gmra.mxu0 %v71
  %v203 = vpop.f32.mrf.mxu0
  %v204 = vadd.f32 %v62, %v203
  %205 = vmatmul.f32.gmra.mxu0 %v74
  %v206 = vpop.f32.mrf.mxu0
  %v207 = vadd.f32 %v62, %v206
  %208 = vmatmul.f32.gmra.mxu0 %v77
  %v209 = vpop.f32.mrf.mxu0
  %v210 = vadd.f32 %v62, %v209
  %211 = vmatmul.f32.gmra.mxu0 %v80
  %v212 = vpop.f32.mrf.mxu0
  %v213 = vadd.f32 %v62, %v212
  %214 = vmatmul.f32.gmra.mxu0 %v83
  %v215 = vpop.f32.mrf.mxu0
  %v216 = vadd.f32 %v62, %v215
  %217 = vmatmul.f32.gmra.mxu0 %v86
  %v218 = vpop.f32.mrf.mxu0
  %v219 = vadd.f32 %v62, %v218
  %220 = vmatmul.f32.gmra.mxu0 %v89
  %v221 = vpop.f32.mrf.mxu0
  %v222 = vadd.f32 %v62, %v221
  %223 = vdwg.mxu0
  %v224 = vld [vmem:[%s2] sm:$0xff]
  %v225 = vld [vmem:[%s2 + $0x8] sm:$0xff]
  %v226 = vld [vmem:[%s2 + $0x10] sm:$0xff]
  %v227 = vld [vmem:[%s2 + $0x18] sm:$0xff]
  %v228 = vld [vmem:[%s2 + $0x20] sm:$0xff]
  %v229 = vld [vmem:[%s2 + $0x28] sm:$0xff]
  %v230 = vld [vmem:[%s2 + $0x30] sm:$0xff]
  %v231 = vld [vmem:[%s2 + $0x38] sm:$0xff]
  %v232 = vld [vmem:[%s2 + $0x40] sm:$0xff]
  %v233 = vld [vmem:[%s2 + $0x48] sm:$0xff]
  %v234 = vld [vmem:[%s2 + $0x50] sm:$0xff]
  %v235 = vld [vmem:[%s2 + $0x58] sm:$0xff]
  %v236 = vld [vmem:[%s2 + $0x60] sm:$0xff]
  %v237 = vld [vmem:[%s2 + $0x68] sm:$0xff]
  %v238 = vld [vmem:[%s2 + $0x70] sm:$0xff]
  %v239 = vld [vmem:[%s2 + $0x78] sm:$0xff]
  %v240 = vld [vmem:[%s2 + $0x80] sm:$0xff]
  %v241 = vld [vmem:[%s2 + $0x88] sm:$0xff]
  %v242 = vld [vmem:[%s2 + $0x90] sm:$0xff]
  %v243 = vld [vmem:[%s2 + $0x98] sm:$0xff]
  %v244 = vld [vmem:[%s2 + $0xa0] sm:$0xff]
  %v245 = vld [vmem:[%s2 + $0xa8] sm:$0xff]
  %v246 = vld [vmem:[%s2 + $0xb0] sm:$0xff]
  %v247 = vld [vmem:[%s2 + $0xb8] sm:$0xff]
  %v248 = vld [vmem:[%s2 + $0xc0] sm:$0xff]
  %v249 = vld [vmem:[%s2 + $0xc8] sm:$0xff]
  %v250 = vld [vmem:[%s2 + $0xd0] sm:$0xff]
  %v251 = vld [vmem:[%s2 + $0xd8] sm:$0xff]
  %v252 = vld [vmem:[%s2 + $0xe0] sm:$0xff]
  %v253 = vld [vmem:[%s2 + $0xe8] sm:$0xff]
  %v254 = vld [vmem:[%s2 + $0xf0] sm:$0xff]
  %v255 = vld [vmem:[%s2 + $0xf8] sm:$0xff]
  %v256 = vld [vmem:[%s2 + $0x100] sm:$0xff]
  %v257 = vld [vmem:[%s2 + $0x108] sm:$0xff]
  %v258 = vld [vmem:[%s2 + $0x110] sm:$0xff]
  %v259 = vld [vmem:[%s2 + $0x118] sm:$0xff]
  %v260 = vld [vmem:[%s2 + $0x120] sm:$0xff]
  %v261 = vld [vmem:[%s2 + $0x128] sm:$0xff]
  %v262 = vld [vmem:[%s2 + $0x130] sm:$0xff]
  %v263 = vld [vmem:[%s2 + $0x138] sm:$0xff]
  %v264 = vld [vmem:[%s2 + $0x140] sm:$0xff]
  %v265 = vld [vmem:[%s2 + $0x148] sm:$0xff]
  %v266 = vld [vmem:[%s2 + $0x150] sm:$0xff]
  %v267 = vld [vmem:[%s2 + $0x158] sm:$0xff]
  %v268 = vld [vmem:[%s2 + $0x160] sm:$0xff]
  %v269 = vld [vmem:[%s2 + $0x168] sm:$0xff]
  %v270 = vld [vmem:[%s2 + $0x170] sm:$0xff]
  %v271 = vld [vmem:[%s2 + $0x178] sm:$0xff]
  %v272 = vld [vmem:[%s5] sm:$0xff]
  %v273 = vld [vmem:[%s5 + $0x8] sm:$0xff]
  %v274 = vld [vmem:[%s5 + $0x10] sm:$0xff]
  %v275 = vld [vmem:[%s5 + $0x18] sm:$0xff]
  %v276 = vld [vmem:[%s5 + $0x20] sm:$0xff]
  %v277 = vld [vmem:[%s5 + $0x28] sm:$0xff]
  %v278 = vld [vmem:[%s5 + $0x30] sm:$0xff]
  %v279 = vld [vmem:[%s5 + $0x38] sm:$0xff]
  %v280 = vld [vmem:[%s5 + $0x40] sm:$0xff]
  %v281 = vld [vmem:[%s5 + $0x48] sm:$0xff]
  %v282 = vld [vmem:[%s5 + $0x50] sm:$0xff]
  %v283 = vld [vmem:[%s5 + $0x58] sm:$0xff]
  %v284 = vld [vmem:[%s5 + $0x60] sm:$0xff]
  %v285 = vld [vmem:[%s5 + $0x68] sm:$0xff]
  %v286 = vld [vmem:[%s5 + $0x70] sm:$0xff]
  %v287 = vld [vmem:[%s5 + $0x78] sm:$0xff]
  %v288 = vld [vmem:[%s5 + $0x80] sm:$0xff]
  %v289 = vld [vmem:[%s5 + $0x88] sm:$0xff]
  %v290 = vld [vmem:[%s5 + $0x90] sm:$0xff]
  %v291 = vld [vmem:[%s5 + $0x98] sm:$0xff]
  %v292 = vld [vmem:[%s5 + $0xa0] sm:$0xff]
  %v293 = vld [vmem:[%s5 + $0xa8] sm:$0xff]
  %v294 = vld [vmem:[%s5 + $0xb0] sm:$0xff]
  %v295 = vld [vmem:[%s5 + $0xb8] sm:$0xff]
  %v296 = vld [vmem:[%s5 + $0xc0] sm:$0xff]
  %v297 = vld [vmem:[%s5 + $0xc8] sm:$0xff]
  %v298 = vld [vmem:[%s5 + $0xd0] sm:$0xff]
  %v299 = vld [vmem:[%s5 + $0xd8] sm:$0xff]
  %v300 = vld [vmem:[%s5 + $0xe0] sm:$0xff]
  %v301 = vld [vmem:[%s5 + $0xe8] sm:$0xff]
  %v302 = vld [vmem:[%s5 + $0xf0] sm:$0xff]
  %v303 = vld [vmem:[%s5 + $0xf8] sm:$0xff]
  %v304 = vld [vmem:[%s5 + $0x100] sm:$0xff]
  %v305 = vld [vmem:[%s5 + $0x108] sm:$0xff]
  %v306 = vld [vmem:[%s5 + $0x110] sm:$0xff]
  %v307 = vld [vmem:[%s5 + $0x118] sm:$0xff]
  %v308 = vld [vmem:[%s5 + $0x120] sm:$0xff]
  %v309 = vld [vmem:[%s5 + $0x128] sm:$0xff]
  %v310 = vld [vmem:[%s5 + $0x130] sm:$0xff]
  %v311 = vld [vmem:[%s5 + $0x138] sm:$0xff]
  %v312 = vld [vmem:[%s5 + $0x140] sm:$0xff]
  %v313 = vld [vmem:[%s5 + $0x148] sm:$0xff]
  %v314 = vld [vmem:[%s5 + $0x150] sm:$0xff]
  %v315 = vld [vmem:[%s5 + $0x158] sm:$0xff]
  %v316 = vld [vmem:[%s5 + $0x160] sm:$0xff]
  %v317 = vld [vmem:[%s5 + $0x168] sm:$0xff]
  %v318 = vld [vmem:[%s5 + $0x170] sm:$0xff]
  %v319 = vld [vmem:[%s5 + $0x178] sm:$0xff]
  %v320 = vld [vmem:[%s6] sm:$0xff]
  %v321 = vld [vmem:[%s6 + $0x8] sm:$0xff]
  %v322 = vld [vmem:[%s6 + $0x10] sm:$0xff]
  %v323 = vld [vmem:[%s6 + $0x18] sm:$0xff]
  %v324 = vld [vmem:[%s6 + $0x20] sm:$0xff]
  %v325 = vld [vmem:[%s6 + $0x28] sm:$0xff]
  %v326 = vld [vmem:[%s6 + $0x30] sm:$0xff]
  %v327 = vld [vmem:[%s6 + $0x38] sm:$0xff]
  %v328 = vld [vmem:[%s6 + $0x40] sm:$0xff]
  %v329 = vld [vmem:[%s6 + $0x48] sm:$0xff]
  %v330 = vld [vmem:[%s6 + $0x50] sm:$0xff]
  %v331 = vld [vmem:[%s6 + $0x58] sm:$0xff]
  %v332 = vld [vmem:[%s6 + $0x60] sm:$0xff]
  %v333 = vld [vmem:[%s6 + $0x68] sm:$0xff]
  %v334 = vld [vmem:[%s6 + $0x70] sm:$0xff]
  %v335 = vld [vmem:[%s6 + $0x78] sm:$0xff]
  %v336 = vld [vmem:[%s6 + $0x80] sm:$0xff]
  %v337 = vld [vmem:[%s6 + $0x88] sm:$0xff]
  %v338 = vld [vmem:[%s6 + $0x90] sm:$0xff]
  %v339 = vld [vmem:[%s6 + $0x98] sm:$0xff]
  %v340 = vld [vmem:[%s6 + $0xa0] sm:$0xff]
  %v341 = vld [vmem:[%s6 + $0xa8] sm:$0xff]
  %v342 = vld [vmem:[%s6 + $0xb0] sm:$0xff]
  %v343 = vld [vmem:[%s6 + $0xb8] sm:$0xff]
  %v344 = vld [vmem:[%s6 + $0xc0] sm:$0xff]
  %v345 = vld [vmem:[%s6 + $0xc8] sm:$0xff]
  %v346 = vld [vmem:[%s6 + $0xd0] sm:$0xff]
  %v347 = vld [vmem:[%s6 + $0xd8] sm:$0xff]
  %v348 = vld [vmem:[%s6 + $0xe0] sm:$0xff]
  %v349 = vld [vmem:[%s6 + $0xe8] sm:$0xff]
  %v350 = vld [vmem:[%s6 + $0xf0] sm:$0xff]
  %v351 = vld [vmem:[%s6 + $0xf8] sm:$0xff]
  %v352 = vld [vmem:[%s6 + $0x100] sm:$0xff]
  %v353 = vld [vmem:[%s6 + $0x108] sm:$0xff]
  %v354 = vld [vmem:[%s6 + $0x110] sm:$0xff]
  %v355 = vld [vmem:[%s6 + $0x118] sm:$0xff]
  %v356 = vld [vmem:[%s6 + $0x120] sm:$0xff]
  %v357 = vld [vmem:[%s6 + $0x128] sm:$0xff]
  %v358 = vld [vmem:[%s6 + $0x130] sm:$0xff]
  %v359 = vld [vmem:[%s6 + $0x138] sm:$0xff]
  %v360 = vld [vmem:[%s6 + $0x140] sm:$0xff]
  %v361 = vld [vmem:[%s6 + $0x148] sm:$0xff]
  %v362 = vld [vmem:[%s6 + $0x150] sm:$0xff]
  %v363 = vld [vmem:[%s6 + $0x158] sm:$0xff]
  %v364 = vld [vmem:[%s6 + $0x160] sm:$0xff]
  %v365 = vld [vmem:[%s6 + $0x168] sm:$0xff]
  %v366 = vld [vmem:[%s6 + $0x170] sm:$0xff]
  %v367 = vld [vmem:[%s6 + $0x178] sm:$0xff]
  %v368 = vld [vmem:[%s7] sm:$0x7]
  %v369 = vld [vmem:[%s4] sm:$0x1]
  %v370 = vld [vmem:[%s8] sm:$0x1]
  %371 = vmatpush.msra.mxu0 %v269
  %372 = vmatpush.msra.mxu0 %v266
  %373 = vmatpush.msra.mxu0 %v263
  %374 = vmatpush.msra.mxu0 %v260
  %375 = vmatpush.msra.mxu0 %v257
  %376 = vmatpush.msra.mxu0 %v254
  %377 = vmatpush.msra.mxu0 %v251
  %378 = vmatpush.msra.mxu0 %v248
  %379 = vmatpush.msra.mxu0 %v245
  %380 = vmatpush.msra.mxu0 %v242
  %381 = vmatpush.msra.mxu0 %v239
  %382 = vmatpush.msra.mxu0 %v236
  %383 = vmatpush.msra.mxu0 %v233
  %384 = vmatpush.msra.mxu0 %v230
  %385 = vmatpush.msra.mxu0 %v227
  %386 = vmatpush.msra.mxu0 %v224
  %387 = vmatmul.f32.gmra.mxu0 0.0
  %v388 = vpop.f32.mrf.mxu0
  %v389 = vadd.f32 0.0, %v388
  %390 = vdwg.mxu0
  %391 = vmatpush.msra.mxu0 %v270
  %392 = vmatpush.msra.mxu0 %v267
  %393 = vmatpush.msra.mxu0 %v264
  %394 = vmatpush.msra.mxu0 %v261
  %395 = vmatpush.msra.mxu0 %v258
  %396 = vmatpush.msra.mxu0 %v255
  %397 = vmatpush.msra.mxu0 %v252
  %398 = vmatpush.msra.mxu0 %v249
  %399 = vmatpush.msra.mxu0 %v246
  %400 = vmatpush.msra.mxu0 %v243
  %401 = vmatpush.msra.mxu0 %v240
  %402 = vmatpush.msra.mxu0 %v237
  %403 = vmatpush.msra.mxu0 %v234
  %404 = vmatpush.msra.mxu0 %v231
  %405 = vmatpush.msra.mxu0 %v228
  %406 = vmatpush.msra.mxu0 %v225
  %407 = vmatmul.f32.gmra.mxu0 0.0
  %v408 = vpop.f32.mrf.mxu0
  %v409 = vadd.f32 0.0, %v408
  %410 = vdwg.mxu0
  %411 = vmatpush.msra.mxu0 %v271
  %412 = vmatpush.msra.mxu0 %v268
  %413 = vmatpush.msra.mxu0 %v265
  %414 = vmatpush.msra.mxu0 %v262
  %415 = vmatpush.msra.mxu0 %v259
  %416 = vmatpush.msra.mxu0 %v256
  %417 = vmatpush.msra.mxu0 %v253
  %418 = vmatpush.msra.mxu0 %v250
  %419 = vmatpush.msra.mxu0 %v247
  %420 = vmatpush.msra.mxu0 %v244
  %421 = vmatpush.msra.mxu0 %v241
  %422 = vmatpush.msra.mxu0 %v238
  %423 = vmatpush.msra.mxu0 %v235
  %424 = vmatpush.msra.mxu0 %v232
  %425 = vmatpush.msra.mxu0 %v229
  %426 = vmatpush.msra.mxu0 %v226
  %427 = vmatmul.f32.gmra.mxu0 0.0
  %v428 = vpop.f32.mrf.mxu0
  %v429 = vadd.f32 0.0, %v428
  %430 = vdwg.mxu0
  %v431 = vadd.f32 %v119, %v389
  %v432 = vxor.u32 %v431, 2147483648
  %v433 = vmul.f32 %v432, 1.442695
  %v434 = vpow.pop %v433
  %v435 = vadd.f32 %v434, 1.0
  %v436 = vrcp.pop %v435
  %v437 = vmul.f32 %v435, %v436
  %v438 = vsub.f32 1.0, %v437
  %v439 = vmul.f32 %v436, %v438
  %v440 = vadd.f32 %v436, %v439
  %vm441 = vweird.f32 %v435
  %vm442 = vweird.f32 %v436
  %vm443 = vmor %vm441, %vm442
  %v444 = vsel %vm443, %v436, %v440
  %v445 = vand.u32 2147483647, %v435
  %vm446 = vcmp.eq.f32.partialorder %v445, 8.507059e+37
  %v447 = vand.u32 %v435, 2147483648
  %v448 = vor.u32 1.1754944e-38, %v447
  %v449 = vsel %vm446, %v448, %v444
  %v450 = vmul.f32 1.0, %v449
  %v451 = vadd.f32 %v160, %v409
  %v452 = vxor.u32 %v451, 2147483648
  %v453 = vmul.f32 %v452, 1.442695
  %v454 = vpow.pop %v453
  %v455 = vadd.f32 %v454, 1.0
  %v456 = vrcp.pop %v455
  %v457 = vmul.f32 %v455, %v456
  %v458 = vsub.f32 1.0, %v457
  %v459 = vmul.f32 %v456, %v458
  %v460 = vadd.f32 %v456, %v459
  %vm461 = vweird.f32 %v455
  %vm462 = vweird.f32 %v456
  %vm463 = vmor %vm461, %vm462
  %v464 = vsel %vm463, %v456, %v460
  %v465 = vand.u32 2147483647, %v455
  %vm466 = vcmp.eq.f32.partialorder %v465, 8.507059e+37
  %v467 = vand.u32 %v455, 2147483648
  %v468 = vor.u32 1.1754944e-38, %v467
  %v469 = vsel %vm466, %v468, %v464
  %v470 = vmul.f32 1.0, %v469
  %v472 = vperm.slane %v369, 0
  %v474 = vadd.f32 %v429, %v472
  %v475 = vmul.f32 %v450, %v474
  %v476 = vadd.f32 %v201, %v475
  %v477 = vtanh.pop %v476
  %v478 = vsub.f32 1.0, %v470
  %v479 = vmul.f32 %v478, %v477
  %v480 = vmul.f32 %v470, 0.0
  %v481 = vadd.f32 %v479, %v480
  %v483 = vperm.slane %v368, 0
  %v484 = vperm.slane %v368, 1
  %v485 = vperm.slane %v368, 2
  %489 = vmatpush.msra.mxu0 %v317
  %490 = vmatpush.msra.mxu0 %v314
  %491 = vmatpush.msra.mxu0 %v311
  %492 = vmatpush.msra.mxu0 %v308
  %493 = vmatpush.msra.mxu0 %v305
  %494 = vmatpush.msra.mxu0 %v302
  %495 = vmatpush.msra.mxu0 %v299
  %496 = vmatpush.msra.mxu0 %v296
  %497 = vmatpush.msra.mxu0 %v293
  %498 = vmatpush.msra.mxu0 %v290
  %499 = vmatpush.msra.mxu0 %v287
  %500 = vmatpush.msra.mxu0 %v284
  %501 = vmatpush.msra.mxu0 %v281
  %502 = vmatpush.msra.mxu0 %v278
  %503 = vmatpush.msra.mxu0 %v275
  %504 = vmatpush.msra.mxu0 %v272
  %505 = vmatmul.f32.gmra.mxu0 %v481
  %v506 = vpop.f32.mrf.mxu0
  %v507 = vadd.f32 %v483, %v506
  %508 = vdwg.mxu0
  %509 = vmatpush.msra.mxu0 %v318
  %510 = vmatpush.msra.mxu0 %v315
  %511 = vmatpush.msra.mxu0 %v312
  %512 = vmatpush.msra.mxu0 %v309
  %513 = vmatpush.msra.mxu0 %v306
  %514 = vmatpush.msra.mxu0 %v303
  %515 = vmatpush.msra.mxu0 %v300
  %516 = vmatpush.msra.mxu0 %v297
  %517 = vmatpush.msra.mxu0 %v294
  %518 = vmatpush.msra.mxu0 %v291
  %519 = vmatpush.msra.mxu0 %v288
  %520 = vmatpush.msra.mxu0 %v285
  %521 = vmatpush.msra.mxu0 %v282
  %522 = vmatpush.msra.mxu0 %v279
  %523 = vmatpush.msra.mxu0 %v276
  %524 = vmatpush.msra.mxu0 %v273
  %525 = vmatmul.f32.gmra.mxu0 %v481
  %v526 = vpop.f32.mrf.mxu0
  %v527 = vadd.f32 %v484, %v526
  %528 = vdwg.mxu0
  %529 = vmatpush.msra.mxu0 %v319
  %530 = vmatpush.msra.mxu0 %v316
  %531 = vmatpush.msra.mxu0 %v313
  %532 = vmatpush.msra.mxu0 %v310
  %533 = vmatpush.msra.mxu0 %v307
  %534 = vmatpush.msra.mxu0 %v304
  %535 = vmatpush.msra.mxu0 %v301
  %536 = vmatpush.msra.mxu0 %v298
  %537 = vmatpush.msra.mxu0 %v295
  %538 = vmatpush.msra.mxu0 %v292
  %539 = vmatpush.msra.mxu0 %v289
  %540 = vmatpush.msra.mxu0 %v286
  %541 = vmatpush.msra.mxu0 %v283
  %542 = vmatpush.msra.mxu0 %v280
  %543 = vmatpush.msra.mxu0 %v277
  %544 = vmatpush.msra.mxu0 %v274
  %545 = vmatmul.f32.gmra.mxu0 %v481
  %v546 = vpop.f32.mrf.mxu0
  %v547 = vadd.f32 %v485, %v546
  %548 = vdwg.mxu0
  %549 = vmatpush.msra.mxu0 %v365
  %550 = vmatpush.msra.mxu0 %v362
  %551 = vmatpush.msra.mxu0 %v359
  %552 = vmatpush.msra.mxu0 %v356
  %553 = vmatpush.msra.mxu0 %v353
  %554 = vmatpush.msra.mxu0 %v350
  %555 = vmatpush.msra.mxu0 %v347
  %556 = vmatpush.msra.mxu0 %v344
  %557 = vmatpush.msra.mxu0 %v341
  %558 = vmatpush.msra.mxu0 %v338
  %559 = vmatpush.msra.mxu0 %v335
  %560 = vmatpush.msra.mxu0 %v332
  %561 = vmatpush.msra.mxu0 %v329
  %562 = vmatpush.msra.mxu0 %v326
  %563 = vmatpush.msra.mxu0 %v323
  %564 = vmatpush.msra.mxu0 %v320
  %565 = vmatmul.f32.gmra.mxu0 0.0
  %v566 = vpop.f32.mrf.mxu0
  %v567 = vadd.f32 0.0, %v566
  %568 = vdwg.mxu0
  %569 = vmatpush.msra.mxu0 %v366
  %570 = vmatpush.msra.mxu0 %v363
  %571 = vmatpush.msra.mxu0 %v360
  %572 = vmatpush.msra.mxu0 %v357
  %573 = vmatpush.msra.mxu0 %v354
  %574 = vmatpush.msra.mxu0 %v351
  %575 = vmatpush.msra.mxu0 %v348
  %576 = vmatpush.msra.mxu0 %v345
  %577 = vmatpush.msra.mxu0 %v342
  %578 = vmatpush.msra.mxu0 %v339
  %579 = vmatpush.msra.mxu0 %v336
  %580 = vmatpush.msra.mxu0 %v333
  %581 = vmatpush.msra.mxu0 %v330
  %582 = vmatpush.msra.mxu0 %v327
  %583 = vmatpush.msra.mxu0 %v324
  %584 = vmatpush.msra.mxu0 %v321
  %585 = vmatmul.f32.gmra.mxu0 0.0
  %v586 = vpop.f32.mrf.mxu0
  %v587 = vadd.f32 0.0, %v586
  %588 = vdwg.mxu0
  %589 = vmatpush.msra.mxu0 %v367
  %590 = vmatpush.msra.mxu0 %v364
  %591 = vmatpush.msra.mxu0 %v361
  %592 = vmatpush.msra.mxu0 %v358
  %593 = vmatpush.msra.mxu0 %v355
  %594 = vmatpush.msra.mxu0 %v352
  %595 = vmatpush.msra.mxu0 %v349
  %596 = vmatpush.msra.mxu0 %v346
  %597 = vmatpush.msra.mxu0 %v343
  %598 = vmatpush.msra.mxu0 %v340
  %599 = vmatpush.msra.mxu0 %v337
  %600 = vmatpush.msra.mxu0 %v334
  %601 = vmatpush.msra.mxu0 %v331
  %602 = vmatpush.msra.mxu0 %v328
  %603 = vmatpush.msra.mxu0 %v325
  %604 = vmatpush.msra.mxu0 %v322
  %605 = vmatmul.f32.gmra.mxu0 0.0
  %v606 = vpop.f32.mrf.mxu0
  %v607 = vadd.f32 0.0, %v606
  %608 = vdwg.mxu0
  %v609 = vadd.f32 %v507, %v567
  %v610 = vxor.u32 %v609, 2147483648
  %v611 = vmul.f32 %v610, 1.442695
  %v612 = vpow.pop %v611
  %v613 = vadd.f32 %v612, 1.0
  %v614 = vrcp.pop %v613
  %v615 = vmul.f32 %v613, %v614
  %v616 = vsub.f32 1.0, %v615
  %v617 = vmul.f32 %v614, %v616
  %v618 = vadd.f32 %v614, %v617
  %vm619 = vweird.f32 %v613
  %vm620 = vweird.f32 %v614
  %vm621 = vmor %vm619, %vm620
  %v622 = vsel %vm621, %v614, %v618
  %v623 = vand.u32 2147483647, %v613
  %vm624 = vcmp.eq.f32.partialorder %v623, 8.507059e+37
  %v625 = vand.u32 %v613, 2147483648
  %v626 = vor.u32 1.1754944e-38, %v625
  %v627 = vsel %vm624, %v626, %v622
  %v628 = vmul.f32 1.0, %v627
  %v629 = vadd.f32 %v527, %v587
  %v630 = vxor.u32 %v629, 2147483648
  %v631 = vmul.f32 %v630, 1.442695
  %v632 = vpow.pop %v631
  %v633 = vadd.f32 %v632, 1.0
  %v634 = vrcp.pop %v633
  %v635 = vmul.f32 %v633, %v634
  %v636 = vsub.f32 1.0, %v635
  %v637 = vmul.f32 %v634, %v636
  %v638 = vadd.f32 %v634, %v637
  %vm639 = vweird.f32 %v633
  %vm640 = vweird.f32 %v634
  %vm641 = vmor %vm639, %vm640
  %v642 = vsel %vm641, %v634, %v638
  %v643 = vand.u32 2147483647, %v633
  %vm644 = vcmp.eq.f32.partialorder %v643, 8.507059e+37
  %v645 = vand.u32 %v633, 2147483648
  %v646 = vor.u32 1.1754944e-38, %v645
  %v647 = vsel %vm644, %v646, %v642
  %v648 = vmul.f32 1.0, %v647
  %v650 = vperm.slane %v370, 0
  %v652 = vadd.f32 %v607, %v650
  %v653 = vmul.f32 %v628, %v652
  %v654 = vadd.f32 %v547, %v653
  %v655 = vtanh.pop %v654
  %v656 = vsub.f32 1.0, %v648
  %v657 = vmul.f32 %v656, %v655
  %v658 = vmul.f32 %v648, 0.0
  %v659 = vadd.f32 %v657, %v658
  %660 = vmatpush.msra.mxu0 %v269
  %661 = vmatpush.msra.mxu0 %v266
  %662 = vmatpush.msra.mxu0 %v263
  %663 = vmatpush.msra.mxu0 %v260
  %664 = vmatpush.msra.mxu0 %v257
  %665 = vmatpush.msra.mxu0 %v254
  %666 = vmatpush.msra.mxu0 %v251
  %667 = vmatpush.msra.mxu0 %v248
  %668 = vmatpush.msra.mxu0 %v245
  %669 = vmatpush.msra.mxu0 %v242
  %670 = vmatpush.msra.mxu0 %v239
  %671 = vmatpush.msra.mxu0 %v236
  %672 = vmatpush.msra.mxu0 %v233
  %673 = vmatpush.msra.mxu0 %v230
  %674 = vmatpush.msra.mxu0 %v227
  %675 = vmatpush.msra.mxu0 %v224
  %676 = vmatmul.f32.gmra.mxu0 %v481
  %v677 = vpop.f32.mrf.mxu0
  %v678 = vadd.f32 0.0, %v677
  %679 = vdwg.mxu0
  %680 = vmatpush.msra.mxu0 %v270
  %681 = vmatpush.msra.mxu0 %v267
  %682 = vmatpush.msra.mxu0 %v264
  %683 = vmatpush.msra.mxu0 %v261
  %684 = vmatpush.msra.mxu0 %v258
  %685 = vmatpush.msra.mxu0 %v255
  %686 = vmatpush.msra.mxu0 %v252
  %687 = vmatpush.msra.mxu0 %v249
  %688 = vmatpush.msra.mxu0 %v246
  %689 = vmatpush.msra.mxu0 %v243
  %690 = vmatpush.msra.mxu0 %v240
  %691 = vmatpush.msra.mxu0 %v237
  %692 = vmatpush.msra.mxu0 %v234
  %693 = vmatpush.msra.mxu0 %v231
  %694 = vmatpush.msra.mxu0 %v228
  %695 = vmatpush.msra.mxu0 %v225
  %696 = vmatmul.f32.gmra.mxu0 %v481
  %v697 = vpop.f32.mrf.mxu0
  %v698 = vadd.f32 0.0, %v697
  %699 = vdwg.mxu0
  %700 = vmatpush.msra.mxu0 %v271
  %701 = vmatpush.msra.mxu0 %v268
  %702 = vmatpush.msra.mxu0 %v265
  %703 = vmatpush.msra.mxu0 %v262
  %704 = vmatpush.msra.mxu0 %v259
  %705 = vmatpush.msra.mxu0 %v256
  %706 = vmatpush.msra.mxu0 %v253
  %707 = vmatpush.msra.mxu0 %v250
  %708 = vmatpush.msra.mxu0 %v247
  %709 = vmatpush.msra.mxu0 %v244
  %710 = vmatpush.msra.mxu0 %v241
  %711 = vmatpush.msra.mxu0 %v238
  %712 = vmatpush.msra.mxu0 %v235
  %713 = vmatpush.msra.mxu0 %v232
  %714 = vmatpush.msra.mxu0 %v229
  %715 = vmatpush.msra.mxu0 %v226
  %716 = vmatmul.f32.gmra.mxu0 %v481
  %v717 = vpop.f32.mrf.mxu0
  %v718 = vadd.f32 0.0, %v717
  %719 = vdwg.mxu0
  %v720 = vadd.f32 %v122, %v678
  %v721 = vxor.u32 %v720, 2147483648
  %v722 = vmul.f32 %v721, 1.442695
  %v723 = vpow.pop %v722
  %v724 = vadd.f32 %v723, 1.0
  %v725 = vrcp.pop %v724
  %v726 = vmul.f32 %v724, %v725
  %v727 = vsub.f32 1.0, %v726
  %v728 = vmul.f32 %v725, %v727
  %v729 = vadd.f32 %v725, %v728
  %vm730 = vweird.f32 %v724
  %vm731 = vweird.f32 %v725
  %vm732 = vmor %vm730, %vm731
  %v733 = vsel %vm732, %v725, %v729
  %v734 = vand.u32 2147483647, %v724
  %vm735 = vcmp.eq.f32.partialorder %v734, 8.507059e+37
  %v736 = vand.u32 %v724, 2147483648
  %v737 = vor.u32 1.1754944e-38, %v736
  %v738 = vsel %vm735, %v737, %v733
  %v739 = vmul.f32 1.0, %v738
  %v740 = vadd.f32 %v163, %v698
  %v741 = vxor.u32 %v740, 2147483648
  %v742 = vmul.f32 %v741, 1.442695
  %v743 = vpow.pop %v742
  %v744 = vadd.f32 %v743, 1.0
  %v745 = vrcp.pop %v744
  %v746 = vmul.f32 %v744, %v745
  %v747 = vsub.f32 1.0, %v746
  %v748 = vmul.f32 %v745, %v747
  %v749 = vadd.f32 %v745, %v748
  %vm750 = vweird.f32 %v744
  %vm751 = vweird.f32 %v745
  %vm752 = vmor %vm750, %vm751
  %v753 = vsel %vm752, %v745, %v749
  %v754 = vand.u32 2147483647, %v744
  %vm755 = vcmp.eq.f32.partialorder %v754, 8.507059e+37
  %v756 = vand.u32 %v744, 2147483648
  %v757 = vor.u32 1.1754944e-38, %v756
  %v758 = vsel %vm755, %v757, %v753
  %v759 = vmul.f32 1.0, %v758
  %v760 = vadd.f32 %v718, %v472
  %v761 = vmul.f32 %v739, %v760
  %v762 = vadd.f32 %v204, %v761
  %v763 = vtanh.pop %v762
  %v764 = vsub.f32 1.0, %v759
  %v765 = vmul.f32 %v764, %v763
  %v766 = vmul.f32 %v759, %v481
  %v767 = vadd.f32 %v765, %v766
  %768 = vmatpush.msra.mxu0 %v317
  %769 = vmatpush.msra.mxu0 %v314
  %770 = vmatpush.msra.mxu0 %v311
  %771 = vmatpush.msra.mxu0 %v308
  %772 = vmatpush.msra.mxu0 %v305
  %773 = vmatpush.msra.mxu0 %v302
  %774 = vmatpush.msra.mxu0 %v299
  %775 = vmatpush.msra.mxu0 %v296
  %776 = vmatpush.msra.mxu0 %v293
  %777 = vmatpush.msra.mxu0 %v290
  %778 = vmatpush.msra.mxu0 %v287
  %779 = vmatpush.msra.mxu0 %v284
  %780 = vmatpush.msra.mxu0 %v281
  %781 = vmatpush.msra.mxu0 %v278
  %782 = vmatpush.msra.mxu0 %v275
  %783 = vmatpush.msra.mxu0 %v272
  %784 = vmatmul.f32.gmra.mxu0 %v767
  %v785 = vpop.f32.mrf.mxu0
  %v786 = vadd.f32 %v483, %v785
  %787 = vdwg.mxu0
  %788 = vmatpush.msra.mxu0 %v318
  %789 = vmatpush.msra.mxu0 %v315
  %790 = vmatpush.msra.mxu0 %v312
  %791 = vmatpush.msra.mxu0 %v309
  %792 = vmatpush.msra.mxu0 %v306
  %793 = vmatpush.msra.mxu0 %v303
  %794 = vmatpush.msra.mxu0 %v300
  %795 = vmatpush.msra.mxu0 %v297
  %796 = vmatpush.msra.mxu0 %v294
  %797 = vmatpush.msra.mxu0 %v291
  %798 = vmatpush.msra.mxu0 %v288
  %799 = vmatpush.msra.mxu0 %v285
  %800 = vmatpush.msra.mxu0 %v282
  %801 = vmatpush.msra.mxu0 %v279
  %802 = vmatpush.msra.mxu0 %v276
  %803 = vmatpush.msra.mxu0 %v273
  %804 = vmatmul.f32.gmra.mxu0 %v767
  %v805 = vpop.f32.mrf.mxu0
  %v806 = vadd.f32 %v484, %v805
  %807 = vdwg.mxu0
  %808 = vmatpush.msra.mxu0 %v319
  %809 = vmatpush.msra.mxu0 %v316
  %810 = vmatpush.msra.mxu0 %v313
  %811 = vmatpush.msra.mxu0 %v310
  %812 = vmatpush.msra.mxu0 %v307
  %813 = vmatpush.msra.mxu0 %v304
  %814 = vmatpush.msra.mxu0 %v301
  %815 = vmatpush.msra.mxu0 %v298
  %816 = vmatpush.msra.mxu0 %v295
  %817 = vmatpush.msra.mxu0 %v292
  %818 = vmatpush.msra.mxu0 %v289
  %819 = vmatpush.msra.mxu0 %v286
  %820 = vmatpush.msra.mxu0 %v283
  %821 = vmatpush.msra.mxu0 %v280
  %822 = vmatpush.msra.mxu0 %v277
  %823 = vmatpush.msra.mxu0 %v274
  %824 = vmatmul.f32.gmra.mxu0 %v767
  %v825 = vpop.f32.mrf.mxu0
  %v826 = vadd.f32 %v485, %v825
  %827 = vdwg.mxu0
  %828 = vmatpush.msra.mxu0 %v365
  %829 = vmatpush.msra.mxu0 %v362
  %830 = vmatpush.msra.mxu0 %v359
  %831 = vmatpush.msra.mxu0 %v356
  %832 = vmatpush.msra.mxu0 %v353
  %833 = vmatpush.msra.mxu0 %v350
  %834 = vmatpush.msra.mxu0 %v347
  %835 = vmatpush.msra.mxu0 %v344
  %836 = vmatpush.msra.mxu0 %v341
  %837 = vmatpush.msra.mxu0 %v338
  %838 = vmatpush.msra.mxu0 %v335
  %839 = vmatpush.msra.mxu0 %v332
  %840 = vmatpush.msra.mxu0 %v329
  %841 = vmatpush.msra.mxu0 %v326
  %842 = vmatpush.msra.mxu0 %v323
  %843 = vmatpush.msra.mxu0 %v320
  %844 = vmatmul.f32.gmra.mxu0 %v659
  %v845 = vpop.f32.mrf.mxu0
  %v846 = vadd.f32 0.0, %v845
  %847 = vdwg.mxu0
  %848 = vmatpush.msra.mxu0 %v366
  %849 = vmatpush.msra.mxu0 %v363
  %850 = vmatpush.msra.mxu0 %v360
  %851 = vmatpush.msra.mxu0 %v357
  %852 = vmatpush.msra.mxu0 %v354
  %853 = vmatpush.msra.mxu0 %v351
  %854 = vmatpush.msra.mxu0 %v348
  %855 = vmatpush.msra.mxu0 %v345
  %856 = vmatpush.msra.mxu0 %v342
  %857 = vmatpush.msra.mxu0 %v339
  %858 = vmatpush.msra.mxu0 %v336
  %859 = vmatpush.msra.mxu0 %v333
  %860 = vmatpush.msra.mxu0 %v330
  %861 = vmatpush.msra.mxu0 %v327
  %862 = vmatpush.msra.mxu0 %v324
  %863 = vmatpush.msra.mxu0 %v321
  %864 = vmatmul.f32.gmra.mxu0 %v659
  %v865 = vpop.f32.mrf.mxu0
  %v866 = vadd.f32 0.0, %v865
  %867 = vdwg.mxu0
  %868 = vmatpush.msra.mxu0 %v367
  %869 = vmatpush.msra.mxu0 %v364
  %870 = vmatpush.msra.mxu0 %v361
  %871 = vmatpush.msra.mxu0 %v358
  %872 = vmatpush.msra.mxu0 %v355
  %873 = vmatpush.msra.mxu0 %v352
  %874 = vmatpush.msra.mxu0 %v349
  %875 = vmatpush.msra.mxu0 %v346
  %876 = vmatpush.msra.mxu0 %v343
  %877 = vmatpush.msra.mxu0 %v340
  %878 = vmatpush.msra.mxu0 %v337
  %879 = vmatpush.msra.mxu0 %v334
  %880 = vmatpush.msra.mxu0 %v331
  %881 = vmatpush.msra.mxu0 %v328
  %882 = vmatpush.msra.mxu0 %v325
  %883 = vmatpush.msra.mxu0 %v322
  %884 = vmatmul.f32.gmra.mxu0 %v659
  %v885 = vpop.f32.mrf.mxu0
  %v886 = vadd.f32 0.0, %v885
  %887 = vdwg.mxu0
  %v888 = vadd.f32 %v786, %v846
  %v889 = vxor.u32 %v888, 2147483648
  %v890 = vmul.f32 %v889, 1.442695
  %v891 = vpow.pop %v890
  %v892 = vadd.f32 %v891, 1.0
  %v893 = vrcp.pop %v892
  %v894 = vmul.f32 %v892, %v893
  %v895 = vsub.f32 1.0, %v894
  %v896 = vmul.f32 %v893, %v895
  %v897 = vadd.f32 %v893, %v896
  %vm898 = vweird.f32 %v892
  %vm899 = vweird.f32 %v893
  %vm900 = vmor %vm898, %vm899
  %v901 = vsel %vm900, %v893, %v897
  %v902 = vand.u32 2147483647, %v892
  %vm903 = vcmp.eq.f32.partialorder %v902, 8.507059e+37
  %v904 = vand.u32 %v892, 2147483648
  %v905 = vor.u32 1.1754944e-38, %v904
  %v906 = vsel %vm903, %v905, %v901
  %v907 = vmul.f32 1.0, %v906
  %v908 = vadd.f32 %v806, %v866
  %v909 = vxor.u32 %v908, 2147483648
  %v910 = vmul.f32 %v909, 1.442695
  %v911 = vpow.pop %v910
  %v912 = vadd.f32 %v911, 1.0
  %v913 = vrcp.pop %v912
  %v914 = vmul.f32 %v912, %v913
  %v915 = vsub.f32 1.0, %v914
  %v916 = vmul.f32 %v913, %v915
  %v917 = vadd.f32 %v913, %v916
  %vm918 = vweird.f32 %v912
  %vm919 = vweird.f32 %v913
  %vm920 = vmor %vm918, %vm919
  %v921 = vsel %vm920, %v913, %v917
  %v922 = vand.u32 2147483647, %v912
  %vm923 = vcmp.eq.f32.partialorder %v922, 8.507059e+37
  %v924 = vand.u32 %v912, 2147483648
  %v925 = vor.u32 1.1754944e-38, %v924
  %v926 = vsel %vm923, %v925, %v921
  %v927 = vmul.f32 1.0, %v926
  %v928 = vadd.f32 %v886, %v650
  %v929 = vmul.f32 %v907, %v928
  %v930 = vadd.f32 %v826, %v929
  %v931 = vtanh.pop %v930
  %v932 = vsub.f32 1.0, %v927
  %v933 = vmul.f32 %v932, %v931
  %v934 = vmul.f32 %v927, %v659
  %v935 = vadd.f32 %v933, %v934
  %936 = vmatpush.msra.mxu0 %v269
  %937 = vmatpush.msra.mxu0 %v266
  %938 = vmatpush.msra.mxu0 %v263
  %939 = vmatpush.msra.mxu0 %v260
  %940 = vmatpush.msra.mxu0 %v257
  %941 = vmatpush.msra.mxu0 %v254
  %942 = vmatpush.msra.mxu0 %v251
  %943 = vmatpush.msra.mxu0 %v248
  %944 = vmatpush.msra.mxu0 %v245
  %945 = vmatpush.msra.mxu0 %v242
  %946 = vmatpush.msra.mxu0 %v239
  %947 = vmatpush.msra.mxu0 %v236
  %948 = vmatpush.msra.mxu0 %v233
  %949 = vmatpush.msra.mxu0 %v230
  %950 = vmatpush.msra.mxu0 %v227
  %951 = vmatpush.msra.mxu0 %v224
  %952 = vmatmul.f32.gmra.mxu0 %v767
  %v953 = vpop.f32.mrf.mxu0
  %v954 = vadd.f32 0.0, %v953
  %955 = vdwg.mxu0
  %956 = vmatpush.msra.mxu0 %v270
  %957 = vmatpush.msra.mxu0 %v267
  %958 = vmatpush.msra.mxu0 %v264
  %959 = vmatpush.msra.mxu0 %v261
  %960 = vmatpush.msra.mxu0 %v258
  %961 = vmatpush.msra.mxu0 %v255
  %962 = vmatpush.msra.mxu0 %v252
  %963 = vmatpush.msra.mxu0 %v249
  %964 = vmatpush.msra.mxu0 %v246
  %965 = vmatpush.msra.mxu0 %v243
  %966 = vmatpush.msra.mxu0 %v240
  %967 = vmatpush.msra.mxu0 %v237
  %968 = vmatpush.msra.mxu0 %v234
  %969 = vmatpush.msra.mxu0 %v231
  %970 = vmatpush.msra.mxu0 %v228
  %971 = vmatpush.msra.mxu0 %v225
  %972 = vmatmul.f32.gmra.mxu0 %v767
  %v973 = vpop.f32.mrf.mxu0
  %v974 = vadd.f32 0.0, %v973
  %975 = vdwg.mxu0
  %976 = vmatpush.msra.mxu0 %v271
  %977 = vmatpush.msra.mxu0 %v268
  %978 = vmatpush.msra.mxu0 %v265
  %979 = vmatpush.msra.mxu0 %v262
  %980 = vmatpush.msra.mxu0 %v259
  %981 = vmatpush.msra.mxu0 %v256
  %982 = vmatpush.msra.mxu0 %v253
  %983 = vmatpush.msra.mxu0 %v250
  %984 = vmatpush.msra.mxu0 %v247
  %985 = vmatpush.msra.mxu0 %v244
  %986 = vmatpush.msra.mxu0 %v241
  %987 = vmatpush.msra.mxu0 %v238
  %988 = vmatpush.msra.mxu0 %v235
  %989 = vmatpush.msra.mxu0 %v232
  %990 = vmatpush.msra.mxu0 %v229
  %991 = vmatpush.msra.mxu0 %v226
  %992 = vmatmul.f32.gmra.mxu0 %v767
  %v993 = vpop.f32.mrf.mxu0
  %v994 = vadd.f32 0.0, %v993
  %995 = vdwg.mxu0
  %v996 = vadd.f32 %v125, %v954
  %v997 = vxor.u32 %v996, 2147483648
  %v998 = vmul.f32 %v997, 1.442695
  %v999 = vpow.pop %v998
  %v1000 = vadd.f32 %v999, 1.0
  %v1001 = vrcp.pop %v1000
  %v1002 = vmul.f32 %v1000, %v1001
  %v1003 = vsub.f32 1.0, %v1002
  %v1004 = vmul.f32 %v1001, %v1003
  %v1005 = vadd.f32 %v1001, %v1004
  %vm1006 = vweird.f32 %v1000
  %vm1007 = vweird.f32 %v1001
  %vm1008 = vmor %vm1006, %vm1007
  %v1009 = vsel %vm1008, %v1001, %v1005
  %v1010 = vand.u32 2147483647, %v1000
  %vm1011 = vcmp.eq.f32.partialorder %v1010, 8.507059e+37
  %v1012 = vand.u32 %v1000, 2147483648
  %v1013 = vor.u32 1.1754944e-38, %v1012
  %v1014 = vsel %vm1011, %v1013, %v1009
  %v1015 = vmul.f32 1.0, %v1014
  %v1016 = vadd.f32 %v166, %v974
  %v1017 = vxor.u32 %v1016, 2147483648
  %v1018 = vmul.f32 %v1017, 1.442695
  %v1019 = vpow.pop %v1018
  %v1020 = vadd.f32 %v1019, 1.0
  %v1021 = vrcp.pop %v1020
  %v1022 = vmul.f32 %v1020, %v1021
  %v1023 = vsub.f32 1.0, %v1022
  %v1024 = vmul.f32 %v1021, %v1023
  %v1025 = vadd.f32 %v1021, %v1024
  %vm1026 = vweird.f32 %v1020
  %vm1027 = vweird.f32 %v1021
  %vm1028 = vmor %vm1026, %vm1027
  %v1029 = vsel %vm1028, %v1021, %v1025
  %v1030 = vand.u32 2147483647, %v1020
  %vm1031 = vcmp.eq.f32.partialorder %v1030, 8.507059e+37
  %v1032 = vand.u32 %v1020, 2147483648
  %v1033 = vor.u32 1.1754944e-38, %v1032
  %v1034 = vsel %vm1031, %v1033, %v1029
  %v1035 = vmul.f32 1.0, %v1034
  %v1036 = vadd.f32 %v994, %v472
  %v1037 = vmul.f32 %v1015, %v1036
  %v1038 = vadd.f32 %v207, %v1037
  %v1039 = vtanh.pop %v1038
  %v1040 = vsub.f32 1.0, %v1035
  %v1041 = vmul.f32 %v1040, %v1039
  %v1042 = vmul.f32 %v1035, %v767
  %v1043 = vadd.f32 %v1041, %v1042
  %1044 = vmatpush.msra.mxu0 %v317
  %1045 = vmatpush.msra.mxu0 %v314
  %1046 = vmatpush.msra.mxu0 %v311
  %1047 = vmatpush.msra.mxu0 %v308
  %1048 = vmatpush.msra.mxu0 %v305
  %1049 = vmatpush.msra.mxu0 %v302
  %1050 = vmatpush.msra.mxu0 %v299
  %1051 = vmatpush.msra.mxu0 %v296
  %1052 = vmatpush.msra.mxu0 %v293
  %1053 = vmatpush.msra.mxu0 %v290
  %1054 = vmatpush.msra.mxu0 %v287
  %1055 = vmatpush.msra.mxu0 %v284
  %1056 = vmatpush.msra.mxu0 %v281
  %1057 = vmatpush.msra.mxu0 %v278
  %1058 = vmatpush.msra.mxu0 %v275
  %1059 = vmatpush.msra.mxu0 %v272
  %1060 = vmatmul.f32.gmra.mxu0 %v1043
  %v1061 = vpop.f32.mrf.mxu0
  %v1062 = vadd.f32 %v483, %v1061
  %1063 = vdwg.mxu0
  %1064 = vmatpush.msra.mxu0 %v318
  %1065 = vmatpush.msra.mxu0 %v315
  %1066 = vmatpush.msra.mxu0 %v312
  %1067 = vmatpush.msra.mxu0 %v309
  %1068 = vmatpush.msra.mxu0 %v306
  %1069 = vmatpush.msra.mxu0 %v303
  %1070 = vmatpush.msra.mxu0 %v300
  %1071 = vmatpush.msra.mxu0 %v297
  %1072 = vmatpush.msra.mxu0 %v294
  %1073 = vmatpush.msra.mxu0 %v291
  %1074 = vmatpush.msra.mxu0 %v288
  %1075 = vmatpush.msra.mxu0 %v285
  %1076 = vmatpush.msra.mxu0 %v282
  %1077 = vmatpush.msra.mxu0 %v279
  %1078 = vmatpush.msra.mxu0 %v276
  %1079 = vmatpush.msra.mxu0 %v273
  %1080 = vmatmul.f32.gmra.mxu0 %v1043
  %v1081 = vpop.f32.mrf.mxu0
  %v1082 = vadd.f32 %v484, %v1081
  %1083 = vdwg.mxu0
  %1084 = vmatpush.msra.mxu0 %v319
  %1085 = vmatpush.msra.mxu0 %v316
  %1086 = vmatpush.msra.mxu0 %v313
  %1087 = vmatpush.msra.mxu0 %v310
  %1088 = vmatpush.msra.mxu0 %v307
  %1089 = vmatpush.msra.mxu0 %v304
  %1090 = vmatpush.msra.mxu0 %v301
  %1091 = vmatpush.msra.mxu0 %v298
  %1092 = vmatpush.msra.mxu0 %v295
  %1093 = vmatpush.msra.mxu0 %v292
  %1094 = vmatpush.msra.mxu0 %v289
  %1095 = vmatpush.msra.mxu0 %v286
  %1096 = vmatpush.msra.mxu0 %v283
  %1097 = vmatpush.msra.mxu0 %v280
  %1098 = vmatpush.msra.mxu0 %v277
  %1099 = vmatpush.msra.mxu0 %v274
  %1100 = vmatmul.f32.gmra.mxu0 %v1043
  %v1101 = vpop.f32.mrf.mxu0
  %v1102 = vadd.f32 %v485, %v1101
  %1103 = vdwg.mxu0
  %1104 = vmatpush.msra.mxu0 %v365
  %1105 = vmatpush.msra.mxu0 %v362
  %1106 = vmatpush.msra.mxu0 %v359
  %1107 = vmatpush.msra.mxu0 %v356
  %1108 = vmatpush.msra.mxu0 %v353
  %1109 = vmatpush.msra.mxu0 %v350
  %1110 = vmatpush.msra.mxu0 %v347
  %1111 = vmatpush.msra.mxu0 %v344
  %1112 = vmatpush.msra.mxu0 %v341
  %1113 = vmatpush.msra.mxu0 %v338
  %1114 = vmatpush.msra.mxu0 %v335
  %1115 = vmatpush.msra.mxu0 %v332
  %1116 = vmatpush.msra.mxu0 %v329
  %1117 = vmatpush.msra.mxu0 %v326
  %1118 = vmatpush.msra.mxu0 %v323
  %1119 = vmatpush.msra.mxu0 %v320
  %1120 = vmatmul.f32.gmra.mxu0 %v935
  %v1121 = vpop.f32.mrf.mxu0
  %v1122 = vadd.f32 0.0, %v1121
  %1123 = vdwg.mxu0
  %1124 = vmatpush.msra.mxu0 %v366
  %1125 = vmatpush.msra.mxu0 %v363
  %1126 = vmatpush.msra.mxu0 %v360
  %1127 = vmatpush.msra.mxu0 %v357
  %1128 = vmatpush.msra.mxu0 %v354
  %1129 = vmatpush.msra.mxu0 %v351
  %1130 = vmatpush.msra.mxu0 %v348
  %1131 = vmatpush.msra.mxu0 %v345
  %1132 = vmatpush.msra.mxu0 %v342
  %1133 = vmatpush.msra.mxu0 %v339
  %1134 = vmatpush.msra.mxu0 %v336
  %1135 = vmatpush.msra.mxu0 %v333
  %1136 = vmatpush.msra.mxu0 %v330
  %1137 = vmatpush.msra.mxu0 %v327
  %1138 = vmatpush.msra.mxu0 %v324
  %1139 = vmatpush.msra.mxu0 %v321
  %1140 = vmatmul.f32.gmra.mxu0 %v935
  %v1141 = vpop.f32.mrf.mxu0
  %v1142 = vadd.f32 0.0, %v1141
  %1143 = vdwg.mxu0
  %1144 = vmatpush.msra.mxu0 %v367
  %1145 = vmatpush.msra.mxu0 %v364
  %1146 = vmatpush.msra.mxu0 %v361
  %1147 = vmatpush.msra.mxu0 %v358
  %1148 = vmatpush.msra.mxu0 %v355
  %1149 = vmatpush.msra.mxu0 %v352
  %1150 = vmatpush.msra.mxu0 %v349
  %1151 = vmatpush.msra.mxu0 %v346
  %1152 = vmatpush.msra.mxu0 %v343
  %1153 = vmatpush.msra.mxu0 %v340
  %1154 = vmatpush.msra.mxu0 %v337
  %1155 = vmatpush.msra.mxu0 %v334
  %1156 = vmatpush.msra.mxu0 %v331
  %1157 = vmatpush.msra.mxu0 %v328
  %1158 = vmatpush.msra.mxu0 %v325
  %1159 = vmatpush.msra.mxu0 %v322
  %1160 = vmatmul.f32.gmra.mxu0 %v935
  %v1161 = vpop.f32.mrf.mxu0
  %v1162 = vadd.f32 0.0, %v1161
  %1163 = vdwg.mxu0
  %v1164 = vadd.f32 %v1062, %v1122
  %v1165 = vxor.u32 %v1164, 2147483648
  %v1166 = vmul.f32 %v1165, 1.442695
  %v1167 = vpow.pop %v1166
  %v1168 = vadd.f32 %v1167, 1.0
  %v1169 = vrcp.pop %v1168
  %v1170 = vmul.f32 %v1168, %v1169
  %v1171 = vsub.f32 1.0, %v1170
  %v1172 = vmul.f32 %v1169, %v1171
  %v1173 = vadd.f32 %v1169, %v1172
  %vm1174 = vweird.f32 %v1168
  %vm1175 = vweird.f32 %v1169
  %vm1176 = vmor %vm1174, %vm1175
  %v1177 = vsel %vm1176, %v1169, %v1173
  %v1178 = vand.u32 2147483647, %v1168
  %vm1179 = vcmp.eq.f32.partialorder %v1178, 8.507059e+37
  %v1180 = vand.u32 %v1168, 2147483648
  %v1181 = vor.u32 1.1754944e-38, %v1180
  %v1182 = vsel %vm1179, %v1181, %v1177
  %v1183 = vmul.f32 1.0, %v1182
  %v1184 = vadd.f32 %v1082, %v1142
  %v1185 = vxor.u32 %v1184, 2147483648
  %v1186 = vmul.f32 %v1185, 1.442695
  %v1187 = vpow.pop %v1186
  %v1188 = vadd.f32 %v1187, 1.0
  %v1189 = vrcp.pop %v1188
  %v1190 = vmul.f32 %v1188, %v1189
  %v1191 = vsub.f32 1.0, %v1190
  %v1192 = vmul.f32 %v1189, %v1191
  %v1193 = vadd.f32 %v1189, %v1192
  %vm1194 = vweird.f32 %v1188
  %vm1195 = vweird.f32 %v1189
  %vm1196 = vmor %vm1194, %vm1195
  %v1197 = vsel %vm1196, %v1189, %v1193
  %v1198 = vand.u32 2147483647, %v1188
  %vm1199 = vcmp.eq.f32.partialorder %v1198, 8.507059e+37
  %v1200 = vand.u32 %v1188, 2147483648
  %v1201 = vor.u32 1.1754944e-38, %v1200
  %v1202 = vsel %vm1199, %v1201, %v1197
  %v1203 = vmul.f32 1.0, %v1202
  %v1204 = vadd.f32 %v1162, %v650
  %v1205 = vmul.f32 %v1183, %v1204
  %v1206 = vadd.f32 %v1102, %v1205
  %v1207 = vtanh.pop %v1206
  %v1208 = vsub.f32 1.0, %v1203
  %v1209 = vmul.f32 %v1208, %v1207
  %v1210 = vmul.f32 %v1203, %v935
  %v1211 = vadd.f32 %v1209, %v1210
  %1212 = vmatpush.msra.mxu0 %v269
  %1213 = vmatpush.msra.mxu0 %v266
  %1214 = vmatpush.msra.mxu0 %v263
  %1215 = vmatpush.msra.mxu0 %v260
  %1216 = vmatpush.msra.mxu0 %v257
  %1217 = vmatpush.msra.mxu0 %v254
  %1218 = vmatpush.msra.mxu0 %v251
  %1219 = vmatpush.msra.mxu0 %v248
  %1220 = vmatpush.msra.mxu0 %v245
  %1221 = vmatpush.msra.mxu0 %v242
  %1222 = vmatpush.msra.mxu0 %v239
  %1223 = vmatpush.msra.mxu0 %v236
  %1224 = vmatpush.msra.mxu0 %v233
  %1225 = vmatpush.msra.mxu0 %v230
  %1226 = vmatpush.msra.mxu0 %v227
  %1227 = vmatpush.msra.mxu0 %v224
  %1228 = vmatmul.f32.gmra.mxu0 %v1043
  %v1229 = vpop.f32.mrf.mxu0
  %v1230 = vadd.f32 0.0, %v1229
  %1231 = vdwg.mxu0
  %1232 = vmatpush.msra.mxu0 %v270
  %1233 = vmatpush.msra.mxu0 %v267
  %1234 = vmatpush.msra.mxu0 %v264
  %1235 = vmatpush.msra.mxu0 %v261
  %1236 = vmatpush.msra.mxu0 %v258
  %1237 = vmatpush.msra.mxu0 %v255
  %1238 = vmatpush.msra.mxu0 %v252
  %1239 = vmatpush.msra.mxu0 %v249
  %1240 = vmatpush.msra.mxu0 %v246
  %1241 = vmatpush.msra.mxu0 %v243
  %1242 = vmatpush.msra.mxu0 %v240
  %1243 = vmatpush.msra.mxu0 %v237
  %1244 = vmatpush.msra.mxu0 %v234
  %1245 = vmatpush.msra.mxu0 %v231
  %1246 = vmatpush.msra.mxu0 %v228
  %1247 = vmatpush.msra.mxu0 %v225
  %1248 = vmatmul.f32.gmra.mxu0 %v1043
  %v1249 = vpop.f32.mrf.mxu0
  %v1250 = vadd.f32 0.0, %v1249
  %1251 = vdwg.mxu0
  %1252 = vmatpush.msra.mxu0 %v271
  %1253 = vmatpush.msra.mxu0 %v268
  %1254 = vmatpush.msra.mxu0 %v265
  %1255 = vmatpush.msra.mxu0 %v262
  %1256 = vmatpush.msra.mxu0 %v259
  %1257 = vmatpush.msra.mxu0 %v256
  %1258 = vmatpush.msra.mxu0 %v253
  %1259 = vmatpush.msra.mxu0 %v250
  %1260 = vmatpush.msra.mxu0 %v247
  %1261 = vmatpush.msra.mxu0 %v244
  %1262 = vmatpush.msra.mxu0 %v241
  %1263 = vmatpush.msra.mxu0 %v238
  %1264 = vmatpush.msra.mxu0 %v235
  %1265 = vmatpush.msra.mxu0 %v232
  %1266 = vmatpush.msra.mxu0 %v229
  %1267 = vmatpush.msra.mxu0 %v226
  %1268 = vmatmul.f32.gmra.mxu0 %v1043
  %v1269 = vpop.f32.mrf.mxu0
  %v1270 = vadd.f32 0.0, %v1269
  %1271 = vdwg.mxu0
  %v1272 = vadd.f32 %v128, %v1230
  %v1273 = vxor.u32 %v1272, 2147483648
  %v1274 = vmul.f32 %v1273, 1.442695
  %v1275 = vpow.pop %v1274
  %v1276 = vadd.f32 %v1275, 1.0
  %v1277 = vrcp.pop %v1276
  %v1278 = vmul.f32 %v1276, %v1277
  %v1279 = vsub.f32 1.0, %v1278
  %v1280 = vmul.f32 %v1277, %v1279
  %v1281 = vadd.f32 %v1277, %v1280
  %vm1282 = vweird.f32 %v1276
  %vm1283 = vweird.f32 %v1277
  %vm1284 = vmor %vm1282, %vm1283
  %v1285 = vsel %vm1284, %v1277, %v1281
  %v1286 = vand.u32 2147483647, %v1276
  %vm1287 = vcmp.eq.f32.partialorder %v1286, 8.507059e+37
  %v1288 = vand.u32 %v1276, 2147483648
  %v1289 = vor.u32 1.1754944e-38, %v1288
  %v1290 = vsel %vm1287, %v1289, %v1285
  %v1291 = vmul.f32 1.0, %v1290
  %v1292 = vadd.f32 %v169, %v1250
  %v1293 = vxor.u32 %v1292, 2147483648
  %v1294 = vmul.f32 %v1293, 1.442695
  %v1295 = vpow.pop %v1294
  %v1296 = vadd.f32 %v1295, 1.0
  %v1297 = vrcp.pop %v1296
  %v1298 = vmul.f32 %v1296, %v1297
  %v1299 = vsub.f32 1.0, %v1298
  %v1300 = vmul.f32 %v1297, %v1299
  %v1301 = vadd.f32 %v1297, %v1300
  %vm1302 = vweird.f32 %v1296
  %vm1303 = vweird.f32 %v1297
  %vm1304 = vmor %vm1302, %vm1303
  %v1305 = vsel %vm1304, %v1297, %v1301
  %v1306 = vand.u32 2147483647, %v1296
  %vm1307 = vcmp.eq.f32.partialorder %v1306, 8.507059e+37
  %v1308 = vand.u32 %v1296, 2147483648
  %v1309 = vor.u32 1.1754944e-38, %v1308
  %v1310 = vsel %vm1307, %v1309, %v1305
  %v1311 = vmul.f32 1.0, %v1310
  %v1312 = vadd.f32 %v1270, %v472
  %v1313 = vmul.f32 %v1291, %v1312
  %v1314 = vadd.f32 %v210, %v1313
  %v1315 = vtanh.pop %v1314
  %v1316 = vsub.f32 1.0, %v1311
  %v1317 = vmul.f32 %v1316, %v1315
  %v1318 = vmul.f32 %v1311, %v1043
  %v1319 = vadd.f32 %v1317, %v1318
  %1320 = vmatpush.msra.mxu0 %v317
  %1321 = vmatpush.msra.mxu0 %v314
  %1322 = vmatpush.msra.mxu0 %v311
  %1323 = vmatpush.msra.mxu0 %v308
  %1324 = vmatpush.msra.mxu0 %v305
  %1325 = vmatpush.msra.mxu0 %v302
  %1326 = vmatpush.msra.mxu0 %v299
  %1327 = vmatpush.msra.mxu0 %v296
  %1328 = vmatpush.msra.mxu0 %v293
  %1329 = vmatpush.msra.mxu0 %v290
  %1330 = vmatpush.msra.mxu0 %v287
  %1331 = vmatpush.msra.mxu0 %v284
  %1332 = vmatpush.msra.mxu0 %v281
  %1333 = vmatpush.msra.mxu0 %v278
  %1334 = vmatpush.msra.mxu0 %v275
  %1335 = vmatpush.msra.mxu0 %v272
  %1336 = vmatmul.f32.gmra.mxu0 %v1319
  %v1337 = vpop.f32.mrf.mxu0
  %v1338 = vadd.f32 %v483, %v1337
  %1339 = vdwg.mxu0
  %1340 = vmatpush.msra.mxu0 %v318
  %1341 = vmatpush.msra.mxu0 %v315
  %1342 = vmatpush.msra.mxu0 %v312
  %1343 = vmatpush.msra.mxu0 %v309
  %1344 = vmatpush.msra.mxu0 %v306
  %1345 = vmatpush.msra.mxu0 %v303
  %1346 = vmatpush.msra.mxu0 %v300
  %1347 = vmatpush.msra.mxu0 %v297
  %1348 = vmatpush.msra.mxu0 %v294
  %1349 = vmatpush.msra.mxu0 %v291
  %1350 = vmatpush.msra.mxu0 %v288
  %1351 = vmatpush.msra.mxu0 %v285
  %1352 = vmatpush.msra.mxu0 %v282
  %1353 = vmatpush.msra.mxu0 %v279
  %1354 = vmatpush.msra.mxu0 %v276
  %1355 = vmatpush.msra.mxu0 %v273
  %1356 = vmatmul.f32.gmra.mxu0 %v1319
  %v1357 = vpop.f32.mrf.mxu0
  %v1358 = vadd.f32 %v484, %v1357
  %1359 = vdwg.mxu0
  %1360 = vmatpush.msra.mxu0 %v319
  %1361 = vmatpush.msra.mxu0 %v316
  %1362 = vmatpush.msra.mxu0 %v313
  %1363 = vmatpush.msra.mxu0 %v310
  %1364 = vmatpush.msra.mxu0 %v307
  %1365 = vmatpush.msra.mxu0 %v304
  %1366 = vmatpush.msra.mxu0 %v301
  %1367 = vmatpush.msra.mxu0 %v298
  %1368 = vmatpush.msra.mxu0 %v295
  %1369 = vmatpush.msra.mxu0 %v292
  %1370 = vmatpush.msra.mxu0 %v289
  %1371 = vmatpush.msra.mxu0 %v286
  %1372 = vmatpush.msra.mxu0 %v283
  %1373 = vmatpush.msra.mxu0 %v280
  %1374 = vmatpush.msra.mxu0 %v277
  %1375 = vmatpush.msra.mxu0 %v274
  %1376 = vmatmul.f32.gmra.mxu0 %v1319
  %v1377 = vpop.f32.mrf.mxu0
  %v1378 = vadd.f32 %v485, %v1377
  %1379 = vdwg.mxu0
  %1380 = vmatpush.msra.mxu0 %v365
  %1381 = vmatpush.msra.mxu0 %v362
  %1382 = vmatpush.msra.mxu0 %v359
  %1383 = vmatpush.msra.mxu0 %v356
  %1384 = vmatpush.msra.mxu0 %v353
  %1385 = vmatpush.msra.mxu0 %v350
  %1386 = vmatpush.msra.mxu0 %v347
  %1387 = vmatpush.msra.mxu0 %v344
  %1388 = vmatpush.msra.mxu0 %v341
  %1389 = vmatpush.msra.mxu0 %v338
  %1390 = vmatpush.msra.mxu0 %v335
  %1391 = vmatpush.msra.mxu0 %v332
  %1392 = vmatpush.msra.mxu0 %v329
  %1393 = vmatpush.msra.mxu0 %v326
  %1394 = vmatpush.msra.mxu0 %v323
  %1395 = vmatpush.msra.mxu0 %v320
  %1396 = vmatmul.f32.gmra.mxu0 %v1211
  %v1397 = vpop.f32.mrf.mxu0
  %v1398 = vadd.f32 0.0, %v1397
  %1399 = vdwg.mxu0
  %1400 = vmatpush.msra.mxu0 %v366
  %1401 = vmatpush.msra.mxu0 %v363
  %1402 = vmatpush.msra.mxu0 %v360
  %1403 = vmatpush.msra.mxu0 %v357
  %1404 = vmatpush.msra.mxu0 %v354
  %1405 = vmatpush.msra.mxu0 %v351
  %1406 = vmatpush.msra.mxu0 %v348
  %1407 = vmatpush.msra.mxu0 %v345
  %1408 = vmatpush.msra.mxu0 %v342
  %1409 = vmatpush.msra.mxu0 %v339
  %1410 = vmatpush.msra.mxu0 %v336
  %1411 = vmatpush.msra.mxu0 %v333
  %1412 = vmatpush.msra.mxu0 %v330
  %1413 = vmatpush.msra.mxu0 %v327
  %1414 = vmatpush.msra.mxu0 %v324
  %1415 = vmatpush.msra.mxu0 %v321
  %1416 = vmatmul.f32.gmra.mxu0 %v1211
  %v1417 = vpop.f32.mrf.mxu0
  %v1418 = vadd.f32 0.0, %v1417
  %1419 = vdwg.mxu0
  %1420 = vmatpush.msra.mxu0 %v367
  %1421 = vmatpush.msra.mxu0 %v364
  %1422 = vmatpush.msra.mxu0 %v361
  %1423 = vmatpush.msra.mxu0 %v358
  %1424 = vmatpush.msra.mxu0 %v355
  %1425 = vmatpush.msra.mxu0 %v352
  %1426 = vmatpush.msra.mxu0 %v349
  %1427 = vmatpush.msra.mxu0 %v346
  %1428 = vmatpush.msra.mxu0 %v343
  %1429 = vmatpush.msra.mxu0 %v340
  %1430 = vmatpush.msra.mxu0 %v337
  %1431 = vmatpush.msra.mxu0 %v334
  %1432 = vmatpush.msra.mxu0 %v331
  %1433 = vmatpush.msra.mxu0 %v328
  %1434 = vmatpush.msra.mxu0 %v325
  %1435 = vmatpush.msra.mxu0 %v322
  %1436 = vmatmul.f32.gmra.mxu0 %v1211
  %v1437 = vpop.f32.mrf.mxu0
  %v1438 = vadd.f32 0.0, %v1437
  %1439 = vdwg.mxu0
  %v1440 = vadd.f32 %v1338, %v1398
  %v1441 = vxor.u32 %v1440, 2147483648
  %v1442 = vmul.f32 %v1441, 1.442695
  %v1443 = vpow.pop %v1442
  %v1444 = vadd.f32 %v1443, 1.0
  %v1445 = vrcp.pop %v1444
  %v1446 = vmul.f32 %v1444, %v1445
  %v1447 = vsub.f32 1.0, %v1446
  %v1448 = vmul.f32 %v1445, %v1447
  %v1449 = vadd.f32 %v1445, %v1448
  %vm1450 = vweird.f32 %v1444
  %vm1451 = vweird.f32 %v1445
  %vm1452 = vmor %vm1450, %vm1451
  %v1453 = vsel %vm1452, %v1445, %v1449
  %v1454 = vand.u32 2147483647, %v1444
  %vm1455 = vcmp.eq.f32.partialorder %v1454, 8.507059e+37
  %v1456 = vand.u32 %v1444, 2147483648
  %v1457 = vor.u32 1.1754944e-38, %v1456
  %v1458 = vsel %vm1455, %v1457, %v1453
  %v1459 = vmul.f32 1.0, %v1458
  %v1460 = vadd.f32 %v1358, %v1418
  %v1461 = vxor.u32 %v1460, 2147483648
  %v1462 = vmul.f32 %v1461, 1.442695
  %v1463 = vpow.pop %v1462
  %v1464 = vadd.f32 %v1463, 1.0
  %v1465 = vrcp.pop %v1464
  %v1466 = vmul.f32 %v1464, %v1465
  %v1467 = vsub.f32 1.0, %v1466
  %v1468 = vmul.f32 %v1465, %v1467
  %v1469 = vadd.f32 %v1465, %v1468
  %vm1470 = vweird.f32 %v1464
  %vm1471 = vweird.f32 %v1465
  %vm1472 = vmor %vm1470, %vm1471
  %v1473 = vsel %vm1472, %v1465, %v1469
  %v1474 = vand.u32 2147483647, %v1464
  %vm1475 = vcmp.eq.f32.partialorder %v1474, 8.507059e+37
  %v1476 = vand.u32 %v1464, 2147483648
  %v1477 = vor.u32 1.1754944e-38, %v1476
  %v1478 = vsel %vm1475, %v1477, %v1473
  %v1479 = vmul.f32 1.0, %v1478
  %v1480 = vadd.f32 %v1438, %v650
  %v1481 = vmul.f32 %v1459, %v1480
  %v1482 = vadd.f32 %v1378, %v1481
  %v1483 = vtanh.pop %v1482
  %v1484 = vsub.f32 1.0, %v1479
  %v1485 = vmul.f32 %v1484, %v1483
  %v1486 = vmul.f32 %v1479, %v1211
  %v1487 = vadd.f32 %v1485, %v1486
  %1488 = vmatpush.msra.mxu0 %v269
  %1489 = vmatpush.msra.mxu0 %v266
  %1490 = vmatpush.msra.mxu0 %v263
  %1491 = vmatpush.msra.mxu0 %v260
  %1492 = vmatpush.msra.mxu0 %v257
  %1493 = vmatpush.msra.mxu0 %v254
  %1494 = vmatpush.msra.mxu0 %v251
  %1495 = vmatpush.msra.mxu0 %v248
  %1496 = vmatpush.msra.mxu0 %v245
  %1497 = vmatpush.msra.mxu0 %v242
  %1498 = vmatpush.msra.mxu0 %v239
  %1499 = vmatpush.msra.mxu0 %v236
  %1500 = vmatpush.msra.mxu0 %v233
  %1501 = vmatpush.msra.mxu0 %v230
  %1502 = vmatpush.msra.mxu0 %v227
  %1503 = vmatpush.msra.mxu0 %v224
  %1504 = vmatmul.f32.gmra.mxu0 %v1319
  %v1505 = vpop.f32.mrf.mxu0
  %v1506 = vadd.f32 0.0, %v1505
  %1507 = vdwg.mxu0
  %1508 = vmatpush.msra.mxu0 %v270
  %1509 = vmatpush.msra.mxu0 %v267
  %1510 = vmatpush.msra.mxu0 %v264
  %1511 = vmatpush.msra.mxu0 %v261
  %1512 = vmatpush.msra.mxu0 %v258
  %1513 = vmatpush.msra.mxu0 %v255
  %1514 = vmatpush.msra.mxu0 %v252
  %1515 = vmatpush.msra.mxu0 %v249
  %1516 = vmatpush.msra.mxu0 %v246
  %1517 = vmatpush.msra.mxu0 %v243
  %1518 = vmatpush.msra.mxu0 %v240
  %1519 = vmatpush.msra.mxu0 %v237
  %1520 = vmatpush.msra.mxu0 %v234
  %1521 = vmatpush.msra.mxu0 %v231
  %1522 = vmatpush.msra.mxu0 %v228
  %1523 = vmatpush.msra.mxu0 %v225
  %1524 = vmatmul.f32.gmra.mxu0 %v1319
  %v1525 = vpop.f32.mrf.mxu0
  %v1526 = vadd.f32 0.0, %v1525
  %1527 = vdwg.mxu0
  %1528 = vmatpush.msra.mxu0 %v271
  %1529 = vmatpush.msra.mxu0 %v268
  %1530 = vmatpush.msra.mxu0 %v265
  %1531 = vmatpush.msra.mxu0 %v262
  %1532 = vmatpush.msra.mxu0 %v259
  %1533 = vmatpush.msra.mxu0 %v256
  %1534 = vmatpush.msra.mxu0 %v253
  %1535 = vmatpush.msra.mxu0 %v250
  %1536 = vmatpush.msra.mxu0 %v247
  %1537 = vmatpush.msra.mxu0 %v244
  %1538 = vmatpush.msra.mxu0 %v241
  %1539 = vmatpush.msra.mxu0 %v238
  %1540 = vmatpush.msra.mxu0 %v235
  %1541 = vmatpush.msra.mxu0 %v232
  %1542 = vmatpush.msra.mxu0 %v229
  %1543 = vmatpush.msra.mxu0 %v226
  %1544 = vmatmul.f32.gmra.mxu0 %v1319
  %v1545 = vpop.f32.mrf.mxu0
  %v1546 = vadd.f32 0.0, %v1545
  %1547 = vdwg.mxu0
  %v1548 = vadd.f32 %v131, %v1506
  %v1549 = vxor.u32 %v1548, 2147483648
  %v1550 = vmul.f32 %v1549, 1.442695
  %v1551 = vpow.pop %v1550
  %v1552 = vadd.f32 %v1551, 1.0
  %v1553 = vrcp.pop %v1552
  %v1554 = vmul.f32 %v1552, %v1553
  %v1555 = vsub.f32 1.0, %v1554
  %v1556 = vmul.f32 %v1553, %v1555
  %v1557 = vadd.f32 %v1553, %v1556
  %vm1558 = vweird.f32 %v1552
  %vm1559 = vweird.f32 %v1553
  %vm1560 = vmor %vm1558, %vm1559
  %v1561 = vsel %vm1560, %v1553, %v1557
  %v1562 = vand.u32 2147483647, %v1552
  %vm1563 = vcmp.eq.f32.partialorder %v1562, 8.507059e+37
  %v1564 = vand.u32 %v1552, 2147483648
  %v1565 = vor.u32 1.1754944e-38, %v1564
  %v1566 = vsel %vm1563, %v1565, %v1561
  %v1567 = vmul.f32 1.0, %v1566
  %v1568 = vadd.f32 %v172, %v1526
  %v1569 = vxor.u32 %v1568, 2147483648
  %v1570 = vmul.f32 %v1569, 1.442695
  %v1571 = vpow.pop %v1570
  %v1572 = vadd.f32 %v1571, 1.0
  %v1573 = vrcp.pop %v1572
  %v1574 = vmul.f32 %v1572, %v1573
  %v1575 = vsub.f32 1.0, %v1574
  %v1576 = vmul.f32 %v1573, %v1575
  %v1577 = vadd.f32 %v1573, %v1576
  %vm1578 = vweird.f32 %v1572
  %vm1579 = vweird.f32 %v1573
  %vm1580 = vmor %vm1578, %vm1579
  %v1581 = vsel %vm1580, %v1573, %v1577
  %v1582 = vand.u32 2147483647, %v1572
  %vm1583 = vcmp.eq.f32.partialorder %v1582, 8.507059e+37
  %v1584 = vand.u32 %v1572, 2147483648
  %v1585 = vor.u32 1.1754944e-38, %v1584
  %v1586 = vsel %vm1583, %v1585, %v1581
  %v1587 = vmul.f32 1.0, %v1586
  %v1588 = vadd.f32 %v1546, %v472
  %v1589 = vmul.f32 %v1567, %v1588
  %v1590 = vadd.f32 %v213, %v1589
  %v1591 = vtanh.pop %v1590
  %v1592 = vsub.f32 1.0, %v1587
  %v1593 = vmul.f32 %v1592, %v1591
  %v1594 = vmul.f32 %v1587, %v1319
  %v1595 = vadd.f32 %v1593, %v1594
  %1596 = vmatpush.msra.mxu0 %v317
  %1597 = vmatpush.msra.mxu0 %v314
  %1598 = vmatpush.msra.mxu0 %v311
  %1599 = vmatpush.msra.mxu0 %v308
  %1600 = vmatpush.msra.mxu0 %v305
  %1601 = vmatpush.msra.mxu0 %v302
  %1602 = vmatpush.msra.mxu0 %v299
  %1603 = vmatpush.msra.mxu0 %v296
  %1604 = vmatpush.msra.mxu0 %v293
  %1605 = vmatpush.msra.mxu0 %v290
  %1606 = vmatpush.msra.mxu0 %v287
  %1607 = vmatpush.msra.mxu0 %v284
  %1608 = vmatpush.msra.mxu0 %v281
  %1609 = vmatpush.msra.mxu0 %v278
  %1610 = vmatpush.msra.mxu0 %v275
  %1611 = vmatpush.msra.mxu0 %v272
  %1612 = vmatmul.f32.gmra.mxu0 %v1595
  %v1613 = vpop.f32.mrf.mxu0
  %v1614 = vadd.f32 %v483, %v1613
  %1615 = vdwg.mxu0
  %1616 = vmatpush.msra.mxu0 %v318
  %1617 = vmatpush.msra.mxu0 %v315
  %1618 = vmatpush.msra.mxu0 %v312
  %1619 = vmatpush.msra.mxu0 %v309
  %1620 = vmatpush.msra.mxu0 %v306
  %1621 = vmatpush.msra.mxu0 %v303
  %1622 = vmatpush.msra.mxu0 %v300
  %1623 = vmatpush.msra.mxu0 %v297
  %1624 = vmatpush.msra.mxu0 %v294
  %1625 = vmatpush.msra.mxu0 %v291
  %1626 = vmatpush.msra.mxu0 %v288
  %1627 = vmatpush.msra.mxu0 %v285
  %1628 = vmatpush.msra.mxu0 %v282
  %1629 = vmatpush.msra.mxu0 %v279
  %1630 = vmatpush.msra.mxu0 %v276
  %1631 = vmatpush.msra.mxu0 %v273
  %1632 = vmatmul.f32.gmra.mxu0 %v1595
  %v1633 = vpop.f32.mrf.mxu0
  %v1634 = vadd.f32 %v484, %v1633
  %1635 = vdwg.mxu0
  %1636 = vmatpush.msra.mxu0 %v319
  %1637 = vmatpush.msra.mxu0 %v316
  %1638 = vmatpush.msra.mxu0 %v313
  %1639 = vmatpush.msra.mxu0 %v310
  %1640 = vmatpush.msra.mxu0 %v307
  %1641 = vmatpush.msra.mxu0 %v304
  %1642 = vmatpush.msra.mxu0 %v301
  %1643 = vmatpush.msra.mxu0 %v298
  %1644 = vmatpush.msra.mxu0 %v295
  %1645 = vmatpush.msra.mxu0 %v292
  %1646 = vmatpush.msra.mxu0 %v289
  %1647 = vmatpush.msra.mxu0 %v286
  %1648 = vmatpush.msra.mxu0 %v283
  %1649 = vmatpush.msra.mxu0 %v280
  %1650 = vmatpush.msra.mxu0 %v277
  %1651 = vmatpush.msra.mxu0 %v274
  %1652 = vmatmul.f32.gmra.mxu0 %v1595
  %v1653 = vpop.f32.mrf.mxu0
  %v1654 = vadd.f32 %v485, %v1653
  %1655 = vdwg.mxu0
  %1656 = vmatpush.msra.mxu0 %v365
  %1657 = vmatpush.msra.mxu0 %v362
  %1658 = vmatpush.msra.mxu0 %v359
  %1659 = vmatpush.msra.mxu0 %v356
  %1660 = vmatpush.msra.mxu0 %v353
  %1661 = vmatpush.msra.mxu0 %v350
  %1662 = vmatpush.msra.mxu0 %v347
  %1663 = vmatpush.msra.mxu0 %v344
  %1664 = vmatpush.msra.mxu0 %v341
  %1665 = vmatpush.msra.mxu0 %v338
  %1666 = vmatpush.msra.mxu0 %v335
  %1667 = vmatpush.msra.mxu0 %v332
  %1668 = vmatpush.msra.mxu0 %v329
  %1669 = vmatpush.msra.mxu0 %v326
  %1670 = vmatpush.msra.mxu0 %v323
  %1671 = vmatpush.msra.mxu0 %v320
  %1672 = vmatmul.f32.gmra.mxu0 %v1487
  %v1673 = vpop.f32.mrf.mxu0
  %v1674 = vadd.f32 0.0, %v1673
  %1675 = vdwg.mxu0
  %1676 = vmatpush.msra.mxu0 %v366
  %1677 = vmatpush.msra.mxu0 %v363
  %1678 = vmatpush.msra.mxu0 %v360
  %1679 = vmatpush.msra.mxu0 %v357
  %1680 = vmatpush.msra.mxu0 %v354
  %1681 = vmatpush.msra.mxu0 %v351
  %1682 = vmatpush.msra.mxu0 %v348
  %1683 = vmatpush.msra.mxu0 %v345
  %1684 = vmatpush.msra.mxu0 %v342
  %1685 = vmatpush.msra.mxu0 %v339
  %1686 = vmatpush.msra.mxu0 %v336
  %1687 = vmatpush.msra.mxu0 %v333
  %1688 = vmatpush.msra.mxu0 %v330
  %1689 = vmatpush.msra.mxu0 %v327
  %1690 = vmatpush.msra.mxu0 %v324
  %1691 = vmatpush.msra.mxu0 %v321
  %1692 = vmatmul.f32.gmra.mxu0 %v1487
  %v1693 = vpop.f32.mrf.mxu0
  %v1694 = vadd.f32 0.0, %v1693
  %1695 = vdwg.mxu0
  %1696 = vmatpush.msra.mxu0 %v367
  %1697 = vmatpush.msra.mxu0 %v364
  %1698 = vmatpush.msra.mxu0 %v361
  %1699 = vmatpush.msra.mxu0 %v358
  %1700 = vmatpush.msra.mxu0 %v355
  %1701 = vmatpush.msra.mxu0 %v352
  %1702 = vmatpush.msra.mxu0 %v349
  %1703 = vmatpush.msra.mxu0 %v346
  %1704 = vmatpush.msra.mxu0 %v343
  %1705 = vmatpush.msra.mxu0 %v340
  %1706 = vmatpush.msra.mxu0 %v337
  %1707 = vmatpush.msra.mxu0 %v334
  %1708 = vmatpush.msra.mxu0 %v331
  %1709 = vmatpush.msra.mxu0 %v328
  %1710 = vmatpush.msra.mxu0 %v325
  %1711 = vmatpush.msra.mxu0 %v322
  %1712 = vmatmul.f32.gmra.mxu0 %v1487
  %v1713 = vpop.f32.mrf.mxu0
  %v1714 = vadd.f32 0.0, %v1713
  %1715 = vdwg.mxu0
  %v1716 = vadd.f32 %v1614, %v1674
  %v1717 = vxor.u32 %v1716, 2147483648
  %v1718 = vmul.f32 %v1717, 1.442695
  %v1719 = vpow.pop %v1718
  %v1720 = vadd.f32 %v1719, 1.0
  %v1721 = vrcp.pop %v1720
  %v1722 = vmul.f32 %v1720, %v1721
  %v1723 = vsub.f32 1.0, %v1722
  %v1724 = vmul.f32 %v1721, %v1723
  %v1725 = vadd.f32 %v1721, %v1724
  %vm1726 = vweird.f32 %v1720
  %vm1727 = vweird.f32 %v1721
  %vm1728 = vmor %vm1726, %vm1727
  %v1729 = vsel %vm1728, %v1721, %v1725
  %v1730 = vand.u32 2147483647, %v1720
  %vm1731 = vcmp.eq.f32.partialorder %v1730, 8.507059e+37
  %v1732 = vand.u32 %v1720, 2147483648
  %v1733 = vor.u32 1.1754944e-38, %v1732
  %v1734 = vsel %vm1731, %v1733, %v1729
  %v1735 = vmul.f32 1.0, %v1734
  %v1736 = vadd.f32 %v1634, %v1694
  %v1737 = vxor.u32 %v1736, 2147483648
  %v1738 = vmul.f32 %v1737, 1.442695
  %v1739 = vpow.pop %v1738
  %v1740 = vadd.f32 %v1739, 1.0
  %v1741 = vrcp.pop %v1740
  %v1742 = vmul.f32 %v1740, %v1741
  %v1743 = vsub.f32 1.0, %v1742
  %v1744 = vmul.f32 %v1741, %v1743
  %v1745 = vadd.f32 %v1741, %v1744
  %vm1746 = vweird.f32 %v1740
  %vm1747 = vweird.f32 %v1741
  %vm1748 = vmor %vm1746, %vm1747
  %v1749 = vsel %vm1748, %v1741, %v1745
  %v1750 = vand.u32 2147483647, %v1740
  %vm1751 = vcmp.eq.f32.partialorder %v1750, 8.507059e+37
  %v1752 = vand.u32 %v1740, 2147483648
  %v1753 = vor.u32 1.1754944e-38, %v1752
  %v1754 = vsel %vm1751, %v1753, %v1749
  %v1755 = vmul.f32 1.0, %v1754
  %v1756 = vadd.f32 %v1714, %v650
  %v1757 = vmul.f32 %v1735, %v1756
  %v1758 = vadd.f32 %v1654, %v1757
  %v1759 = vtanh.pop %v1758
  %v1760 = vsub.f32 1.0, %v1755
  %v1761 = vmul.f32 %v1760, %v1759
  %v1762 = vmul.f32 %v1755, %v1487
  %v1763 = vadd.f32 %v1761, %v1762
  %1764 = vmatpush.msra.mxu0 %v269
  %1765 = vmatpush.msra.mxu0 %v266
  %1766 = vmatpush.msra.mxu0 %v263
  %1767 = vmatpush.msra.mxu0 %v260
  %1768 = vmatpush.msra.mxu0 %v257
  %1769 = vmatpush.msra.mxu0 %v254
  %1770 = vmatpush.msra.mxu0 %v251
  %1771 = vmatpush.msra.mxu0 %v248
  %1772 = vmatpush.msra.mxu0 %v245
  %1773 = vmatpush.msra.mxu0 %v242
  %1774 = vmatpush.msra.mxu0 %v239
  %1775 = vmatpush.msra.mxu0 %v236
  %1776 = vmatpush.msra.mxu0 %v233
  %1777 = vmatpush.msra.mxu0 %v230
  %1778 = vmatpush.msra.mxu0 %v227
  %1779 = vmatpush.msra.mxu0 %v224
  %1780 = vmatmul.f32.gmra.mxu0 %v1595
  %v1781 = vpop.f32.mrf.mxu0
  %v1782 = vadd.f32 0.0, %v1781
  %1783 = vdwg.mxu0
  %1784 = vmatpush.msra.mxu0 %v270
  %1785 = vmatpush.msra.mxu0 %v267
  %1786 = vmatpush.msra.mxu0 %v264
  %1787 = vmatpush.msra.mxu0 %v261
  %1788 = vmatpush.msra.mxu0 %v258
  %1789 = vmatpush.msra.mxu0 %v255
  %1790 = vmatpush.msra.mxu0 %v252
  %1791 = vmatpush.msra.mxu0 %v249
  %1792 = vmatpush.msra.mxu0 %v246
  %1793 = vmatpush.msra.mxu0 %v243
  %1794 = vmatpush.msra.mxu0 %v240
  %1795 = vmatpush.msra.mxu0 %v237
  %1796 = vmatpush.msra.mxu0 %v234
  %1797 = vmatpush.msra.mxu0 %v231
  %1798 = vmatpush.msra.mxu0 %v228
  %1799 = vmatpush.msra.mxu0 %v225
  %1800 = vmatmul.f32.gmra.mxu0 %v1595
  %v1801 = vpop.f32.mrf.mxu0
  %v1802 = vadd.f32 0.0, %v1801
  %1803 = vdwg.mxu0
  %1804 = vmatpush.msra.mxu0 %v271
  %1805 = vmatpush.msra.mxu0 %v268
  %1806 = vmatpush.msra.mxu0 %v265
  %1807 = vmatpush.msra.mxu0 %v262
  %1808 = vmatpush.msra.mxu0 %v259
  %1809 = vmatpush.msra.mxu0 %v256
  %1810 = vmatpush.msra.mxu0 %v253
  %1811 = vmatpush.msra.mxu0 %v250
  %1812 = vmatpush.msra.mxu0 %v247
  %1813 = vmatpush.msra.mxu0 %v244
  %1814 = vmatpush.msra.mxu0 %v241
  %1815 = vmatpush.msra.mxu0 %v238
  %1816 = vmatpush.msra.mxu0 %v235
  %1817 = vmatpush.msra.mxu0 %v232
  %1818 = vmatpush.msra.mxu0 %v229
  %1819 = vmatpush.msra.mxu0 %v226
  %1820 = vmatmul.f32.gmra.mxu0 %v1595
  %v1821 = vpop.f32.mrf.mxu0
  %v1822 = vadd.f32 0.0, %v1821
  %1823 = vdwg.mxu0
  %v1824 = vadd.f32 %v134, %v1782
  %v1825 = vxor.u32 %v1824, 2147483648
  %v1826 = vmul.f32 %v1825, 1.442695
  %v1827 = vpow.pop %v1826
  %v1828 = vadd.f32 %v1827, 1.0
  %v1829 = vrcp.pop %v1828
  %v1830 = vmul.f32 %v1828, %v1829
  %v1831 = vsub.f32 1.0, %v1830
  %v1832 = vmul.f32 %v1829, %v1831
  %v1833 = vadd.f32 %v1829, %v1832
  %vm1834 = vweird.f32 %v1828
  %vm1835 = vweird.f32 %v1829
  %vm1836 = vmor %vm1834, %vm1835
  %v1837 = vsel %vm1836, %v1829, %v1833
  %v1838 = vand.u32 2147483647, %v1828
  %vm1839 = vcmp.eq.f32.partialorder %v1838, 8.507059e+37
  %v1840 = vand.u32 %v1828, 2147483648
  %v1841 = vor.u32 1.1754944e-38, %v1840
  %v1842 = vsel %vm1839, %v1841, %v1837
  %v1843 = vmul.f32 1.0, %v1842
  %v1844 = vadd.f32 %v175, %v1802
  %v1845 = vxor.u32 %v1844, 2147483648
  %v1846 = vmul.f32 %v1845, 1.442695
  %v1847 = vpow.pop %v1846
  %v1848 = vadd.f32 %v1847, 1.0
  %v1849 = vrcp.pop %v1848
  %v1850 = vmul.f32 %v1848, %v1849
  %v1851 = vsub.f32 1.0, %v1850
  %v1852 = vmul.f32 %v1849, %v1851
  %v1853 = vadd.f32 %v1849, %v1852
  %vm1854 = vweird.f32 %v1848
  %vm1855 = vweird.f32 %v1849
  %vm1856 = vmor %vm1854, %vm1855
  %v1857 = vsel %vm1856, %v1849, %v1853
  %v1858 = vand.u32 2147483647, %v1848
  %vm1859 = vcmp.eq.f32.partialorder %v1858, 8.507059e+37
  %v1860 = vand.u32 %v1848, 2147483648
  %v1861 = vor.u32 1.1754944e-38, %v1860
  %v1862 = vsel %vm1859, %v1861, %v1857
  %v1863 = vmul.f32 1.0, %v1862
  %v1864 = vadd.f32 %v1822, %v472
  %v1865 = vmul.f32 %v1843, %v1864
  %v1866 = vadd.f32 %v216, %v1865
  %v1867 = vtanh.pop %v1866
  %v1868 = vsub.f32 1.0, %v1863
  %v1869 = vmul.f32 %v1868, %v1867
  %v1870 = vmul.f32 %v1863, %v1595
  %v1871 = vadd.f32 %v1869, %v1870
  %1872 = vmatpush.msra.mxu0 %v317
  %1873 = vmatpush.msra.mxu0 %v314
  %1874 = vmatpush.msra.mxu0 %v311
  %1875 = vmatpush.msra.mxu0 %v308
  %1876 = vmatpush.msra.mxu0 %v305
  %1877 = vmatpush.msra.mxu0 %v302
  %1878 = vmatpush.msra.mxu0 %v299
  %1879 = vmatpush.msra.mxu0 %v296
  %1880 = vmatpush.msra.mxu0 %v293
  %1881 = vmatpush.msra.mxu0 %v290
  %1882 = vmatpush.msra.mxu0 %v287
  %1883 = vmatpush.msra.mxu0 %v284
  %1884 = vmatpush.msra.mxu0 %v281
  %1885 = vmatpush.msra.mxu0 %v278
  %1886 = vmatpush.msra.mxu0 %v275
  %1887 = vmatpush.msra.mxu0 %v272
  %1888 = vmatmul.f32.gmra.mxu0 %v1871
  %v1889 = vpop.f32.mrf.mxu0
  %v1890 = vadd.f32 %v483, %v1889
  %1891 = vdwg.mxu0
  %1892 = vmatpush.msra.mxu0 %v318
  %1893 = vmatpush.msra.mxu0 %v315
  %1894 = vmatpush.msra.mxu0 %v312
  %1895 = vmatpush.msra.mxu0 %v309
  %1896 = vmatpush.msra.mxu0 %v306
  %1897 = vmatpush.msra.mxu0 %v303
  %1898 = vmatpush.msra.mxu0 %v300
  %1899 = vmatpush.msra.mxu0 %v297
  %1900 = vmatpush.msra.mxu0 %v294
  %1901 = vmatpush.msra.mxu0 %v291
  %1902 = vmatpush.msra.mxu0 %v288
  %1903 = vmatpush.msra.mxu0 %v285
  %1904 = vmatpush.msra.mxu0 %v282
  %1905 = vmatpush.msra.mxu0 %v279
  %1906 = vmatpush.msra.mxu0 %v276
  %1907 = vmatpush.msra.mxu0 %v273
  %1908 = vmatmul.f32.gmra.mxu0 %v1871
  %v1909 = vpop.f32.mrf.mxu0
  %v1910 = vadd.f32 %v484, %v1909
  %1911 = vdwg.mxu0
  %1912 = vmatpush.msra.mxu0 %v319
  %1913 = vmatpush.msra.mxu0 %v316
  %1914 = vmatpush.msra.mxu0 %v313
  %1915 = vmatpush.msra.mxu0 %v310
  %1916 = vmatpush.msra.mxu0 %v307
  %1917 = vmatpush.msra.mxu0 %v304
  %1918 = vmatpush.msra.mxu0 %v301
  %1919 = vmatpush.msra.mxu0 %v298
  %1920 = vmatpush.msra.mxu0 %v295
  %1921 = vmatpush.msra.mxu0 %v292
  %1922 = vmatpush.msra.mxu0 %v289
  %1923 = vmatpush.msra.mxu0 %v286
  %1924 = vmatpush.msra.mxu0 %v283
  %1925 = vmatpush.msra.mxu0 %v280
  %1926 = vmatpush.msra.mxu0 %v277
  %1927 = vmatpush.msra.mxu0 %v274
  %1928 = vmatmul.f32.gmra.mxu0 %v1871
  %v1929 = vpop.f32.mrf.mxu0
  %v1930 = vadd.f32 %v485, %v1929
  %1931 = vdwg.mxu0
  %1932 = vmatpush.msra.mxu0 %v365
  %1933 = vmatpush.msra.mxu0 %v362
  %1934 = vmatpush.msra.mxu0 %v359
  %1935 = vmatpush.msra.mxu0 %v356
  %1936 = vmatpush.msra.mxu0 %v353
  %1937 = vmatpush.msra.mxu0 %v350
  %1938 = vmatpush.msra.mxu0 %v347
  %1939 = vmatpush.msra.mxu0 %v344
  %1940 = vmatpush.msra.mxu0 %v341
  %1941 = vmatpush.msra.mxu0 %v338
  %1942 = vmatpush.msra.mxu0 %v335
  %1943 = vmatpush.msra.mxu0 %v332
  %1944 = vmatpush.msra.mxu0 %v329
  %1945 = vmatpush.msra.mxu0 %v326
  %1946 = vmatpush.msra.mxu0 %v323
  %1947 = vmatpush.msra.mxu0 %v320
  %1948 = vmatmul.f32.gmra.mxu0 %v1763
  %v1949 = vpop.f32.mrf.mxu0
  %v1950 = vadd.f32 0.0, %v1949
  %1951 = vdwg.mxu0
  %1952 = vmatpush.msra.mxu0 %v366
  %1953 = vmatpush.msra.mxu0 %v363
  %1954 = vmatpush.msra.mxu0 %v360
  %1955 = vmatpush.msra.mxu0 %v357
  %1956 = vmatpush.msra.mxu0 %v354
  %1957 = vmatpush.msra.mxu0 %v351
  %1958 = vmatpush.msra.mxu0 %v348
  %1959 = vmatpush.msra.mxu0 %v345
  %1960 = vmatpush.msra.mxu0 %v342
  %1961 = vmatpush.msra.mxu0 %v339
  %1962 = vmatpush.msra.mxu0 %v336
  %1963 = vmatpush.msra.mxu0 %v333
  %1964 = vmatpush.msra.mxu0 %v330
  %1965 = vmatpush.msra.mxu0 %v327
  %1966 = vmatpush.msra.mxu0 %v324
  %1967 = vmatpush.msra.mxu0 %v321
  %1968 = vmatmul.f32.gmra.mxu0 %v1763
  %v1969 = vpop.f32.mrf.mxu0
  %v1970 = vadd.f32 0.0, %v1969
  %1971 = vdwg.mxu0
  %1972 = vmatpush.msra.mxu0 %v367
  %1973 = vmatpush.msra.mxu0 %v364
  %1974 = vmatpush.msra.mxu0 %v361
  %1975 = vmatpush.msra.mxu0 %v358
  %1976 = vmatpush.msra.mxu0 %v355
  %1977 = vmatpush.msra.mxu0 %v352
  %1978 = vmatpush.msra.mxu0 %v349
  %1979 = vmatpush.msra.mxu0 %v346
  %1980 = vmatpush.msra.mxu0 %v343
  %1981 = vmatpush.msra.mxu0 %v340
  %1982 = vmatpush.msra.mxu0 %v337
  %1983 = vmatpush.msra.mxu0 %v334
  %1984 = vmatpush.msra.mxu0 %v331
  %1985 = vmatpush.msra.mxu0 %v328
  %1986 = vmatpush.msra.mxu0 %v325
  %1987 = vmatpush.msra.mxu0 %v322
  %1988 = vmatmul.f32.gmra.mxu0 %v1763
  %v1989 = vpop.f32.mrf.mxu0
  %v1990 = vadd.f32 0.0, %v1989
  %1991 = vdwg.mxu0
  %v1992 = vadd.f32 %v1890, %v1950
  %v1993 = vxor.u32 %v1992, 2147483648
  %v1994 = vmul.f32 %v1993, 1.442695
  %v1995 = vpow.pop %v1994
  %v1996 = vadd.f32 %v1995, 1.0
  %v1997 = vrcp.pop %v1996
  %v1998 = vmul.f32 %v1996, %v1997
  %v1999 = vsub.f32 1.0, %v1998
  %v2000 = vmul.f32 %v1997, %v1999
  %v2001 = vadd.f32 %v1997, %v2000
  %vm2002 = vweird.f32 %v1996
  %vm2003 = vweird.f32 %v1997
  %vm2004 = vmor %vm2002, %vm2003
  %v2005 = vsel %vm2004, %v1997, %v2001
  %v2006 = vand.u32 2147483647, %v1996
  %vm2007 = vcmp.eq.f32.partialorder %v2006, 8.507059e+37
  %v2008 = vand.u32 %v1996, 2147483648
  %v2009 = vor.u32 1.1754944e-38, %v2008
  %v2010 = vsel %vm2007, %v2009, %v2005
  %v2011 = vmul.f32 1.0, %v2010
  %v2012 = vadd.f32 %v1910, %v1970
  %v2013 = vxor.u32 %v2012, 2147483648
  %v2014 = vmul.f32 %v2013, 1.442695
  %v2015 = vpow.pop %v2014
  %v2016 = vadd.f32 %v2015, 1.0
  %v2017 = vrcp.pop %v2016
  %v2018 = vmul.f32 %v2016, %v2017
  %v2019 = vsub.f32 1.0, %v2018
  %v2020 = vmul.f32 %v2017, %v2019
  %v2021 = vadd.f32 %v2017, %v2020
  %vm2022 = vweird.f32 %v2016
  %vm2023 = vweird.f32 %v2017
  %vm2024 = vmor %vm2022, %vm2023
  %v2025 = vsel %vm2024, %v2017, %v2021
  %v2026 = vand.u32 2147483647, %v2016
  %vm2027 = vcmp.eq.f32.partialorder %v2026, 8.507059e+37
  %v2028 = vand.u32 %v2016, 2147483648
  %v2029 = vor.u32 1.1754944e-38, %v2028
  %v2030 = vsel %vm2027, %v2029, %v2025
  %v2031 = vmul.f32 1.0, %v2030
  %v2032 = vadd.f32 %v1990, %v650
  %v2033 = vmul.f32 %v2011, %v2032
  %v2034 = vadd.f32 %v1930, %v2033
  %v2035 = vtanh.pop %v2034
  %v2036 = vsub.f32 1.0, %v2031
  %v2037 = vmul.f32 %v2036, %v2035
  %v2038 = vmul.f32 %v2031, %v1763
  %v2039 = vadd.f32 %v2037, %v2038
  %2040 = vmatpush.msra.mxu0 %v269
  %2041 = vmatpush.msra.mxu0 %v266
  %2042 = vmatpush.msra.mxu0 %v263
  %2043 = vmatpush.msra.mxu0 %v260
  %2044 = vmatpush.msra.mxu0 %v257
  %2045 = vmatpush.msra.mxu0 %v254
  %2046 = vmatpush.msra.mxu0 %v251
  %2047 = vmatpush.msra.mxu0 %v248
  %2048 = vmatpush.msra.mxu0 %v245
  %2049 = vmatpush.msra.mxu0 %v242
  %2050 = vmatpush.msra.mxu0 %v239
  %2051 = vmatpush.msra.mxu0 %v236
  %2052 = vmatpush.msra.mxu0 %v233
  %2053 = vmatpush.msra.mxu0 %v230
  %2054 = vmatpush.msra.mxu0 %v227
  %2055 = vmatpush.msra.mxu0 %v224
  %2056 = vmatmul.f32.gmra.mxu0 %v1871
  %v2057 = vpop.f32.mrf.mxu0
  %v2058 = vadd.f32 0.0, %v2057
  %2059 = vdwg.mxu0
  %2060 = vmatpush.msra.mxu0 %v270
  %2061 = vmatpush.msra.mxu0 %v267
  %2062 = vmatpush.msra.mxu0 %v264
  %2063 = vmatpush.msra.mxu0 %v261
  %2064 = vmatpush.msra.mxu0 %v258
  %2065 = vmatpush.msra.mxu0 %v255
  %2066 = vmatpush.msra.mxu0 %v252
  %2067 = vmatpush.msra.mxu0 %v249
  %2068 = vmatpush.msra.mxu0 %v246
  %2069 = vmatpush.msra.mxu0 %v243
  %2070 = vmatpush.msra.mxu0 %v240
  %2071 = vmatpush.msra.mxu0 %v237
  %2072 = vmatpush.msra.mxu0 %v234
  %2073 = vmatpush.msra.mxu0 %v231
  %2074 = vmatpush.msra.mxu0 %v228
  %2075 = vmatpush.msra.mxu0 %v225
  %2076 = vmatmul.f32.gmra.mxu0 %v1871
  %v2077 = vpop.f32.mrf.mxu0
  %v2078 = vadd.f32 0.0, %v2077
  %2079 = vdwg.mxu0
  %2080 = vmatpush.msra.mxu0 %v271
  %2081 = vmatpush.msra.mxu0 %v268
  %2082 = vmatpush.msra.mxu0 %v265
  %2083 = vmatpush.msra.mxu0 %v262
  %2084 = vmatpush.msra.mxu0 %v259
  %2085 = vmatpush.msra.mxu0 %v256
  %2086 = vmatpush.msra.mxu0 %v253
  %2087 = vmatpush.msra.mxu0 %v250
  %2088 = vmatpush.msra.mxu0 %v247
  %2089 = vmatpush.msra.mxu0 %v244
  %2090 = vmatpush.msra.mxu0 %v241
  %2091 = vmatpush.msra.mxu0 %v238
  %2092 = vmatpush.msra.mxu0 %v235
  %2093 = vmatpush.msra.mxu0 %v232
  %2094 = vmatpush.msra.mxu0 %v229
  %2095 = vmatpush.msra.mxu0 %v226
  %2096 = vmatmul.f32.gmra.mxu0 %v1871
  %v2097 = vpop.f32.mrf.mxu0
  %v2098 = vadd.f32 0.0, %v2097
  %2099 = vdwg.mxu0
  %v2100 = vadd.f32 %v137, %v2058
  %v2101 = vxor.u32 %v2100, 2147483648
  %v2102 = vmul.f32 %v2101, 1.442695
  %v2103 = vpow.pop %v2102
  %v2104 = vadd.f32 %v2103, 1.0
  %v2105 = vrcp.pop %v2104
  %v2106 = vmul.f32 %v2104, %v2105
  %v2107 = vsub.f32 1.0, %v2106
  %v2108 = vmul.f32 %v2105, %v2107
  %v2109 = vadd.f32 %v2105, %v2108
  %vm2110 = vweird.f32 %v2104
  %vm2111 = vweird.f32 %v2105
  %vm2112 = vmor %vm2110, %vm2111
  %v2113 = vsel %vm2112, %v2105, %v2109
  %v2114 = vand.u32 2147483647, %v2104
  %vm2115 = vcmp.eq.f32.partialorder %v2114, 8.507059e+37
  %v2116 = vand.u32 %v2104, 2147483648
  %v2117 = vor.u32 1.1754944e-38, %v2116
  %v2118 = vsel %vm2115, %v2117, %v2113
  %v2119 = vmul.f32 1.0, %v2118
  %v2120 = vadd.f32 %v178, %v2078
  %v2121 = vxor.u32 %v2120, 2147483648
  %v2122 = vmul.f32 %v2121, 1.442695
  %v2123 = vpow.pop %v2122
  %v2124 = vadd.f32 %v2123, 1.0
  %v2125 = vrcp.pop %v2124
  %v2126 = vmul.f32 %v2124, %v2125
  %v2127 = vsub.f32 1.0, %v2126
  %v2128 = vmul.f32 %v2125, %v2127
  %v2129 = vadd.f32 %v2125, %v2128
  %vm2130 = vweird.f32 %v2124
  %vm2131 = vweird.f32 %v2125
  %vm2132 = vmor %vm2130, %vm2131
  %v2133 = vsel %vm2132, %v2125, %v2129
  %v2134 = vand.u32 2147483647, %v2124
  %vm2135 = vcmp.eq.f32.partialorder %v2134, 8.507059e+37
  %v2136 = vand.u32 %v2124, 2147483648
  %v2137 = vor.u32 1.1754944e-38, %v2136
  %v2138 = vsel %vm2135, %v2137, %v2133
  %v2139 = vmul.f32 1.0, %v2138
  %v2140 = vadd.f32 %v2098, %v472
  %v2141 = vmul.f32 %v2119, %v2140
  %v2142 = vadd.f32 %v219, %v2141
  %v2143 = vtanh.pop %v2142
  %v2144 = vsub.f32 1.0, %v2139
  %v2145 = vmul.f32 %v2144, %v2143
  %v2146 = vmul.f32 %v2139, %v1871
  %v2147 = vadd.f32 %v2145, %v2146
  %2148 = vmatpush.msra.mxu0 %v317
  %2149 = vmatpush.msra.mxu0 %v314
  %2150 = vmatpush.msra.mxu0 %v311
  %2151 = vmatpush.msra.mxu0 %v308
  %2152 = vmatpush.msra.mxu0 %v305
  %2153 = vmatpush.msra.mxu0 %v302
  %2154 = vmatpush.msra.mxu0 %v299
  %2155 = vmatpush.msra.mxu0 %v296
  %2156 = vmatpush.msra.mxu0 %v293
  %2157 = vmatpush.msra.mxu0 %v290
  %2158 = vmatpush.msra.mxu0 %v287
  %2159 = vmatpush.msra.mxu0 %v284
  %2160 = vmatpush.msra.mxu0 %v281
  %2161 = vmatpush.msra.mxu0 %v278
  %2162 = vmatpush.msra.mxu0 %v275
  %2163 = vmatpush.msra.mxu0 %v272
  %2164 = vmatmul.f32.gmra.mxu0 %v2147
  %v2165 = vpop.f32.mrf.mxu0
  %v2166 = vadd.f32 %v483, %v2165
  %2167 = vdwg.mxu0
  %2168 = vmatpush.msra.mxu0 %v318
  %2169 = vmatpush.msra.mxu0 %v315
  %2170 = vmatpush.msra.mxu0 %v312
  %2171 = vmatpush.msra.mxu0 %v309
  %2172 = vmatpush.msra.mxu0 %v306
  %2173 = vmatpush.msra.mxu0 %v303
  %2174 = vmatpush.msra.mxu0 %v300
  %2175 = vmatpush.msra.mxu0 %v297
  %2176 = vmatpush.msra.mxu0 %v294
  %2177 = vmatpush.msra.mxu0 %v291
  %2178 = vmatpush.msra.mxu0 %v288
  %2179 = vmatpush.msra.mxu0 %v285
  %2180 = vmatpush.msra.mxu0 %v282
  %2181 = vmatpush.msra.mxu0 %v279
  %2182 = vmatpush.msra.mxu0 %v276
  %2183 = vmatpush.msra.mxu0 %v273
  %2184 = vmatmul.f32.gmra.mxu0 %v2147
  %v2185 = vpop.f32.mrf.mxu0
  %v2186 = vadd.f32 %v484, %v2185
  %2187 = vdwg.mxu0
  %2188 = vmatpush.msra.mxu0 %v319
  %2189 = vmatpush.msra.mxu0 %v316
  %2190 = vmatpush.msra.mxu0 %v313
  %2191 = vmatpush.msra.mxu0 %v310
  %2192 = vmatpush.msra.mxu0 %v307
  %2193 = vmatpush.msra.mxu0 %v304
  %2194 = vmatpush.msra.mxu0 %v301
  %2195 = vmatpush.msra.mxu0 %v298
  %2196 = vmatpush.msra.mxu0 %v295
  %2197 = vmatpush.msra.mxu0 %v292
  %2198 = vmatpush.msra.mxu0 %v289
  %2199 = vmatpush.msra.mxu0 %v286
  %2200 = vmatpush.msra.mxu0 %v283
  %2201 = vmatpush.msra.mxu0 %v280
  %2202 = vmatpush.msra.mxu0 %v277
  %2203 = vmatpush.msra.mxu0 %v274
  %2204 = vmatmul.f32.gmra.mxu0 %v2147
  %v2205 = vpop.f32.mrf.mxu0
  %v2206 = vadd.f32 %v485, %v2205
  %2207 = vdwg.mxu0
  %2208 = vmatpush.msra.mxu0 %v365
  %2209 = vmatpush.msra.mxu0 %v362
  %2210 = vmatpush.msra.mxu0 %v359
  %2211 = vmatpush.msra.mxu0 %v356
  %2212 = vmatpush.msra.mxu0 %v353
  %2213 = vmatpush.msra.mxu0 %v350
  %2214 = vmatpush.msra.mxu0 %v347
  %2215 = vmatpush.msra.mxu0 %v344
  %2216 = vmatpush.msra.mxu0 %v341
  %2217 = vmatpush.msra.mxu0 %v338
  %2218 = vmatpush.msra.mxu0 %v335
  %2219 = vmatpush.msra.mxu0 %v332
  %2220 = vmatpush.msra.mxu0 %v329
  %2221 = vmatpush.msra.mxu0 %v326
  %2222 = vmatpush.msra.mxu0 %v323
  %2223 = vmatpush.msra.mxu0 %v320
  %2224 = vmatmul.f32.gmra.mxu0 %v2039
  %v2225 = vpop.f32.mrf.mxu0
  %v2226 = vadd.f32 0.0, %v2225
  %2227 = vdwg.mxu0
  %2228 = vmatpush.msra.mxu0 %v366
  %2229 = vmatpush.msra.mxu0 %v363
  %2230 = vmatpush.msra.mxu0 %v360
  %2231 = vmatpush.msra.mxu0 %v357
  %2232 = vmatpush.msra.mxu0 %v354
  %2233 = vmatpush.msra.mxu0 %v351
  %2234 = vmatpush.msra.mxu0 %v348
  %2235 = vmatpush.msra.mxu0 %v345
  %2236 = vmatpush.msra.mxu0 %v342
  %2237 = vmatpush.msra.mxu0 %v339
  %2238 = vmatpush.msra.mxu0 %v336
  %2239 = vmatpush.msra.mxu0 %v333
  %2240 = vmatpush.msra.mxu0 %v330
  %2241 = vmatpush.msra.mxu0 %v327
  %2242 = vmatpush.msra.mxu0 %v324
  %2243 = vmatpush.msra.mxu0 %v321
  %2244 = vmatmul.f32.gmra.mxu0 %v2039
  %v2245 = vpop.f32.mrf.mxu0
  %v2246 = vadd.f32 0.0, %v2245
  %2247 = vdwg.mxu0
  %2248 = vmatpush.msra.mxu0 %v367
  %2249 = vmatpush.msra.mxu0 %v364
  %2250 = vmatpush.msra.mxu0 %v361
  %2251 = vmatpush.msra.mxu0 %v358
  %2252 = vmatpush.msra.mxu0 %v355
  %2253 = vmatpush.msra.mxu0 %v352
  %2254 = vmatpush.msra.mxu0 %v349
  %2255 = vmatpush.msra.mxu0 %v346
  %2256 = vmatpush.msra.mxu0 %v343
  %2257 = vmatpush.msra.mxu0 %v340
  %2258 = vmatpush.msra.mxu0 %v337
  %2259 = vmatpush.msra.mxu0 %v334
  %2260 = vmatpush.msra.mxu0 %v331
  %2261 = vmatpush.msra.mxu0 %v328
  %2262 = vmatpush.msra.mxu0 %v325
  %2263 = vmatpush.msra.mxu0 %v322
  %2264 = vmatmul.f32.gmra.mxu0 %v2039
  %v2265 = vpop.f32.mrf.mxu0
  %v2266 = vadd.f32 0.0, %v2265
  %2267 = vdwg.mxu0
  %v2268 = vadd.f32 %v2166, %v2226
  %v2269 = vxor.u32 %v2268, 2147483648
  %v2270 = vmul.f32 %v2269, 1.442695
  %v2271 = vpow.pop %v2270
  %v2272 = vadd.f32 %v2271, 1.0
  %v2273 = vrcp.pop %v2272
  %v2274 = vmul.f32 %v2272, %v2273
  %v2275 = vsub.f32 1.0, %v2274
  %v2276 = vmul.f32 %v2273, %v2275
  %v2277 = vadd.f32 %v2273, %v2276
  %vm2278 = vweird.f32 %v2272
  %vm2279 = vweird.f32 %v2273
  %vm2280 = vmor %vm2278, %vm2279
  %v2281 = vsel %vm2280, %v2273, %v2277
  %v2282 = vand.u32 2147483647, %v2272
  %vm2283 = vcmp.eq.f32.partialorder %v2282, 8.507059e+37
  %v2284 = vand.u32 %v2272, 2147483648
  %v2285 = vor.u32 1.1754944e-38, %v2284
  %v2286 = vsel %vm2283, %v2285, %v2281
  %v2287 = vmul.f32 1.0, %v2286
  %v2288 = vadd.f32 %v2186, %v2246
  %v2289 = vxor.u32 %v2288, 2147483648
  %v2290 = vmul.f32 %v2289, 1.442695
  %v2291 = vpow.pop %v2290
  %v2292 = vadd.f32 %v2291, 1.0
  %v2293 = vrcp.pop %v2292
  %v2294 = vmul.f32 %v2292, %v2293
  %v2295 = vsub.f32 1.0, %v2294
  %v2296 = vmul.f32 %v2293, %v2295
  %v2297 = vadd.f32 %v2293, %v2296
  %vm2298 = vweird.f32 %v2292
  %vm2299 = vweird.f32 %v2293
  %vm2300 = vmor %vm2298, %vm2299
  %v2301 = vsel %vm2300, %v2293, %v2297
  %v2302 = vand.u32 2147483647, %v2292
  %vm2303 = vcmp.eq.f32.partialorder %v2302, 8.507059e+37
  %v2304 = vand.u32 %v2292, 2147483648
  %v2305 = vor.u32 1.1754944e-38, %v2304
  %v2306 = vsel %vm2303, %v2305, %v2301
  %v2307 = vmul.f32 1.0, %v2306
  %v2308 = vadd.f32 %v2266, %v650
  %v2309 = vmul.f32 %v2287, %v2308
  %v2310 = vadd.f32 %v2206, %v2309
  %v2311 = vtanh.pop %v2310
  %v2312 = vsub.f32 1.0, %v2307
  %v2313 = vmul.f32 %v2312, %v2311
  %v2314 = vmul.f32 %v2307, %v2039
  %v2315 = vadd.f32 %v2313, %v2314
  %2316 = vmatpush.msra.mxu0 %v269
  %2317 = vmatpush.msra.mxu0 %v266
  %2318 = vmatpush.msra.mxu0 %v263
  %2319 = vmatpush.msra.mxu0 %v260
  %2320 = vmatpush.msra.mxu0 %v257
  %2321 = vmatpush.msra.mxu0 %v254
  %2322 = vmatpush.msra.mxu0 %v251
  %2323 = vmatpush.msra.mxu0 %v248
  %2324 = vmatpush.msra.mxu0 %v245
  %2325 = vmatpush.msra.mxu0 %v242
  %2326 = vmatpush.msra.mxu0 %v239
  %2327 = vmatpush.msra.mxu0 %v236
  %2328 = vmatpush.msra.mxu0 %v233
  %2329 = vmatpush.msra.mxu0 %v230
  %2330 = vmatpush.msra.mxu0 %v227
  %2331 = vmatpush.msra.mxu0 %v224
  %2332 = vmatmul.f32.gmra.mxu0 %v2147
  %v2333 = vpop.f32.mrf.mxu0
  %v2334 = vadd.f32 0.0, %v2333
  %2335 = vdwg.mxu0
  %2336 = vmatpush.msra.mxu0 %v270
  %2337 = vmatpush.msra.mxu0 %v267
  %2338 = vmatpush.msra.mxu0 %v264
  %2339 = vmatpush.msra.mxu0 %v261
  %2340 = vmatpush.msra.mxu0 %v258
  %2341 = vmatpush.msra.mxu0 %v255
  %2342 = vmatpush.msra.mxu0 %v252
  %2343 = vmatpush.msra.mxu0 %v249
  %2344 = vmatpush.msra.mxu0 %v246
  %2345 = vmatpush.msra.mxu0 %v243
  %2346 = vmatpush.msra.mxu0 %v240
  %2347 = vmatpush.msra.mxu0 %v237
  %2348 = vmatpush.msra.mxu0 %v234
  %2349 = vmatpush.msra.mxu0 %v231
  %2350 = vmatpush.msra.mxu0 %v228
  %2351 = vmatpush.msra.mxu0 %v225
  %2352 = vmatmul.f32.gmra.mxu0 %v2147
  %v2353 = vpop.f32.mrf.mxu0
  %v2354 = vadd.f32 0.0, %v2353
  %2355 = vdwg.mxu0
  %2356 = vmatpush.msra.mxu0 %v271
  %2357 = vmatpush.msra.mxu0 %v268
  %2358 = vmatpush.msra.mxu0 %v265
  %2359 = vmatpush.msra.mxu0 %v262
  %2360 = vmatpush.msra.mxu0 %v259
  %2361 = vmatpush.msra.mxu0 %v256
  %2362 = vmatpush.msra.mxu0 %v253
  %2363 = vmatpush.msra.mxu0 %v250
  %2364 = vmatpush.msra.mxu0 %v247
  %2365 = vmatpush.msra.mxu0 %v244
  %2366 = vmatpush.msra.mxu0 %v241
  %2367 = vmatpush.msra.mxu0 %v238
  %2368 = vmatpush.msra.mxu0 %v235
  %2369 = vmatpush.msra.mxu0 %v232
  %2370 = vmatpush.msra.mxu0 %v229
  %2371 = vmatpush.msra.mxu0 %v226
  %2372 = vmatmul.f32.gmra.mxu0 %v2147
  %v2373 = vpop.f32.mrf.mxu0
  %v2374 = vadd.f32 0.0, %v2373
  %2375 = vdwg.mxu0
  %v2376 = vadd.f32 %v140, %v2334
  %v2377 = vxor.u32 %v2376, 2147483648
  %v2378 = vmul.f32 %v2377, 1.442695
  %v2379 = vpow.pop %v2378
  %v2380 = vadd.f32 %v2379, 1.0
  %v2381 = vrcp.pop %v2380
  %v2382 = vmul.f32 %v2380, %v2381
  %v2383 = vsub.f32 1.0, %v2382
  %v2384 = vmul.f32 %v2381, %v2383
  %v2385 = vadd.f32 %v2381, %v2384
  %vm2386 = vweird.f32 %v2380
  %vm2387 = vweird.f32 %v2381
  %vm2388 = vmor %vm2386, %vm2387
  %v2389 = vsel %vm2388, %v2381, %v2385
  %v2390 = vand.u32 2147483647, %v2380
  %vm2391 = vcmp.eq.f32.partialorder %v2390, 8.507059e+37
  %v2392 = vand.u32 %v2380, 2147483648
  %v2393 = vor.u32 1.1754944e-38, %v2392
  %v2394 = vsel %vm2391, %v2393, %v2389
  %v2395 = vmul.f32 1.0, %v2394
  %v2396 = vadd.f32 %v181, %v2354
  %v2397 = vxor.u32 %v2396, 2147483648
  %v2398 = vmul.f32 %v2397, 1.442695
  %v2399 = vpow.pop %v2398
  %v2400 = vadd.f32 %v2399, 1.0
  %v2401 = vrcp.pop %v2400
  %v2402 = vmul.f32 %v2400, %v2401
  %v2403 = vsub.f32 1.0, %v2402
  %v2404 = vmul.f32 %v2401, %v2403
  %v2405 = vadd.f32 %v2401, %v2404
  %vm2406 = vweird.f32 %v2400
  %vm2407 = vweird.f32 %v2401
  %vm2408 = vmor %vm2406, %vm2407
  %v2409 = vsel %vm2408, %v2401, %v2405
  %v2410 = vand.u32 2147483647, %v2400
  %vm2411 = vcmp.eq.f32.partialorder %v2410, 8.507059e+37
  %v2412 = vand.u32 %v2400, 2147483648
  %v2413 = vor.u32 1.1754944e-38, %v2412
  %v2414 = vsel %vm2411, %v2413, %v2409
  %v2415 = vmul.f32 1.0, %v2414
  %v2416 = vadd.f32 %v2374, %v472
  %v2417 = vmul.f32 %v2395, %v2416
  %v2418 = vadd.f32 %v222, %v2417
  %v2419 = vtanh.pop %v2418
  %v2420 = vsub.f32 1.0, %v2415
  %v2421 = vmul.f32 %v2420, %v2419
  %v2422 = vmul.f32 %v2415, %v2147
  %v2423 = vadd.f32 %v2421, %v2422
  %2424 = vmatpush.msra.mxu0 %v317
  %2425 = vmatpush.msra.mxu0 %v314
  %2426 = vmatpush.msra.mxu0 %v311
  %2427 = vmatpush.msra.mxu0 %v308
  %2428 = vmatpush.msra.mxu0 %v305
  %2429 = vmatpush.msra.mxu0 %v302
  %2430 = vmatpush.msra.mxu0 %v299
  %2431 = vmatpush.msra.mxu0 %v296
  %2432 = vmatpush.msra.mxu0 %v293
  %2433 = vmatpush.msra.mxu0 %v290
  %2434 = vmatpush.msra.mxu0 %v287
  %2435 = vmatpush.msra.mxu0 %v284
  %2436 = vmatpush.msra.mxu0 %v281
  %2437 = vmatpush.msra.mxu0 %v278
  %2438 = vmatpush.msra.mxu0 %v275
  %2439 = vmatpush.msra.mxu0 %v272
  %2440 = vmatmul.f32.gmra.mxu0 %v2423
  %v2441 = vpop.f32.mrf.mxu0
  %v2442 = vadd.f32 %v483, %v2441
  %2443 = vdwg.mxu0
  %2444 = vmatpush.msra.mxu0 %v318
  %2445 = vmatpush.msra.mxu0 %v315
  %2446 = vmatpush.msra.mxu0 %v312
  %2447 = vmatpush.msra.mxu0 %v309
  %2448 = vmatpush.msra.mxu0 %v306
  %2449 = vmatpush.msra.mxu0 %v303
  %2450 = vmatpush.msra.mxu0 %v300
  %2451 = vmatpush.msra.mxu0 %v297
  %2452 = vmatpush.msra.mxu0 %v294
  %2453 = vmatpush.msra.mxu0 %v291
  %2454 = vmatpush.msra.mxu0 %v288
  %2455 = vmatpush.msra.mxu0 %v285
  %2456 = vmatpush.msra.mxu0 %v282
  %2457 = vmatpush.msra.mxu0 %v279
  %2458 = vmatpush.msra.mxu0 %v276
  %2459 = vmatpush.msra.mxu0 %v273
  %2460 = vmatmul.f32.gmra.mxu0 %v2423
  %v2461 = vpop.f32.mrf.mxu0
  %v2462 = vadd.f32 %v484, %v2461
  %2463 = vdwg.mxu0
  %2464 = vmatpush.msra.mxu0 %v319
  %2465 = vmatpush.msra.mxu0 %v316
  %2466 = vmatpush.msra.mxu0 %v313
  %2467 = vmatpush.msra.mxu0 %v310
  %2468 = vmatpush.msra.mxu0 %v307
  %2469 = vmatpush.msra.mxu0 %v304
  %2470 = vmatpush.msra.mxu0 %v301
  %2471 = vmatpush.msra.mxu0 %v298
  %2472 = vmatpush.msra.mxu0 %v295
  %2473 = vmatpush.msra.mxu0 %v292
  %2474 = vmatpush.msra.mxu0 %v289
  %2475 = vmatpush.msra.mxu0 %v286
  %2476 = vmatpush.msra.mxu0 %v283
  %2477 = vmatpush.msra.mxu0 %v280
  %2478 = vmatpush.msra.mxu0 %v277
  %2479 = vmatpush.msra.mxu0 %v274
  %2480 = vmatmul.f32.gmra.mxu0 %v2423
  %v2481 = vpop.f32.mrf.mxu0
  %v2482 = vadd.f32 %v485, %v2481
  %2483 = vdwg.mxu0
  %2484 = vmatpush.msra.mxu0 %v365
  %2485 = vmatpush.msra.mxu0 %v362
  %2486 = vmatpush.msra.mxu0 %v359
  %2487 = vmatpush.msra.mxu0 %v356
  %2488 = vmatpush.msra.mxu0 %v353
  %2489 = vmatpush.msra.mxu0 %v350
  %2490 = vmatpush.msra.mxu0 %v347
  %2491 = vmatpush.msra.mxu0 %v344
  %2492 = vmatpush.msra.mxu0 %v341
  %2493 = vmatpush.msra.mxu0 %v338
  %2494 = vmatpush.msra.mxu0 %v335
  %2495 = vmatpush.msra.mxu0 %v332
  %2496 = vmatpush.msra.mxu0 %v329
  %2497 = vmatpush.msra.mxu0 %v326
  %2498 = vmatpush.msra.mxu0 %v323
  %2499 = vmatpush.msra.mxu0 %v320
  %2500 = vmatmul.f32.gmra.mxu0 %v2315
  %v2501 = vpop.f32.mrf.mxu0
  %v2502 = vadd.f32 0.0, %v2501
  %2503 = vdwg.mxu0
  %2504 = vmatpush.msra.mxu0 %v366
  %2505 = vmatpush.msra.mxu0 %v363
  %2506 = vmatpush.msra.mxu0 %v360
  %2507 = vmatpush.msra.mxu0 %v357
  %2508 = vmatpush.msra.mxu0 %v354
  %2509 = vmatpush.msra.mxu0 %v351
  %2510 = vmatpush.msra.mxu0 %v348
  %2511 = vmatpush.msra.mxu0 %v345
  %2512 = vmatpush.msra.mxu0 %v342
  %2513 = vmatpush.msra.mxu0 %v339
  %2514 = vmatpush.msra.mxu0 %v336
  %2515 = vmatpush.msra.mxu0 %v333
  %2516 = vmatpush.msra.mxu0 %v330
  %2517 = vmatpush.msra.mxu0 %v327
  %2518 = vmatpush.msra.mxu0 %v324
  %2519 = vmatpush.msra.mxu0 %v321
  %2520 = vmatmul.f32.gmra.mxu0 %v2315
  %v2521 = vpop.f32.mrf.mxu0
  %v2522 = vadd.f32 0.0, %v2521
  %2523 = vdwg.mxu0
  %2524 = vmatpush.msra.mxu0 %v367
  %2525 = vmatpush.msra.mxu0 %v364
  %2526 = vmatpush.msra.mxu0 %v361
  %2527 = vmatpush.msra.mxu0 %v358
  %2528 = vmatpush.msra.mxu0 %v355
  %2529 = vmatpush.msra.mxu0 %v352
  %2530 = vmatpush.msra.mxu0 %v349
  %2531 = vmatpush.msra.mxu0 %v346
  %2532 = vmatpush.msra.mxu0 %v343
  %2533 = vmatpush.msra.mxu0 %v340
  %2534 = vmatpush.msra.mxu0 %v337
  %2535 = vmatpush.msra.mxu0 %v334
  %2536 = vmatpush.msra.mxu0 %v331
  %2537 = vmatpush.msra.mxu0 %v328
  %2538 = vmatpush.msra.mxu0 %v325
  %2539 = vmatpush.msra.mxu0 %v322
  %2540 = vmatmul.f32.gmra.mxu0 %v2315
  %v2541 = vpop.f32.mrf.mxu0
  %v2542 = vadd.f32 0.0, %v2541
  %2543 = vdwg.mxu0
  %v2544 = vadd.f32 %v2442, %v2502
  %v2545 = vxor.u32 %v2544, 2147483648
  %v2546 = vmul.f32 %v2545, 1.442695
  %v2547 = vpow.pop %v2546
  %v2548 = vadd.f32 %v2547, 1.0
  %v2549 = vrcp.pop %v2548
  %v2550 = vmul.f32 %v2548, %v2549
  %v2551 = vsub.f32 1.0, %v2550
  %v2552 = vmul.f32 %v2549, %v2551
  %v2553 = vadd.f32 %v2549, %v2552
  %vm2554 = vweird.f32 %v2548
  %vm2555 = vweird.f32 %v2549
  %vm2556 = vmor %vm2554, %vm2555
  %v2557 = vsel %vm2556, %v2549, %v2553
  %v2558 = vand.u32 2147483647, %v2548
  %vm2559 = vcmp.eq.f32.partialorder %v2558, 8.507059e+37
  %v2560 = vand.u32 %v2548, 2147483648
  %v2561 = vor.u32 1.1754944e-38, %v2560
  %v2562 = vsel %vm2559, %v2561, %v2557
  %v2563 = vmul.f32 1.0, %v2562
  %v2564 = vadd.f32 %v2462, %v2522
  %v2565 = vxor.u32 %v2564, 2147483648
  %v2566 = vmul.f32 %v2565, 1.442695
  %v2567 = vpow.pop %v2566
  %v2568 = vadd.f32 %v2567, 1.0
  %v2569 = vrcp.pop %v2568
  %v2570 = vmul.f32 %v2568, %v2569
  %v2571 = vsub.f32 1.0, %v2570
  %v2572 = vmul.f32 %v2569, %v2571
  %v2573 = vadd.f32 %v2569, %v2572
  %vm2574 = vweird.f32 %v2568
  %vm2575 = vweird.f32 %v2569
  %vm2576 = vmor %vm2574, %vm2575
  %v2577 = vsel %vm2576, %v2569, %v2573
  %v2578 = vand.u32 2147483647, %v2568
  %vm2579 = vcmp.eq.f32.partialorder %v2578, 8.507059e+37
  %v2580 = vand.u32 %v2568, 2147483648
  %v2581 = vor.u32 1.1754944e-38, %v2580
  %v2582 = vsel %vm2579, %v2581, %v2577
  %v2583 = vmul.f32 1.0, %v2582
  %v2584 = vadd.f32 %v2542, %v650
  %v2585 = vmul.f32 %v2563, %v2584
  %v2586 = vadd.f32 %v2482, %v2585
  %v2587 = vtanh.pop %v2586
  %v2588 = vsub.f32 1.0, %v2583
  %v2589 = vmul.f32 %v2588, %v2587
  %v2590 = vmul.f32 %v2583, %v2315
  %v2591 = vadd.f32 %v2589, %v2590
  %v2592 = vld [vmem:[%s9] sm:$0xff]
  %v2593 = vld [vmem:[%s9 + $0x8] sm:$0xff]
  %v2594 = vld [vmem:[%s9 + $0x10] sm:$0xff]
  %v2595 = vld [vmem:[%s9 + $0x18] sm:$0xff]
  %v2596 = vld [vmem:[%s9 + $0x20] sm:$0xff]
  %v2597 = vld [vmem:[%s9 + $0x28] sm:$0xff]
  %v2598 = vld [vmem:[%s9 + $0x30] sm:$0xff]
  %v2599 = vld [vmem:[%s9 + $0x38] sm:$0xff]
  %v2600 = vld [vmem:[%s9 + $0x40] sm:$0xff]
  %v2601 = vld [vmem:[%s9 + $0x48] sm:$0xff]
  %v2602 = vld [vmem:[%s9 + $0x50] sm:$0xff]
  %v2603 = vld [vmem:[%s9 + $0x58] sm:$0xff]
  %v2604 = vld [vmem:[%s9 + $0x60] sm:$0xff]
  %v2605 = vld [vmem:[%s9 + $0x68] sm:$0xff]
  %v2606 = vld [vmem:[%s9 + $0x70] sm:$0xff]
  %v2607 = vld [vmem:[%s9 + $0x78] sm:$0xff]
  %v2608 = vld [vmem:[%s9 + $0x80] sm:$0xff]
  %v2609 = vld [vmem:[%s9 + $0x88] sm:$0xff]
  %v2610 = vld [vmem:[%s9 + $0x90] sm:$0xff]
  %v2611 = vld [vmem:[%s9 + $0x98] sm:$0xff]
  %v2612 = vld [vmem:[%s9 + $0xa0] sm:$0xff]
  %v2613 = vld [vmem:[%s9 + $0xa8] sm:$0xff]
  %v2614 = vld [vmem:[%s9 + $0xb0] sm:$0xff]
  %v2615 = vld [vmem:[%s9 + $0xb8] sm:$0xff]
  %v2616 = vld [vmem:[%s9 + $0xc0] sm:$0xff]
  %v2617 = vld [vmem:[%s9 + $0xc8] sm:$0xff]
  %v2618 = vld [vmem:[%s9 + $0xd0] sm:$0xff]
  %v2619 = vld [vmem:[%s9 + $0xd8] sm:$0xff]
  %v2620 = vld [vmem:[%s9 + $0xe0] sm:$0xff]
  %v2621 = vld [vmem:[%s9 + $0xe8] sm:$0xff]
  %v2622 = vld [vmem:[%s9 + $0xf0] sm:$0xff]
  %v2623 = vld [vmem:[%s9 + $0xf8] sm:$0xff]
  %v2624 = vld [vmem:[%s9 + $0x100] sm:$0xff]
  %v2625 = vld [vmem:[%s9 + $0x108] sm:$0xff]
  %v2626 = vld [vmem:[%s9 + $0x110] sm:$0xff]
  %v2627 = vld [vmem:[%s9 + $0x118] sm:$0xff]
  %v2628 = vld [vmem:[%s9 + $0x120] sm:$0xff]
  %v2629 = vld [vmem:[%s9 + $0x128] sm:$0xff]
  %v2630 = vld [vmem:[%s9 + $0x130] sm:$0xff]
  %v2631 = vld [vmem:[%s9 + $0x138] sm:$0xff]
  %v2632 = vld [vmem:[%s9 + $0x140] sm:$0xff]
  %v2633 = vld [vmem:[%s9 + $0x148] sm:$0xff]
  %v2634 = vld [vmem:[%s9 + $0x150] sm:$0xff]
  %v2635 = vld [vmem:[%s9 + $0x158] sm:$0xff]
  %v2636 = vld [vmem:[%s9 + $0x160] sm:$0xff]
  %v2637 = vld [vmem:[%s9 + $0x168] sm:$0xff]
  %v2638 = vld [vmem:[%s9 + $0x170] sm:$0xff]
  %v2639 = vld [vmem:[%s9 + $0x178] sm:$0xff]
  %v2640 = vld [vmem:[%s9 + $0x180] sm:$0xff]
  %v2641 = vld [vmem:[%s9 + $0x188] sm:$0xff]
  %v2642 = vld [vmem:[%s9 + $0x190] sm:$0xff]
  %v2643 = vld [vmem:[%s9 + $0x198] sm:$0xff]
  %v2644 = vld [vmem:[%s9 + $0x1a0] sm:$0xff]
  %v2645 = vld [vmem:[%s9 + $0x1a8] sm:$0xff]
  %v2646 = vld [vmem:[%s9 + $0x1b0] sm:$0xff]
  %v2647 = vld [vmem:[%s9 + $0x1b8] sm:$0xff]
  %v2648 = vld [vmem:[%s9 + $0x1c0] sm:$0xff]
  %v2649 = vld [vmem:[%s9 + $0x1c8] sm:$0xff]
  %v2650 = vld [vmem:[%s9 + $0x1d0] sm:$0xff]
  %v2651 = vld [vmem:[%s9 + $0x1d8] sm:$0xff]
  %v2652 = vld [vmem:[%s9 + $0x1e0] sm:$0xff]
  %v2653 = vld [vmem:[%s9 + $0x1e8] sm:$0xff]
  %v2654 = vld [vmem:[%s9 + $0x1f0] sm:$0xff]
  %v2655 = vld [vmem:[%s9 + $0x1f8] sm:$0xff]
  %v2656 = vld [vmem:[%s9 + $0x200] sm:$0xff]
  %v2657 = vld [vmem:[%s9 + $0x208] sm:$0xff]
  %v2658 = vld [vmem:[%s9 + $0x210] sm:$0xff]
  %v2659 = vld [vmem:[%s9 + $0x218] sm:$0xff]
  %v2660 = vld [vmem:[%s9 + $0x220] sm:$0xff]
  %v2661 = vld [vmem:[%s9 + $0x228] sm:$0xff]
  %v2662 = vld [vmem:[%s9 + $0x230] sm:$0xff]
  %v2663 = vld [vmem:[%s9 + $0x238] sm:$0xff]
  %v2664 = vld [vmem:[%s9 + $0x240] sm:$0xff]
  %v2665 = vld [vmem:[%s9 + $0x248] sm:$0xff]
  %v2666 = vld [vmem:[%s9 + $0x250] sm:$0xff]
  %v2667 = vld [vmem:[%s9 + $0x258] sm:$0xff]
  %v2668 = vld [vmem:[%s9 + $0x260] sm:$0xff]
  %v2669 = vld [vmem:[%s9 + $0x268] sm:$0xff]
  %v2670 = vld [vmem:[%s9 + $0x270] sm:$0xff]
  %v2671 = vld [vmem:[%s9 + $0x278] sm:$0xff]
  %v2672 = vld [vmem:[%s9 + $0x280] sm:$0xff]
  %v2673 = vld [vmem:[%s9 + $0x288] sm:$0xff]
  %v2674 = vld [vmem:[%s9 + $0x290] sm:$0xff]
  %v2675 = vld [vmem:[%s9 + $0x298] sm:$0xff]
  %v2676 = vld [vmem:[%s9 + $0x2a0] sm:$0xff]
  %v2677 = vld [vmem:[%s9 + $0x2a8] sm:$0xff]
  %v2678 = vld [vmem:[%s9 + $0x2b0] sm:$0xff]
  %v2679 = vld [vmem:[%s9 + $0x2b8] sm:$0xff]
  %v2680 = vld [vmem:[%s9 + $0x2c0] sm:$0xff]
  %v2681 = vld [vmem:[%s9 + $0x2c8] sm:$0xff]
  %v2682 = vld [vmem:[%s9 + $0x2d0] sm:$0xff]
  %v2683 = vld [vmem:[%s9 + $0x2d8] sm:$0xff]
  %v2684 = vld [vmem:[%s9 + $0x2e0] sm:$0xff]
  %v2685 = vld [vmem:[%s9 + $0x2e8] sm:$0xff]
  %v2686 = vld [vmem:[%s9 + $0x2f0] sm:$0xff]
  %v2687 = vld [vmem:[%s9 + $0x2f8] sm:$0xff]
  %v2688 = vld [vmem:[%s9 + $0x300] sm:$0xff]
  %v2689 = vld [vmem:[%s9 + $0x308] sm:$0xff]
  %v2690 = vld [vmem:[%s9 + $0x310] sm:$0xff]
  %v2691 = vld [vmem:[%s9 + $0x318] sm:$0xff]
  %v2692 = vld [vmem:[%s9 + $0x320] sm:$0xff]
  %v2693 = vld [vmem:[%s9 + $0x328] sm:$0xff]
  %v2694 = vld [vmem:[%s9 + $0x330] sm:$0xff]
  %v2695 = vld [vmem:[%s9 + $0x338] sm:$0xff]
  %v2696 = vld [vmem:[%s9 + $0x340] sm:$0xff]
  %v2697 = vld [vmem:[%s9 + $0x348] sm:$0xff]
  %v2698 = vld [vmem:[%s9 + $0x350] sm:$0xff]
  %v2699 = vld [vmem:[%s9 + $0x358] sm:$0xff]
  %v2700 = vld [vmem:[%s9 + $0x360] sm:$0xff]
  %v2701 = vld [vmem:[%s9 + $0x368] sm:$0xff]
  %v2702 = vld [vmem:[%s9 + $0x370] sm:$0xff]
  %v2703 = vld [vmem:[%s9 + $0x378] sm:$0xff]
  %v2704 = vld [vmem:[%s9 + $0x380] sm:$0xff]
  %v2705 = vld [vmem:[%s9 + $0x388] sm:$0xff]
  %v2706 = vld [vmem:[%s9 + $0x390] sm:$0xff]
  %v2707 = vld [vmem:[%s9 + $0x398] sm:$0xff]
  %v2708 = vld [vmem:[%s9 + $0x3a0] sm:$0xff]
  %v2709 = vld [vmem:[%s9 + $0x3a8] sm:$0xff]
  %v2710 = vld [vmem:[%s9 + $0x3b0] sm:$0xff]
  %v2711 = vld [vmem:[%s9 + $0x3b8] sm:$0xff]
  %v2712 = vld [vmem:[%s9 + $0x3c0] sm:$0xff]
  %v2713 = vld [vmem:[%s9 + $0x3c8] sm:$0xff]
  %v2714 = vld [vmem:[%s9 + $0x3d0] sm:$0xff]
  %v2715 = vld [vmem:[%s9 + $0x3d8] sm:$0xff]
  %v2716 = vld [vmem:[%s9 + $0x3e0] sm:$0xff]
  %v2717 = vld [vmem:[%s9 + $0x3e8] sm:$0xff]
  %v2718 = vld [vmem:[%s9 + $0x3f0] sm:$0xff]
  %v2719 = vld [vmem:[%s9 + $0x3f8] sm:$0xff]
  %v2720 = vld [vmem:[%s10] sm:$0x1]
  %v2722 = vperm.slane %v2720, 0
  %2724 = vmatpush.msra.mxu0 %v2607
  %2725 = vmatpush.msra.mxu0 %v2606
  %2726 = vmatpush.msra.mxu0 %v2605
  %2727 = vmatpush.msra.mxu0 %v2604
  %2728 = vmatpush.msra.mxu0 %v2603
  %2729 = vmatpush.msra.mxu0 %v2602
  %2730 = vmatpush.msra.mxu0 %v2601
  %2731 = vmatpush.msra.mxu0 %v2600
  %2732 = vmatpush.msra.mxu0 %v2599
  %2733 = vmatpush.msra.mxu0 %v2598
  %2734 = vmatpush.msra.mxu0 %v2597
  %2735 = vmatpush.msra.mxu0 %v2596
  %2736 = vmatpush.msra.mxu0 %v2595
  %2737 = vmatpush.msra.mxu0 %v2594
  %2738 = vmatpush.msra.mxu0 %v2593
  %2739 = vmatpush.msra.mxu0 %v2592
  %2740 = vmatmul.f32.gmra.mxu0 %v659
  %v2741 = vpop.f32.mrf.mxu0
  %v2742 = vadd.f32 %v2722, %v2741
  %2743 = vdwg.mxu0
  %2744 = vmatpush.msra.mxu0 %v2623
  %2745 = vmatpush.msra.mxu0 %v2622
  %2746 = vmatpush.msra.mxu0 %v2621
  %2747 = vmatpush.msra.mxu0 %v2620
  %2748 = vmatpush.msra.mxu0 %v2619
  %2749 = vmatpush.msra.mxu0 %v2618
  %2750 = vmatpush.msra.mxu0 %v2617
  %2751 = vmatpush.msra.mxu0 %v2616
  %2752 = vmatpush.msra.mxu0 %v2615
  %2753 = vmatpush.msra.mxu0 %v2614
  %2754 = vmatpush.msra.mxu0 %v2613
  %2755 = vmatpush.msra.mxu0 %v2612
  %2756 = vmatpush.msra.mxu0 %v2611
  %2757 = vmatpush.msra.mxu0 %v2610
  %2758 = vmatpush.msra.mxu0 %v2609
  %2759 = vmatpush.msra.mxu0 %v2608
  %2760 = vmatmul.f32.gmra.mxu0 %v935
  %v2761 = vpop.f32.mrf.mxu0
  %v2762 = vadd.f32 %v2742, %v2761
  %2763 = vdwg.mxu0
  %2764 = vmatpush.msra.mxu0 %v2639
  %2765 = vmatpush.msra.mxu0 %v2638
  %2766 = vmatpush.msra.mxu0 %v2637
  %2767 = vmatpush.msra.mxu0 %v2636
  %2768 = vmatpush.msra.mxu0 %v2635
  %2769 = vmatpush.msra.mxu0 %v2634
  %2770 = vmatpush.msra.mxu0 %v2633
  %2771 = vmatpush.msra.mxu0 %v2632
  %2772 = vmatpush.msra.mxu0 %v2631
  %2773 = vmatpush.msra.mxu0 %v2630
  %2774 = vmatpush.msra.mxu0 %v2629
  %2775 = vmatpush.msra.mxu0 %v2628
  %2776 = vmatpush.msra.mxu0 %v2627
  %2777 = vmatpush.msra.mxu0 %v2626
  %2778 = vmatpush.msra.mxu0 %v2625
  %2779 = vmatpush.msra.mxu0 %v2624
  %2780 = vmatmul.f32.gmra.mxu0 %v1211
  %v2781 = vpop.f32.mrf.mxu0
  %v2782 = vadd.f32 %v2762, %v2781
  %2783 = vdwg.mxu0
  %2784 = vmatpush.msra.mxu0 %v2655
  %2785 = vmatpush.msra.mxu0 %v2654
  %2786 = vmatpush.msra.mxu0 %v2653
  %2787 = vmatpush.msra.mxu0 %v2652
  %2788 = vmatpush.msra.mxu0 %v2651
  %2789 = vmatpush.msra.mxu0 %v2650
  %2790 = vmatpush.msra.mxu0 %v2649
  %2791 = vmatpush.msra.mxu0 %v2648
  %2792 = vmatpush.msra.mxu0 %v2647
  %2793 = vmatpush.msra.mxu0 %v2646
  %2794 = vmatpush.msra.mxu0 %v2645
  %2795 = vmatpush.msra.mxu0 %v2644
  %2796 = vmatpush.msra.mxu0 %v2643
  %2797 = vmatpush.msra.mxu0 %v2642
  %2798 = vmatpush.msra.mxu0 %v2641
  %2799 = vmatpush.msra.mxu0 %v2640
  %2800 = vmatmul.f32.gmra.mxu0 %v1487
  %v2801 = vpop.f32.mrf.mxu0
  %v2802 = vadd.f32 %v2782, %v2801
  %2803 = vdwg.mxu0
  %2804 = vmatpush.msra.mxu0 %v2671
  %2805 = vmatpush.msra.mxu0 %v2670
  %2806 = vmatpush.msra.mxu0 %v2669
  %2807 = vmatpush.msra.mxu0 %v2668
  %2808 = vmatpush.msra.mxu0 %v2667
  %2809 = vmatpush.msra.mxu0 %v2666
  %2810 = vmatpush.msra.mxu0 %v2665
  %2811 = vmatpush.msra.mxu0 %v2664
  %2812 = vmatpush.msra.mxu0 %v2663
  %2813 = vmatpush.msra.mxu0 %v2662
  %2814 = vmatpush.msra.mxu0 %v2661
  %2815 = vmatpush.msra.mxu0 %v2660
  %2816 = vmatpush.msra.mxu0 %v2659
  %2817 = vmatpush.msra.mxu0 %v2658
  %2818 = vmatpush.msra.mxu0 %v2657
  %2819 = vmatpush.msra.mxu0 %v2656
  %2820 = vmatmul.f32.gmra.mxu0 %v1763
  %v2821 = vpop.f32.mrf.mxu0
  %v2822 = vadd.f32 %v2802, %v2821
  %2823 = vdwg.mxu0
  %2824 = vmatpush.msra.mxu0 %v2687
  %2825 = vmatpush.msra.mxu0 %v2686
  %2826 = vmatpush.msra.mxu0 %v2685
  %2827 = vmatpush.msra.mxu0 %v2684
  %2828 = vmatpush.msra.mxu0 %v2683
  %2829 = vmatpush.msra.mxu0 %v2682
  %2830 = vmatpush.msra.mxu0 %v2681
  %2831 = vmatpush.msra.mxu0 %v2680
  %2832 = vmatpush.msra.mxu0 %v2679
  %2833 = vmatpush.msra.mxu0 %v2678
  %2834 = vmatpush.msra.mxu0 %v2677
  %2835 = vmatpush.msra.mxu0 %v2676
  %2836 = vmatpush.msra.mxu0 %v2675
  %2837 = vmatpush.msra.mxu0 %v2674
  %2838 = vmatpush.msra.mxu0 %v2673
  %2839 = vmatpush.msra.mxu0 %v2672
  %2840 = vmatmul.f32.gmra.mxu0 %v2039
  %v2841 = vpop.f32.mrf.mxu0
  %v2842 = vadd.f32 %v2822, %v2841
  %2843 = vdwg.mxu0
  %2844 = vmatpush.msra.mxu0 %v2703
  %2845 = vmatpush.msra.mxu0 %v2702
  %2846 = vmatpush.msra.mxu0 %v2701
  %2847 = vmatpush.msra.mxu0 %v2700
  %2848 = vmatpush.msra.mxu0 %v2699
  %2849 = vmatpush.msra.mxu0 %v2698
  %2850 = vmatpush.msra.mxu0 %v2697
  %2851 = vmatpush.msra.mxu0 %v2696
  %2852 = vmatpush.msra.mxu0 %v2695
  %2853 = vmatpush.msra.mxu0 %v2694
  %2854 = vmatpush.msra.mxu0 %v2693
  %2855 = vmatpush.msra.mxu0 %v2692
  %2856 = vmatpush.msra.mxu0 %v2691
  %2857 = vmatpush.msra.mxu0 %v2690
  %2858 = vmatpush.msra.mxu0 %v2689
  %2859 = vmatpush.msra.mxu0 %v2688
  %2860 = vmatmul.f32.gmra.mxu0 %v2315
  %v2861 = vpop.f32.mrf.mxu0
  %v2862 = vadd.f32 %v2842, %v2861
  %2863 = vdwg.mxu0
  %2864 = vmatpush.msra.mxu0 %v2719
  %2865 = vmatpush.msra.mxu0 %v2718
  %2866 = vmatpush.msra.mxu0 %v2717
  %2867 = vmatpush.msra.mxu0 %v2716
  %2868 = vmatpush.msra.mxu0 %v2715
  %2869 = vmatpush.msra.mxu0 %v2714
  %2870 = vmatpush.msra.mxu0 %v2713
  %2871 = vmatpush.msra.mxu0 %v2712
  %2872 = vmatpush.msra.mxu0 %v2711
  %2873 = vmatpush.msra.mxu0 %v2710
  %2874 = vmatpush.msra.mxu0 %v2709
  %2875 = vmatpush.msra.mxu0 %v2708
  %2876 = vmatpush.msra.mxu0 %v2707
  %2877 = vmatpush.msra.mxu0 %v2706
  %2878 = vmatpush.msra.mxu0 %v2705
  %2879 = vmatpush.msra.mxu0 %v2704
  %2880 = vmatmul.f32.gmra.mxu0 %v2591
  %v2881 = vpop.f32.mrf.mxu0
  %v2882 = vadd.f32 %v2862, %v2881
  %2883 = vdwg.mxu0
  %vm2884 = vcmask 80896
  %2885 = vst.msk [vmem:[%s11] sm:$0xff] %vm2884, %v2882
  // Predicated region
  $region46: #{rnn_forward.1} parent=0 // pred_check
    _
  $region47: #{rnn_forward.1} parent=0 // pred_check_branch
    %2887 = sbr.rel (0) target = $region49
  $region48: #{rnn_forward.1} parent=0 // pred_region
    _
  $region49: #{rnn_forward.1} parent=0 // pred_fallthru
    _
  // Predicated region
  $region50: #{rnn_forward.1} parent=0 // pred_check
    _
  $region51: #{rnn_forward.1} parent=0 // pred_check_branch
    %2889 = sbr.rel (0) target = $region53
  $region52: #{rnn_forward.1} parent=0 // pred_region
    _
  $region53: #{rnn_forward.1} parent=0 // pred_fallthru
    _

</llo_original>
